<compile_context>
chip_gen: v5e
topology: v5e:2x2
jax: 0.10.0
libtpu: 0.0.40
codegen_flags: <defaults>
</compile_context>

<pallas_src>
import jax
import jax.numpy as jnp
from jax.experimental import pallas as pl
from jax.experimental.pallas import tpu as pltpu

# original (unpadded) dims from the PyTorch module
D_IN, D_H1, D_H2, D_OUT = 5000, 500, 128, 2
# padded dims (lane/sublane friendly)
D_IN_P, D_H1_P, D_OUT_P = 5120, 512, 128
TK = 2560  # reduction tile for the first layer -> n_k = 2 grid steps


def _net_kernel(x_ref, w1_ref, b1_ref, w2_ref, b2_ref, w3_ref, b3_ref,
                o_ref, acc_ref):
    k = pl.program_id(0)

    @pl.when(k == 0)
    def _():
        acc_ref[...] = jnp.zeros_like(acc_ref)

    # first-layer partial matmul over this K tile (accumulates in f32 VMEM)
    acc_ref[...] += jnp.dot(x_ref[...], w1_ref[...],
                            preferred_element_type=jnp.float32)

    @pl.when(k == pl.num_programs(0) - 1)
    def _():
        h1 = jnp.maximum(acc_ref[...] + b1_ref[...], 0.0)            # (B, 512)
        h2 = jnp.maximum(
            jnp.dot(h1, w2_ref[...], preferred_element_type=jnp.float32)
            + b2_ref[...], 0.0)                                       # (B, 128)
        out = jnp.dot(h2, w3_ref[...],
                      preferred_element_type=jnp.float32) + b3_ref[...]
        o_ref[...] = out.astype(o_ref.dtype)                          # (B, 128)


def pad_params(w1, b1, w2, b2, w3, b3):
    """Pad weights/biases once (outside the jitted forward path).

    Zero padding is exact: padded x columns / w1 rows contribute 0, padded h1
    columns are relu(0 + 0) = 0 and hit zero rows of w2, and padded output
    columns of w3/b3 are simply sliced off in the wrapper.
    """
    w1_p = jnp.pad(w1, ((0, D_IN_P - D_IN), (0, D_H1_P - D_H1)))
    b1_p = jnp.pad(b1, ((0, D_H1_P - D_H1),)).reshape(1, D_H1_P)
    w2_p = jnp.pad(w2, ((0, D_H1_P - D_H1), (0, 0)))
    b2_p = b2.reshape(1, D_H2)
    w3_p = jnp.pad(w3, ((0, 0), (0, D_OUT_P - D_OUT)))
    b3_p = jnp.pad(b3, ((0, D_OUT_P - D_OUT),)).reshape(1, D_OUT_P)
    return w1_p, b1_p, w2_p, b2_p, w3_p, b3_p


@jax.jit
def net_forward_padded(x, w1_p, b1_p, w2_p, b2_p, w3_p, b3_p):
    """Forward pass; expects pre-padded params from pad_params()."""
    B = x.shape[0]
    # pad batch to a sublane multiple of 8 so the block shapes stay (8,128)-
    # aligned regardless of the caller's batch size
    B_P = max(8, ((B + 7) // 8) * 8)

    # Only the (small) per-call activation pad stays inside the jit.
    x_p = jnp.pad(x, ((0, B_P - B), (0, D_IN_P - D_IN)))

    n_k = D_IN_P // TK

    cost = pl.CostEstimate(
        flops=2 * B_P * (D_IN_P * D_H1_P + D_H1_P * D_H2 + D_H2 * D_OUT_P),
        transcendentals=0,
        bytes_accessed=4 * (B_P * D_IN_P + D_IN_P * D_H1_P + D_H1_P * D_H2
                            + D_H2 * D_OUT_P + D_H1_P + D_H2 + D_OUT_P
                            + B_P * D_OUT_P),
    )

    out_p = pl.pallas_call(
        _net_kernel,
        out_shape=jax.ShapeDtypeStruct((B_P, D_OUT_P), jnp.float32),
        grid_spec=pltpu.PrefetchScalarGridSpec(
            num_scalar_prefetch=0,
            grid=(n_k,),
            in_specs=[
                pl.BlockSpec((B_P, TK), lambda k: (0, k)),        # x tile
                pl.BlockSpec((TK, D_H1_P), lambda k: (k, 0)),     # w1 tile
                pl.BlockSpec((1, D_H1_P), lambda k: (0, 0)),      # b1
                pl.BlockSpec((D_H1_P, D_H2), lambda k: (0, 0)),   # w2
                pl.BlockSpec((1, D_H2), lambda k: (0, 0)),        # b2
                pl.BlockSpec((D_H2, D_OUT_P), lambda k: (0, 0)),  # w3 (padded)
                pl.BlockSpec((1, D_OUT_P), lambda k: (0, 0)),     # b3 (padded)
            ],
            out_specs=pl.BlockSpec((B_P, D_OUT_P), lambda k: (0, 0)),
            scratch_shapes=[pltpu.VMEM((B_P, D_H1_P), jnp.float32)],
        ),
        compiler_params=pltpu.CompilerParams(
            dimension_semantics=("arbitrary",),
        ),
        cost_estimate=cost,
    )(x_p, w1_p, b1_p, w2_p, b2_p, w3_p, b3_p)

    # slice the lane-dense padded output back to (B, 2)
    return out_p[:B, :D_OUT]


def net_forward(x, w1, b1, w2, b2, w3, b3):
    """Convenience wrapper matching the original (unpadded) parameter layout."""
    return net_forward_padded(x, *pad_params(w1, b1, w2, b2, w3, b3))


def init_params(key):
    """Deterministic init mimicking nn.Linear's U(-1/sqrt(fan_in), 1/sqrt(fan_in))."""
    ks = jax.random.split(key, 6)

    def lin(kw, kb, fan_in, fan_out):
        bound = 1.0 / jnp.sqrt(fan_in)
        w = jax.random.uniform(kw, (fan_in, fan_out), jnp.float32, -bound, bound)
        b = jax.random.uniform(kb, (fan_out,), jnp.float32, -bound, bound)
        return w, b

    w1, b1 = lin(ks[0], ks[1], D_IN, D_H1)
    w2, b2 = lin(ks[2], ks[3], D_H1, D_H2)
    w3, b3 = lin(ks[4], ks[5], D_H2, D_OUT)
    return w1, b1, w2, b2, w3, b3


def reference_forward(x, w1, b1, w2, b2, w3, b3):
    h1 = jnp.maximum(x @ w1 + b1, 0.0)
    h2 = jnp.maximum(h1 @ w2 + b2, 0.0)
    return h2 @ w3 + b3


if __name__ == "__main__":
    key = jax.random.PRNGKey(0)
    k_x, k_p = jax.random.split(key)

    B = 8  # small batch
    x = jax.random.normal(k_x, (B, D_IN), jnp.float32)
    params = init_params(k_p)

    # pad weights ONCE (outside the jitted forward path), then run the kernel
    padded = pad_params(*params)
    out = net_forward_padded(x, *padded)
    out = jax.block_until_ready(out)

    ref = reference_forward(x, *params)
    assert out.shape == (B, D_OUT)
    # tolerance accounts for TPU MXU default f32 matmul precision differences
    # between the Pallas kernel and the XLA reference
    assert jnp.allclose(out, ref, rtol=2e-2, atol=2e-2), "mismatch vs reference"

    print("KERNEL_OK")
</pallas_src>

<mosaic_0001>
module attributes {stable_mosaic.version = 11 : i64} {
  func.func @_net_kernel(%arg0: i32, %arg1: memref<8x2560xf32, #tpu.memory_space<vmem>>, %arg2: memref<2560x512xf32, #tpu.memory_space<vmem>>, %arg3: memref<1x512xf32, #tpu.memory_space<vmem>>, %arg4: memref<512x128xf32, #tpu.memory_space<vmem>>, %arg5: memref<1x128xf32, #tpu.memory_space<vmem>>, %arg6: memref<128x128xf32, #tpu.memory_space<vmem>>, %arg7: memref<1x128xf32, #tpu.memory_space<vmem>>, %arg8: memref<8x128xf32, #tpu.memory_space<vmem>>, %arg9: memref<8x512xf32, #tpu.memory_space<vmem>>) attributes {dimension_semantics = [#tpu.dimension_semantics<arbitrary>], iteration_bounds = array<i64: 2>, scalar_prefetch = 0 : i64, scratch_operands = 1 : i64, tpu.core_type = #tpu.core_type<tc>, window_params = [{transform_indices = @transform_0, window_bounds = array<i64: 8, 2560>}, {transform_indices = @transform_1, window_bounds = array<i64: 2560, 512>}, {pipeline_mode = #tpu.pipeline_mode<synchronous>, transform_indices = @transform_2, window_bounds = array<i64: 1, 512>}, {pipeline_mode = #tpu.pipeline_mode<synchronous>, transform_indices = @transform_3, window_bounds = array<i64: 512, 128>}, {pipeline_mode = #tpu.pipeline_mode<synchronous>, transform_indices = @transform_4, window_bounds = array<i64: 1, 128>}, {pipeline_mode = #tpu.pipeline_mode<synchronous>, transform_indices = @transform_5, window_bounds = array<i64: 128, 128>}, {pipeline_mode = #tpu.pipeline_mode<synchronous>, transform_indices = @transform_6, window_bounds = array<i64: 1, 128>}, {pipeline_mode = #tpu.pipeline_mode<synchronous>, transform_indices = @transform_7, window_bounds = array<i64: 8, 128>}]} {
    %c0_i32 = arith.constant 0 : i32
    %0 = arith.cmpi eq, %arg0, %c0_i32 : i32
    %1 = arith.extui %0 : i1 to i32
    %c0_i32_0 = arith.constant 0 : i32
    %2 = arith.cmpi ne, %1, %c0_i32_0 : i32
    scf.if %2 {
      %cst_9 = arith.constant 0.000000e+00 : f32
      %12 = vector.broadcast %cst_9 : f32 to vector<8x512xf32>
      %c0_10 = arith.constant 0 : index
      %c0_11 = arith.constant 0 : index
      %13 = vector.load %arg9[%c0_10, %c0_11] : memref<8x512xf32, #tpu.memory_space<vmem>>, vector<8x512xf32>
      tpu.vector_store %arg9[%c0_10, %c0_11], %12 {strides = array<i32>} : memref<8x512xf32, #tpu.memory_space<vmem>>, vector<8x512xf32>,
    } else {
    }
    %c0 = arith.constant 0 : index
    %c0_1 = arith.constant 0 : index
    %3 = vector.load %arg9[%c0, %c0_1] : memref<8x512xf32, #tpu.memory_space<vmem>>, vector<8x512xf32>
    %c0_2 = arith.constant 0 : index
    %c0_3 = arith.constant 0 : index
    %4 = vector.load %arg1[%c0_2, %c0_3] : memref<8x2560xf32, #tpu.memory_space<vmem>>, vector<8x2560xf32>
    %c0_4 = arith.constant 0 : index
    %c0_5 = arith.constant 0 : index
    %5 = vector.load %arg2[%c0_4, %c0_5] : memref<2560x512xf32, #tpu.memory_space<vmem>>, vector<2560x512xf32>
    %cst = arith.constant dense<0.000000e+00> : vector<8x512xf32>
    %6 = tpu.matmul %4, %5, %cst {dimension_numbers = #tpu.dot_dimension_numbers<[1], [0], [0], [1], [0, 0, 1, 1], [], []>} : vector<8x2560xf32>, vector<2560x512xf32>, vector<8x512xf32> -> vector<8x512xf32>
    %7 = arith.addf %3, %6 : vector<8x512xf32>
    %c0_6 = arith.constant 0 : index
    %c0_7 = arith.constant 0 : index
    %8 = vector.load %arg9[%c0_6, %c0_7] : memref<8x512xf32, #tpu.memory_space<vmem>>, vector<8x512xf32>
    tpu.vector_store %arg9[%c0_6, %c0_7], %7 {strides = array<i32>} : memref<8x512xf32, #tpu.memory_space<vmem>>, vector<8x512xf32>,
    %c1_i32 = arith.constant 1 : i32
    %9 = arith.cmpi eq, %arg0, %c1_i32 : i32
    %10 = arith.extui %9 : i1 to i32
    %c0_i32_8 = arith.constant 0 : i32
    %11 = arith.cmpi ne, %10, %c0_i32_8 : i32
    scf.if %11 {
      %c0_9 = arith.constant 0 : index
      %c0_10 = arith.constant 0 : index
      %12 = vector.load %arg9[%c0_9, %c0_10] : memref<8x512xf32, #tpu.memory_space<vmem>>, vector<8x512xf32>
      %c0_11 = arith.constant 0 : index
      %c0_12 = arith.constant 0 : index
      %13 = vector.load %arg3[%c0_11, %c0_12] : memref<1x512xf32, #tpu.memory_space<vmem>>, vector<1x512xf32>
      %14 = vector.broadcast %13 : vector<1x512xf32> to vector<8x512xf32>
      %15 = arith.addf %12, %14 : vector<8x512xf32>
      %cst_13 = arith.constant 0.000000e+00 : f32
      %16 = vector.broadcast %cst_13 : f32 to vector<8x512xf32>
      %17 = arith.maximumf %15, %16 : vector<8x512xf32>
      %c0_14 = arith.constant 0 : index
      %c0_15 = arith.constant 0 : index
      %18 = vector.load %arg4[%c0_14, %c0_15] : memref<512x128xf32, #tpu.memory_space<vmem>>, vector<512x128xf32>
      %cst_16 = arith.constant dense<0.000000e+00> : vector<8x128xf32>
      %19 = tpu.matmul %17, %18, %cst_16 {dimension_numbers = #tpu.dot_dimension_numbers<[1], [0], [0], [1], [0, 0, 1, 1], [], []>} : vector<8x512xf32>, vector<512x128xf32>, vector<8x128xf32> -> vector<8x128xf32>
      %c0_17 = arith.constant 0 : index
      %c0_18 = arith.constant 0 : index
      %20 = vector.load %arg5[%c0_17, %c0_18] : memref<1x128xf32, #tpu.memory_space<vmem>>, vector<1x128xf32>
      %21 = vector.broadcast %20 : vector<1x128xf32> to vector<8x128xf32>
      %22 = arith.addf %19, %21 : vector<8x128xf32>
      %cst_19 = arith.constant 0.000000e+00 : f32
      %23 = vector.broadcast %cst_19 : f32 to vector<8x128xf32>
      %24 = arith.maximumf %22, %23 : vector<8x128xf32>
      %c0_20 = arith.constant 0 : index
      %c0_21 = arith.constant 0 : index
      %25 = vector.load %arg6[%c0_20, %c0_21] : memref<128x128xf32, #tpu.memory_space<vmem>>, vector<128x128xf32>
      %cst_22 = arith.constant dense<0.000000e+00> : vector<8x128xf32>
      %26 = tpu.matmul %24, %25, %cst_22 {dimension_numbers = #tpu.dot_dimension_numbers<[1], [0], [0], [1], [0, 0, 1, 1], [], []>} : vector<8x128xf32>, vector<128x128xf32>, vector<8x128xf32> -> vector<8x128xf32>
      %c0_23 = arith.constant 0 : index
      %c0_24 = arith.constant 0 : index
      %27 = vector.load %arg7[%c0_23, %c0_24] : memref<1x128xf32, #tpu.memory_space<vmem>>, vector<1x128xf32>
      %28 = vector.broadcast %27 : vector<1x128xf32> to vector<8x128xf32>
      %29 = arith.addf %26, %28 : vector<8x128xf32>
      %c0_25 = arith.constant 0 : index
      %c0_26 = arith.constant 0 : index
      %30 = vector.load %arg8[%c0_25, %c0_26] : memref<8x128xf32, #tpu.memory_space<vmem>>, vector<8x128xf32>
      tpu.vector_store %arg8[%c0_25, %c0_26], %29 {strides = array<i32>} : memref<8x128xf32, #tpu.memory_space<vmem>>, vector<8x128xf32>,
    } else {
    }
    return
  }
  func.func @transform_0(%arg0: i32) -> (i32, i32) {
    %c0_i32 = arith.constant 0 : i32
    %c0_i32_0 = arith.constant 0 : i32
    return %c0_i32, %arg0 : i32, i32
  }
  func.func @transform_1(%arg0: i32) -> (i32, i32) {
    %c0_i32 = arith.constant 0 : i32
    %c0_i32_0 = arith.constant 0 : i32
    return %arg0, %c0_i32 : i32, i32
  }
  func.func @transform_2(%arg0: i32) -> (i32, i32) {
    %c0_i32 = arith.constant 0 : i32
    %c0_i32_0 = arith.constant 0 : i32
    %c0_i32_1 = arith.constant 0 : i32
    return %c0_i32, %c0_i32_0 : i32, i32
  }
  func.func @transform_3(%arg0: i32) -> (i32, i32) {
    %c0_i32 = arith.constant 0 : i32
    %c0_i32_0 = arith.constant 0 : i32
    %c0_i32_1 = arith.constant 0 : i32
    return %c0_i32, %c0_i32_0 : i32, i32
  }
  func.func @transform_4(%arg0: i32) -> (i32, i32) {
    %c0_i32 = arith.constant 0 : i32
    %c0_i32_0 = arith.constant 0 : i32
    %c0_i32_1 = arith.constant 0 : i32
    return %c0_i32, %c0_i32_0 : i32, i32
  }
  func.func @transform_5(%arg0: i32) -> (i32, i32) {
    %c0_i32 = arith.constant 0 : i32
    %c0_i32_0 = arith.constant 0 : i32
    %c0_i32_1 = arith.constant 0 : i32
    return %c0_i32, %c0_i32_0 : i32, i32
  }
  func.func @transform_6(%arg0: i32) -> (i32, i32) {
    %c0_i32 = arith.constant 0 : i32
    %c0_i32_0 = arith.constant 0 : i32
    %c0_i32_1 = arith.constant 0 : i32
    return %c0_i32, %c0_i32_0 : i32, i32
  }
  func.func @transform_7(%arg0: i32) -> (i32, i32) {
    %c0_i32 = arith.constant 0 : i32
    %c0_i32_0 = arith.constant 0 : i32
    %c0_i32_1 = arith.constant 0 : i32
    return %c0_i32, %c0_i32_0 : i32, i32
  }
}

</mosaic_0001>

<llo_original>
// kernel: net_forward_padded.1
$region0: #{net_forward_padded.1}
  #allocation0 [shape = 'u32[]', space=smem, size = 0x4, offset = 0x4, fixed_abs, tag = 'smem constant byte address 0x4 - core index']
  #allocation1 [shape = 'u32[72,128]{1,0:T(1,128)}', space=vmem, size = 0x9000, scoped, tag = 'internal scratch']
  #allocation2 [shape = 'f32[8,512]{1,0:T(8,128)}', space=vmem, size = 0x4000, scoped, tag = 'scratch operand']
  %s0 = inlined_call_operand.vmem [shape: f32[8,5120], index: 0, kind: input, shape index: {}]
  %s1 = inlined_call_operand.hbm [shape: f32[5120,512], index: 1, kind: input, shape index: {}]
  %s2 = inlined_call_operand.hbm [shape: f32[1,512], index: 2, kind: input, shape index: {}]
  %s3 = inlined_call_operand.hbm [shape: f32[512,128], index: 3, kind: input, shape index: {}]
  %s4 = inlined_call_operand.hbm [shape: f32[1,128], index: 4, kind: input, shape index: {}]
  %s5 = inlined_call_operand.hbm [shape: f32[128,128], index: 5, kind: input, shape index: {}]
  %s6 = inlined_call_operand.hbm [shape: f32[1,128], index: 6, kind: input, shape index: {}]
  %s7 = inlined_call_operand.vmem [shape: f32[8,128], index: 7, kind: output, shape index: {}]
  %s8 = sld [smem:[#allocation0]]
  $region93: #{net_forward_padded.1} parent=0
    _
  %s10 = ssub.s32 1, %s8
  %s11 = scalar_select 0, %s10, %s8
  $region1: #{net_forward_padded.1} parent=0
    #allocation3 [shape = 'u8[10485760]{0}', space=vmem, size = 0xa00000, scoped, tag = 'input window, operand 1']
    #allocation4 [shape = 's32[2]{0}', space=sflag, size = 0x8, scoped, tag = 'scoped memory for net_forward_padded.1']
    #allocation5 [shape = 'u8[2048]{0}', space=vmem, size = 0x800, scoped, tag = 'input window, operand 2, single buffered']
    #allocation6 [shape = 's32[1]{0}', space=sflag, size = 0x4, scoped, tag = 'scoped memory for net_forward_padded.1']
    #allocation7 [shape = 'u8[262144]{0}', space=vmem, size = 0x40000, scoped, tag = 'input window, operand 3, single buffered']
    #allocation8 [shape = 'u8[512]{0}', space=vmem, size = 0x400, scoped, tag = 'input window, operand 4, single buffered']
    #allocation9 [shape = 's32[1]{0}', space=sflag, size = 0x4, scoped, tag = 'scoped memory for net_forward_padded.1']
    #allocation10 [shape = 'u8[65536]{0}', space=vmem, size = 0x10000, scoped, tag = 'input window, operand 5, single buffered']
    #allocation11 [shape = 'u8[512]{0}', space=vmem, size = 0x400, scoped, tag = 'input window, operand 6, single buffered']
    #allocation12 [shape = 's32[1]{0}', space=sflag, size = 0x4, scoped, tag = 'scoped memory for net_forward_padded.1']
    %12 = vsyncpa [#allocation4], 0
    %s13 = scalar_lea.sflag [#allocation4], 1
    %14 = vsyncpa %s13, 0
    %15 = vsyncpa [#allocation6], 0
    %16 = vsyncpa [#allocation9], 0
    %17 = vsyncpa [#allocation12], 0
    loop: start=0, step=1, limit=4
    $region2: #{net_forward_padded.1} parent=1 // loop_pre_header
      _
    $region3: #{net_forward_padded.1} parent=1 // loop_header
      %s19 = sphi 0, %s23
      %p20 = scmp.ge.s32.totalorder %s19, 4
      %s29 = sphi 0, %s31
      %s32 = sphi 0, %s29
      %s33 = sphi 0, %s32
      %s49 = sphi 0, %s33
      %s55 = sphi 0, %s57
      %s58 = sphi 0, %s55
      %s59 = sphi 0, %s58
      %s75 = sphi 0, %s59
      %s79 = sphi 0, %s79
      %s81 = sphi 0, %s79
      %s82 = sphi 0, %s81
      %s96 = sphi 0, %s82
      %s100 = sphi 0, %s100
      %s102 = sphi 0, %s100
      %s103 = sphi 0, %s102
      %s117 = sphi 0, %s103
      %s121 = sphi 0, %s121
      %s123 = sphi 0, %s121
      %s124 = sphi 0, %s123
      %s138 = sphi 0, %s124
      %s142 = sphi 0, %s142
      %s144 = sphi 0, %s142
      %s145 = sphi 0, %s144
      %s159 = sphi 0, %s145
      %s163 = sphi 0, %s163
      %s165 = sphi 0, %s163
      %s166 = sphi 0, %s165
      %s180 = sphi 0, %s166
      %s184 = sphi 0, %s184
      %s186 = sphi 0, %s184
      %s187 = sphi 0, %s186
      %s201 = sphi 0, %s187
    $region4: #{net_forward_padded.1} parent=1 // loop_header_branch
      %22 = sbr.rel (%p20) target = $region8
    $region5: #{net_forward_padded.1} parent=1 // loop_body
      %s24 = ssub.s32 %s19, 1
      %s25 = ssub.s32 %s19, 2
      %s26 = sadd.s32 %s19, 1
      %s27 = ssub.s32 %s19, %s26
      %p28 = scmp.eq.s32.totalorder %s27, 0
      %s30 = sadd.s32 %s29, 1
      %s31 = scalar_select %p28, %s29, %s30
      %p34 = pneg %p28
      %p35 = scmp.eq.s32.totalorder %s19, 1
      %p36 = por %p34, %p35
      %p37 = scmp.ne.s32.totalorder %s29, %s32
      %p38 = scmp.eq.s32.totalorder %s19, 0
      %p39 = por %p37, %p38
      %p40 = scmp.ne.s32.totalorder %s29, %s32
      %p41 = scmp.eq.s32.totalorder %s24, 1
      %p42 = por %p40, %p41
      %p43 = scmp.ne.s32.totalorder %s32, %s33
      %p44 = scmp.eq.s32.totalorder %s24, 0
      %p45 = por %p43, %p44
      %p46 = scmp.ne.s32.totalorder %s32, %s33
      %p47 = scmp.eq.s32.totalorder %s25, 1
      %p48 = por %p46, %p47
      %p50 = scmp.ne.s32.totalorder %s33, %s49
      %p51 = scmp.eq.s32.totalorder %s25, 0
      %p52 = por %p50, %p51
      %s53 = ssub.s32 %s19, %s26
      %p54 = scmp.eq.s32.totalorder %s53, 0
      %s56 = sadd.s32 %s55, 1
      %s57 = scalar_select %p54, %s55, %s56
      %p60 = pneg %p54
      %p61 = scmp.eq.s32.totalorder %s19, 1
      %p62 = por %p60, %p61
      %p63 = scmp.ne.s32.totalorder %s55, %s58
      %p64 = scmp.eq.s32.totalorder %s19, 0
      %p65 = por %p63, %p64
      %p66 = scmp.ne.s32.totalorder %s55, %s58
      %p67 = scmp.eq.s32.totalorder %s24, 1
      %p68 = por %p66, %p67
      %p69 = scmp.ne.s32.totalorder %s58, %s59
      %p70 = scmp.eq.s32.totalorder %s24, 0
      %p71 = por %p69, %p70
      %p72 = scmp.ne.s32.totalorder %s58, %s59
      %p73 = scmp.eq.s32.totalorder %s25, 1
      %p74 = por %p72, %p73
      %p76 = scmp.ne.s32.totalorder %s59, %s75
      %p77 = scmp.eq.s32.totalorder %s25, 0
      %p78 = por %p76, %p77
      %s80 = sadd.s32 %s79, 1
      %p83 = scmp.eq.s32.totalorder %s19, 1
      %p84 = scmp.ne.s32.totalorder %s79, %s81
      %p85 = scmp.eq.s32.totalorder %s19, 0
      %p86 = por %p84, %p85
      %p87 = scmp.ne.s32.totalorder %s79, %s81
      %p88 = scmp.eq.s32.totalorder %s24, 1
      %p89 = por %p87, %p88
      %p90 = scmp.ne.s32.totalorder %s81, %s82
      %p91 = scmp.eq.s32.totalorder %s24, 0
      %p92 = por %p90, %p91
      %p93 = scmp.ne.s32.totalorder %s81, %s82
      %p94 = scmp.eq.s32.totalorder %s25, 1
      %p95 = por %p93, %p94
      %p97 = scmp.ne.s32.totalorder %s82, %s96
      %p98 = scmp.eq.s32.totalorder %s25, 0
      %p99 = por %p97, %p98
      %s101 = sadd.s32 %s100, 1
      %p104 = scmp.eq.s32.totalorder %s19, 1
      %p105 = scmp.ne.s32.totalorder %s100, %s102
      %p106 = scmp.eq.s32.totalorder %s19, 0
      %p107 = por %p105, %p106
      %p108 = scmp.ne.s32.totalorder %s100, %s102
      %p109 = scmp.eq.s32.totalorder %s24, 1
      %p110 = por %p108, %p109
      %p111 = scmp.ne.s32.totalorder %s102, %s103
      %p112 = scmp.eq.s32.totalorder %s24, 0
      %p113 = por %p111, %p112
      %p114 = scmp.ne.s32.totalorder %s102, %s103
      %p115 = scmp.eq.s32.totalorder %s25, 1
      %p116 = por %p114, %p115
      %p118 = scmp.ne.s32.totalorder %s103, %s117
      %p119 = scmp.eq.s32.totalorder %s25, 0
      %p120 = por %p118, %p119
      %s122 = sadd.s32 %s121, 1
      %p125 = scmp.eq.s32.totalorder %s19, 1
      %p126 = scmp.ne.s32.totalorder %s121, %s123
      %p127 = scmp.eq.s32.totalorder %s19, 0
      %p128 = por %p126, %p127
      %p129 = scmp.ne.s32.totalorder %s121, %s123
      %p130 = scmp.eq.s32.totalorder %s24, 1
      %p131 = por %p129, %p130
      %p132 = scmp.ne.s32.totalorder %s123, %s124
      %p133 = scmp.eq.s32.totalorder %s24, 0
      %p134 = por %p132, %p133
      %p135 = scmp.ne.s32.totalorder %s123, %s124
      %p136 = scmp.eq.s32.totalorder %s25, 1
      %p137 = por %p135, %p136
      %p139 = scmp.ne.s32.totalorder %s124, %s138
      %p140 = scmp.eq.s32.totalorder %s25, 0
      %p141 = por %p139, %p140
      %s143 = sadd.s32 %s142, 1
      %p146 = scmp.eq.s32.totalorder %s19, 1
      %p147 = scmp.ne.s32.totalorder %s142, %s144
      %p148 = scmp.eq.s32.totalorder %s19, 0
      %p149 = por %p147, %p148
      %p150 = scmp.ne.s32.totalorder %s142, %s144
      %p151 = scmp.eq.s32.totalorder %s24, 1
      %p152 = por %p150, %p151
      %p153 = scmp.ne.s32.totalorder %s144, %s145
      %p154 = scmp.eq.s32.totalorder %s24, 0
      %p155 = por %p153, %p154
      %p156 = scmp.ne.s32.totalorder %s144, %s145
      %p157 = scmp.eq.s32.totalorder %s25, 1
      %p158 = por %p156, %p157
      %p160 = scmp.ne.s32.totalorder %s145, %s159
      %p161 = scmp.eq.s32.totalorder %s25, 0
      %p162 = por %p160, %p161
      %s164 = sadd.s32 %s163, 1
      %p167 = scmp.eq.s32.totalorder %s19, 1
      %p168 = scmp.ne.s32.totalorder %s163, %s165
      %p169 = scmp.eq.s32.totalorder %s19, 0
      %p170 = por %p168, %p169
      %p171 = scmp.ne.s32.totalorder %s163, %s165
      %p172 = scmp.eq.s32.totalorder %s24, 1
      %p173 = por %p171, %p172
      %p174 = scmp.ne.s32.totalorder %s165, %s166
      %p175 = scmp.eq.s32.totalorder %s24, 0
      %p176 = por %p174, %p175
      %p177 = scmp.ne.s32.totalorder %s165, %s166
      %p178 = scmp.eq.s32.totalorder %s25, 1
      %p179 = por %p177, %p178
      %p181 = scmp.ne.s32.totalorder %s166, %s180
      %p182 = scmp.eq.s32.totalorder %s25, 0
      %p183 = por %p181, %p182
      %s185 = sadd.s32 %s184, 1
      %p188 = scmp.eq.s32.totalorder %s19, 1
      %p189 = scmp.ne.s32.totalorder %s184, %s186
      %p190 = scmp.eq.s32.totalorder %s19, 0
      %p191 = por %p189, %p190
      %p192 = scmp.ne.s32.totalorder %s184, %s186
      %p193 = scmp.eq.s32.totalorder %s24, 1
      %p194 = por %p192, %p193
      %p195 = scmp.ne.s32.totalorder %s186, %s187
      %p196 = scmp.eq.s32.totalorder %s24, 0
      %p197 = por %p195, %p196
      %p198 = scmp.ne.s32.totalorder %s186, %s187
      %p199 = scmp.eq.s32.totalorder %s25, 1
      %p200 = por %p198, %p199
      %p202 = scmp.ne.s32.totalorder %s187, %s201
      %p203 = scmp.eq.s32.totalorder %s25, 0
      %p204 = por %p202, %p203
      %p205 = scmp.le.s32.totalorder 1, %s19
      %p206 = scmp.lt.s32.totalorder %s19, 3
      %p207 = pnand %p205, %p206
      %p208 = pneg %p207
      // Predicated region
      $region9: #{net_forward_padded.1} parent=5 // pred_check
        _
      $region10: #{net_forward_padded.1} parent=5 // pred_check_branch
        %210 = sbr.rel (%p207) target = $region12
      $region11: #{net_forward_padded.1} parent=5 // pred_region
        %s211 = ssub.s32 %s19, 1
        // Predicated region
        $region13: #{net_forward_padded.1} parent=11 // pred_check
          %p212 = pneg %p92
        $region14: #{net_forward_padded.1} parent=11 // pred_check_branch
          %214 = sbr.rel (%p212) target = $region16
        $region15: #{net_forward_padded.1} parent=11 // pred_region
          %216 = vsyncadd [#allocation6], 0
          %s218 = sshll.u32 %s2, 4
          %s219 = int_to_ptr.hbm [resolvable:$true] %s218
          %s220 = sshll.u32 [#allocation5], 4
          %s221 = int_to_ptr.vmem [resolvable:$true] %s220
          %223 = dma.hbm_to_vmem [thread:$0]  %s219, 64, %s221, [#allocation6]
        $region16: #{net_forward_padded.1} parent=11 // pred_fallthru
          _
        // Predicated region
        $region17: #{net_forward_padded.1} parent=11 // pred_check
          %p224 = pneg %p113
        $region18: #{net_forward_padded.1} parent=11 // pred_check_branch
          %226 = sbr.rel (%p224) target = $region20
        $region19: #{net_forward_padded.1} parent=11 // pred_region
          %228 = vsyncadd [#allocation6], 0
          %s229 = sshll.u32 %s3, 4
          %s230 = int_to_ptr.hbm [resolvable:$true] %s229
          %s231 = sshll.u32 [#allocation7], 4
          %s232 = int_to_ptr.vmem [resolvable:$true] %s231
          %237 = dma.hbm_to_vmem [thread:$0]  %s230, 8192, %s232, [#allocation6], 128, 128, 8
        $region20: #{net_forward_padded.1} parent=11 // pred_fallthru
          _
        // Predicated region
        $region21: #{net_forward_padded.1} parent=11 // pred_check
          %p238 = pneg %p134
        $region22: #{net_forward_padded.1} parent=11 // pred_check_branch
          %240 = sbr.rel (%p238) target = $region24
        $region23: #{net_forward_padded.1} parent=11 // pred_region
          %242 = vsyncadd [#allocation9], 0
          %s244 = sshll.u32 %s4, 4
          %s245 = int_to_ptr.hbm [resolvable:$true] %s244
          %s246 = sshll.u32 [#allocation8], 4
          %s247 = int_to_ptr.vmem [resolvable:$true] %s246
          %249 = dma.hbm_to_vmem [thread:$0]  %s245, 16, %s247, [#allocation9]
        $region24: #{net_forward_padded.1} parent=11 // pred_fallthru
          _
        // Predicated region
        $region25: #{net_forward_padded.1} parent=11 // pred_check
          %p250 = pneg %p155
        $region26: #{net_forward_padded.1} parent=11 // pred_check_branch
          %252 = sbr.rel (%p250) target = $region28
        $region27: #{net_forward_padded.1} parent=11 // pred_region
          %254 = vsyncadd [#allocation9], 0
          %s255 = sshll.u32 %s5, 4
          %s256 = int_to_ptr.hbm [resolvable:$true] %s255
          %s257 = sshll.u32 [#allocation10], 4
          %s258 = int_to_ptr.vmem [resolvable:$true] %s257
          %263 = dma.hbm_to_vmem [thread:$0]  %s256, 2048, %s258, [#allocation9], 128, 128, 8
        $region28: #{net_forward_padded.1} parent=11 // pred_fallthru
          _
        // Predicated region
        $region29: #{net_forward_padded.1} parent=11 // pred_check
          %p264 = pneg %p176
        $region30: #{net_forward_padded.1} parent=11 // pred_check_branch
          %266 = sbr.rel (%p264) target = $region32
        $region31: #{net_forward_padded.1} parent=11 // pred_region
          %268 = vsyncadd [#allocation12], 0
          %s270 = sshll.u32 %s6, 4
          %s271 = int_to_ptr.hbm [resolvable:$true] %s270
          %s272 = sshll.u32 [#allocation11], 4
          %s273 = int_to_ptr.vmem [resolvable:$true] %s272
          %275 = dma.hbm_to_vmem [thread:$0]  %s271, 16, %s273, [#allocation12]
        $region32: #{net_forward_padded.1} parent=11 // pred_fallthru
          _
      $region12: #{net_forward_padded.1} parent=5 // pred_fallthru
        _
      %p276 = scmp.lt.s32.totalorder %s19, 2
      // Predicated region
      $region33: #{net_forward_padded.1} parent=5 // pred_check
        %p277 = pneg %p276
      $region34: #{net_forward_padded.1} parent=5 // pred_check_branch
        %279 = sbr.rel (%p277) target = $region36
      $region35: #{net_forward_padded.1} parent=5 // pred_region
        // Predicated region
        $region37: #{net_forward_padded.1} parent=35 // pred_check
          %p280 = pneg %p39
        $region38: #{net_forward_padded.1} parent=35 // pred_check_branch
          %282 = sbr.rel (%p280) target = $region40
        $region39: #{net_forward_padded.1} parent=35 // pred_region
          %s283 = smul.u32 20, %s19
          %p284 = scmp.lt.s32.totalorder %s283, 39
          %s285 = scalar_select %p284, %s283, 39
          %s286 = smul.addr %s285, 8
          %s287 = scalar_lea.vmem %s0, %s286
          %s288 = smul.u32 20, %s19
        $region40: #{net_forward_padded.1} parent=35 // pred_fallthru
          _
        // Predicated region
        $region41: #{net_forward_padded.1} parent=35 // pred_check
          %p289 = pneg %p65
        $region42: #{net_forward_padded.1} parent=35 // pred_check_branch
          %291 = sbr.rel (%p289) target = $region44
        $region43: #{net_forward_padded.1} parent=35 // pred_region
          %s292 = sand.u32 %s55, 1
          %s293 = scalar_lea.sflag [#allocation4], %s292
          %s294 = sand.u32 %s55, 1
          %s295 = smul.addr %s294, 10240
          %s296 = scalar_lea.vmem [#allocation3], %s295
          %s297 = smul.u32 320, %s19
          %299 = vsyncadd %s293, 0
          %s300 = smul.addr %s297, 4
          %s301 = smul.addr %s300, 8
          %s302 = scalar_lea.hbm %s1, %s301
          %s303 = sshll.u32 %s302, 4
          %s304 = int_to_ptr.hbm [resolvable:$true] %s303
          %s305 = sshll.u32 %s296, 4
          %s306 = int_to_ptr.vmem [resolvable:$true] %s305
          %311 = dma.hbm_to_vmem [thread:$0]  %s304, 163840, %s306, %s293, 512, 512, 32
        $region44: #{net_forward_padded.1} parent=35 // pred_fallthru
          _
      $region36: #{net_forward_padded.1} parent=5 // pred_fallthru
        _
      %p312 = scmp.le.s32.totalorder 1, %s19
      %p313 = scmp.lt.s32.totalorder %s19, 3
      %p314 = pnand %p312, %p313
      %p315 = pneg %p314
      // Predicated region
      $region45: #{net_forward_padded.1} parent=5 // pred_check
        _
      $region46: #{net_forward_padded.1} parent=5 // pred_check_branch
        %317 = sbr.rel (%p314) target = $region48
      $region47: #{net_forward_padded.1} parent=5 // pred_region
        %s318 = ssub.s32 %s19, 1
        %s319 = sand.u32 %s58, 1
        %s320 = scalar_lea.sflag [#allocation4], %s319
        %s321 = sand.u32 %s58, 1
        %s322 = smul.addr %s321, 10240
        %s323 = scalar_lea.vmem [#allocation3], %s322
        // Predicated region
        $region49: #{net_forward_padded.1} parent=47 // pred_check
          %p324 = pneg %p71
        $region50: #{net_forward_padded.1} parent=47 // pred_check_branch
          %326 = sbr.rel (%p324) target = $region52
        $region51: #{net_forward_padded.1} parent=47 // pred_region
          %328 = dma.done %s320, 163840
        $region52: #{net_forward_padded.1} parent=47 // pred_fallthru
          _
        // Predicated region
        $region53: #{net_forward_padded.1} parent=47 // pred_check
          %p329 = pneg %p92
        $region54: #{net_forward_padded.1} parent=47 // pred_check_branch
          %331 = sbr.rel (%p329) target = $region56
        $region55: #{net_forward_padded.1} parent=47 // pred_region
          %333 = dma.done [#allocation6], 64
        $region56: #{net_forward_padded.1} parent=47 // pred_fallthru
          _
        // Predicated region
        $region57: #{net_forward_padded.1} parent=47 // pred_check
          %p334 = pneg %p113
        $region58: #{net_forward_padded.1} parent=47 // pred_check_branch
          %336 = sbr.rel (%p334) target = $region60
        $region59: #{net_forward_padded.1} parent=47 // pred_region
          %338 = dma.done [#allocation6], 8192
        $region60: #{net_forward_padded.1} parent=47 // pred_fallthru
          _
        // Predicated region
        $region61: #{net_forward_padded.1} parent=47 // pred_check
          %p339 = pneg %p134
        $region62: #{net_forward_padded.1} parent=47 // pred_check_branch
          %341 = sbr.rel (%p339) target = $region64
        $region63: #{net_forward_padded.1} parent=47 // pred_region
          %343 = dma.done [#allocation9], 16
        $region64: #{net_forward_padded.1} parent=47 // pred_fallthru
          _
        // Predicated region
        $region65: #{net_forward_padded.1} parent=47 // pred_check
          %p344 = pneg %p155
        $region66: #{net_forward_padded.1} parent=47 // pred_check_branch
          %346 = sbr.rel (%p344) target = $region68
        $region67: #{net_forward_padded.1} parent=47 // pred_region
          %348 = dma.done [#allocation9], 2048
        $region68: #{net_forward_padded.1} parent=47 // pred_fallthru
          _
        // Predicated region
        $region69: #{net_forward_padded.1} parent=47 // pred_check
          %p349 = pneg %p176
        $region70: #{net_forward_padded.1} parent=47 // pred_check_branch
          %351 = sbr.rel (%p349) target = $region72
        $region71: #{net_forward_padded.1} parent=47 // pred_region
          %353 = dma.done [#allocation12], 16
        $region72: #{net_forward_padded.1} parent=47 // pred_fallthru
          _
        %s354 = smul.u32 20, %s24
        %p355 = scmp.lt.s32.totalorder %s354, 39
        %s356 = scalar_select %p355, %s354, 39
        %s357 = smul.addr %s356, 8
        %s358 = scalar_lea.vmem %s0, %s357
        %p359 = pneg %p45
        %p360 = pneg %p42
        %s361 = sand.u32 %s58, 1
        %s362 = scalar_lea.sflag [#allocation4], %s361
        %s363 = sand.u32 %s58, 1
        %s364 = smul.addr %s363, 10240
        %s365 = scalar_lea.vmem [#allocation3], %s364
        %p366 = pneg %p71
        %p367 = pneg %p68
        %p368 = pneg %p92
        %p369 = pneg %p89
        %p370 = pneg %p113
        %p371 = pneg %p110
        %p372 = pneg %p134
        %p373 = pneg %p131
        %p374 = pneg %p155
        %p375 = pneg %p152
        %p376 = pneg %p176
        %p377 = pneg %p173
        %p378 = pneg %p197
        %p379 = pneg %p194
        %s380 = smul.u32 20, %s24
        %p381 = scmp.lt.s32.totalorder %s380, 39
        %s382 = scalar_select %p381, %s380, 39
        %s383 = smul.addr %s382, 8
        %s384 = scalar_lea.vmem %s0, %s383
        %s385 = smul.u32 20, %s24
        %s386 = smul.u32 320, %s24
        %p387 = scmp.eq.s32.totalorder %s24, 0
        // Predicated region
        $region73: #{net_forward_padded.1} parent=47 // pred_check
          %p388 = pneg %p387
        $region74: #{net_forward_padded.1} parent=47 // pred_check_branch
          %390 = sbr.rel (%p388) target = $region76
        $region75: #{net_forward_padded.1} parent=47 // pred_region
          %391 = vst [vmem:[#allocation2] sm:$0xff] 0.0
          %392 = vst [vmem:[#allocation2 + $0x8] sm:$0xff] 0.0
          %393 = vst [vmem:[#allocation2 + $0x10] sm:$0xff] 0.0
          %394 = vst [vmem:[#allocation2 + $0x18] sm:$0xff] 0.0
        $region76: #{net_forward_padded.1} parent=47 // pred_fallthru
          _
        %v395 = vld [vmem:[#allocation2] sm:$0xff]
        %v396 = vld [vmem:[#allocation2 + $0x8] sm:$0xff]
        %v397 = vld [vmem:[#allocation2 + $0x10] sm:$0xff]
        %v398 = vld [vmem:[#allocation2 + $0x18] sm:$0xff]
        %v399 = vld [vmem:[%s384] sm:$0xff]
        %v400 = vld [vmem:[%s384 + $0x8] sm:$0xff]
        %v401 = vld [vmem:[%s384 + $0x10] sm:$0xff]
        %v402 = vld [vmem:[%s384 + $0x18] sm:$0xff]
        %v403 = vld [vmem:[%s384 + $0x20] sm:$0xff]
        %v404 = vld [vmem:[%s384 + $0x28] sm:$0xff]
        %v405 = vld [vmem:[%s384 + $0x30] sm:$0xff]
        %v406 = vld [vmem:[%s384 + $0x38] sm:$0xff]
        %v407 = vld [vmem:[%s384 + $0x40] sm:$0xff]
        %v408 = vld [vmem:[%s384 + $0x48] sm:$0xff]
        %v409 = vld [vmem:[%s384 + $0x50] sm:$0xff]
        %v410 = vld [vmem:[%s384 + $0x58] sm:$0xff]
        %v411 = vld [vmem:[%s384 + $0x60] sm:$0xff]
        %v412 = vld [vmem:[%s384 + $0x68] sm:$0xff]
        %v413 = vld [vmem:[%s384 + $0x70] sm:$0xff]
        %v414 = vld [vmem:[%s384 + $0x78] sm:$0xff]
        %v415 = vld [vmem:[%s384 + $0x80] sm:$0xff]
        %v416 = vld [vmem:[%s384 + $0x88] sm:$0xff]
        %v417 = vld [vmem:[%s384 + $0x90] sm:$0xff]
        %v418 = vld [vmem:[%s384 + $0x98] sm:$0xff]
        %v419 = vld [vmem:[%s323] sm:$0xff]
        %v420 = vld [vmem:[%s323 + $0x8] sm:$0xff]
        %v421 = vld [vmem:[%s323 + $0x10] sm:$0xff]
        %v422 = vld [vmem:[%s323 + $0x18] sm:$0xff]
        %v423 = vld [vmem:[%s323 + $0x20] sm:$0xff]
        %v424 = vld [vmem:[%s323 + $0x28] sm:$0xff]
        %v425 = vld [vmem:[%s323 + $0x30] sm:$0xff]
        %v426 = vld [vmem:[%s323 + $0x38] sm:$0xff]
        %v427 = vld [vmem:[%s323 + $0x40] sm:$0xff]
        %v428 = vld [vmem:[%s323 + $0x48] sm:$0xff]
        %v429 = vld [vmem:[%s323 + $0x50] sm:$0xff]
        %v430 = vld [vmem:[%s323 + $0x58] sm:$0xff]
        %v431 = vld [vmem:[%s323 + $0x60] sm:$0xff]
        %v432 = vld [vmem:[%s323 + $0x68] sm:$0xff]
        %v433 = vld [vmem:[%s323 + $0x70] sm:$0xff]
        %v434 = vld [vmem:[%s323 + $0x78] sm:$0xff]
        %v435 = vld [vmem:[%s323 + $0x80] sm:$0xff]
        %v436 = vld [vmem:[%s323 + $0x88] sm:$0xff]
        %v437 = vld [vmem:[%s323 + $0x90] sm:$0xff]
        %v438 = vld [vmem:[%s323 + $0x98] sm:$0xff]
        %v439 = vld [vmem:[%s323 + $0xa0] sm:$0xff]
        %v440 = vld [vmem:[%s323 + $0xa8] sm:$0xff]
        %v441 = vld [vmem:[%s323 + $0xb0] sm:$0xff]
        %v442 = vld [vmem:[%s323 + $0xb8] sm:$0xff]
        %v443 = vld [vmem:[%s323 + $0xc0] sm:$0xff]
        %v444 = vld [vmem:[%s323 + $0xc8] sm:$0xff]
        %v445 = vld [vmem:[%s323 + $0xd0] sm:$0xff]
        %v446 = vld [vmem:[%s323 + $0xd8] sm:$0xff]
        %v447 = vld [vmem:[%s323 + $0xe0] sm:$0xff]
        %v448 = vld [vmem:[%s323 + $0xe8] sm:$0xff]
        %v449 = vld [vmem:[%s323 + $0xf0] sm:$0xff]
        %v450 = vld [vmem:[%s323 + $0xf8] sm:$0xff]
        %v451 = vld [vmem:[%s323 + $0x100] sm:$0xff]
        %v452 = vld [vmem:[%s323 + $0x108] sm:$0xff]
        %v453 = vld [vmem:[%s323 + $0x110] sm:$0xff]
        %v454 = vld [vmem:[%s323 + $0x118] sm:$0xff]
        %v455 = vld [vmem:[%s323 + $0x120] sm:$0xff]
        %v456 = vld [vmem:[%s323 + $0x128] sm:$0xff]
        %v457 = vld [vmem:[%s323 + $0x130] sm:$0xff]
        %v458 = vld [vmem:[%s323 + $0x138] sm:$0xff]
        %v459 = vld [vmem:[%s323 + $0x140] sm:$0xff]
        %v460 = vld [vmem:[%s323 + $0x148] sm:$0xff]
        %v461 = vld [vmem:[%s323 + $0x150] sm:$0xff]
        %v462 = vld [vmem:[%s323 + $0x158] sm:$0xff]
        %v463 = vld [vmem:[%s323 + $0x160] sm:$0xff]
        %v464 = vld [vmem:[%s323 + $0x168] sm:$0xff]
        %v465 = vld [vmem:[%s323 + $0x170] sm:$0xff]
        %v466 = vld [vmem:[%s323 + $0x178] sm:$0xff]
        %v467 = vld [vmem:[%s323 + $0x180] sm:$0xff]
        %v468 = vld [vmem:[%s323 + $0x188] sm:$0xff]
        %v469 = vld [vmem:[%s323 + $0x190] sm:$0xff]
        %v470 = vld [vmem:[%s323 + $0x198] sm:$0xff]
        %v471 = vld [vmem:[%s323 + $0x1a0] sm:$0xff]
        %v472 = vld [vmem:[%s323 + $0x1a8] sm:$0xff]
        %v473 = vld [vmem:[%s323 + $0x1b0] sm:$0xff]
        %v474 = vld [vmem:[%s323 + $0x1b8] sm:$0xff]
        %v475 = vld [vmem:[%s323 + $0x1c0] sm:$0xff]
        %v476 = vld [vmem:[%s323 + $0x1c8] sm:$0xff]
        %v477 = vld [vmem:[%s323 + $0x1d0] sm:$0xff]
        %v478 = vld [vmem:[%s323 + $0x1d8] sm:$0xff]
        %v479 = vld [vmem:[%s323 + $0x1e0] sm:$0xff]
        %v480 = vld [vmem:[%s323 + $0x1e8] sm:$0xff]
        %v481 = vld [vmem:[%s323 + $0x1f0] sm:$0xff]
        %v482 = vld [vmem:[%s323 + $0x1f8] sm:$0xff]
        %v483 = vld [vmem:[%s323 + $0x200] sm:$0xff]
        %v484 = vld [vmem:[%s323 + $0x208] sm:$0xff]
        %v485 = vld [vmem:[%s323 + $0x210] sm:$0xff]
        %v486 = vld [vmem:[%s323 + $0x218] sm:$0xff]
        %v487 = vld [vmem:[%s323 + $0x220] sm:$0xff]
        %v488 = vld [vmem:[%s323 + $0x228] sm:$0xff]
        %v489 = vld [vmem:[%s323 + $0x230] sm:$0xff]
        %v490 = vld [vmem:[%s323 + $0x238] sm:$0xff]
        %v491 = vld [vmem:[%s323 + $0x240] sm:$0xff]
        %v492 = vld [vmem:[%s323 + $0x248] sm:$0xff]
        %v493 = vld [vmem:[%s323 + $0x250] sm:$0xff]
        %v494 = vld [vmem:[%s323 + $0x258] sm:$0xff]
        %v495 = vld [vmem:[%s323 + $0x260] sm:$0xff]
        %v496 = vld [vmem:[%s323 + $0x268] sm:$0xff]
        %v497 = vld [vmem:[%s323 + $0x270] sm:$0xff]
        %v498 = vld [vmem:[%s323 + $0x278] sm:$0xff]
        %v499 = vld [vmem:[%s323 + $0x280] sm:$0xff]
        %v500 = vld [vmem:[%s323 + $0x288] sm:$0xff]
        %v501 = vld [vmem:[%s323 + $0x290] sm:$0xff]
        %v502 = vld [vmem:[%s323 + $0x298] sm:$0xff]
        %v503 = vld [vmem:[%s323 + $0x2a0] sm:$0xff]
        %v504 = vld [vmem:[%s323 + $0x2a8] sm:$0xff]
        %v505 = vld [vmem:[%s323 + $0x2b0] sm:$0xff]
        %v506 = vld [vmem:[%s323 + $0x2b8] sm:$0xff]
        %v507 = vld [vmem:[%s323 + $0x2c0] sm:$0xff]
        %v508 = vld [vmem:[%s323 + $0x2c8] sm:$0xff]
        %v509 = vld [vmem:[%s323 + $0x2d0] sm:$0xff]
        %v510 = vld [vmem:[%s323 + $0x2d8] sm:$0xff]
        %v511 = vld [vmem:[%s323 + $0x2e0] sm:$0xff]
        %v512 = vld [vmem:[%s323 + $0x2e8] sm:$0xff]
        %v513 = vld [vmem:[%s323 + $0x2f0] sm:$0xff]
        %v514 = vld [vmem:[%s323 + $0x2f8] sm:$0xff]
        %v515 = vld [vmem:[%s323 + $0x300] sm:$0xff]
        %v516 = vld [vmem:[%s323 + $0x308] sm:$0xff]
        %v517 = vld [vmem:[%s323 + $0x310] sm:$0xff]
        %v518 = vld [vmem:[%s323 + $0x318] sm:$0xff]
        %v519 = vld [vmem:[%s323 + $0x320] sm:$0xff]
        %v520 = vld [vmem:[%s323 + $0x328] sm:$0xff]
        %v521 = vld [vmem:[%s323 + $0x330] sm:$0xff]
        %v522 = vld [vmem:[%s323 + $0x338] sm:$0xff]
        %v523 = vld [vmem:[%s323 + $0x340] sm:$0xff]
        %v524 = vld [vmem:[%s323 + $0x348] sm:$0xff]
        %v525 = vld [vmem:[%s323 + $0x350] sm:$0xff]
        %v526 = vld [vmem:[%s323 + $0x358] sm:$0xff]
        %v527 = vld [vmem:[%s323 + $0x360] sm:$0xff]
        %v528 = vld [vmem:[%s323 + $0x368] sm:$0xff]
        %v529 = vld [vmem:[%s323 + $0x370] sm:$0xff]
        %v530 = vld [vmem:[%s323 + $0x378] sm:$0xff]
        %v531 = vld [vmem:[%s323 + $0x380] sm:$0xff]
        %v532 = vld [vmem:[%s323 + $0x388] sm:$0xff]
        %v533 = vld [vmem:[%s323 + $0x390] sm:$0xff]
        %v534 = vld [vmem:[%s323 + $0x398] sm:$0xff]
        %v535 = vld [vmem:[%s323 + $0x3a0] sm:$0xff]
        %v536 = vld [vmem:[%s323 + $0x3a8] sm:$0xff]
        %v537 = vld [vmem:[%s323 + $0x3b0] sm:$0xff]
        %v538 = vld [vmem:[%s323 + $0x3b8] sm:$0xff]
        %v539 = vld [vmem:[%s323 + $0x3c0] sm:$0xff]
        %v540 = vld [vmem:[%s323 + $0x3c8] sm:$0xff]
        %v541 = vld [vmem:[%s323 + $0x3d0] sm:$0xff]
        %v542 = vld [vmem:[%s323 + $0x3d8] sm:$0xff]
        %v543 = vld [vmem:[%s323 + $0x3e0] sm:$0xff]
        %v544 = vld [vmem:[%s323 + $0x3e8] sm:$0xff]
        %v545 = vld [vmem:[%s323 + $0x3f0] sm:$0xff]
        %v546 = vld [vmem:[%s323 + $0x3f8] sm:$0xff]
        %v547 = vld [vmem:[%s323 + $0x400] sm:$0xff]
        %v548 = vld [vmem:[%s323 + $0x408] sm:$0xff]
        %v549 = vld [vmem:[%s323 + $0x410] sm:$0xff]
        %v550 = vld [vmem:[%s323 + $0x418] sm:$0xff]
        %v551 = vld [vmem:[%s323 + $0x420] sm:$0xff]
        %v552 = vld [vmem:[%s323 + $0x428] sm:$0xff]
        %v553 = vld [vmem:[%s323 + $0x430] sm:$0xff]
        %v554 = vld [vmem:[%s323 + $0x438] sm:$0xff]
        %v555 = vld [vmem:[%s323 + $0x440] sm:$0xff]
        %v556 = vld [vmem:[%s323 + $0x448] sm:$0xff]
        %v557 = vld [vmem:[%s323 + $0x450] sm:$0xff]
        %v558 = vld [vmem:[%s323 + $0x458] sm:$0xff]
        %v559 = vld [vmem:[%s323 + $0x460] sm:$0xff]
        %v560 = vld [vmem:[%s323 + $0x468] sm:$0xff]
        %v561 = vld [vmem:[%s323 + $0x470] sm:$0xff]
        %v562 = vld [vmem:[%s323 + $0x478] sm:$0xff]
        %v563 = vld [vmem:[%s323 + $0x480] sm:$0xff]
        %v564 = vld [vmem:[%s323 + $0x488] sm:$0xff]
        %v565 = vld [vmem:[%s323 + $0x490] sm:$0xff]
        %v566 = vld [vmem:[%s323 + $0x498] sm:$0xff]
        %v567 = vld [vmem:[%s323 + $0x4a0] sm:$0xff]
        %v568 = vld [vmem:[%s323 + $0x4a8] sm:$0xff]
        %v569 = vld [vmem:[%s323 + $0x4b0] sm:$0xff]
        %v570 = vld [vmem:[%s323 + $0x4b8] sm:$0xff]
        %v571 = vld [vmem:[%s323 + $0x4c0] sm:$0xff]
        %v572 = vld [vmem:[%s323 + $0x4c8] sm:$0xff]
        %v573 = vld [vmem:[%s323 + $0x4d0] sm:$0xff]
        %v574 = vld [vmem:[%s323 + $0x4d8] sm:$0xff]
        %v575 = vld [vmem:[%s323 + $0x4e0] sm:$0xff]
        %v576 = vld [vmem:[%s323 + $0x4e8] sm:$0xff]
        %v577 = vld [vmem:[%s323 + $0x4f0] sm:$0xff]
        %v578 = vld [vmem:[%s323 + $0x4f8] sm:$0xff]
        %v579 = vld [vmem:[%s323 + $0x500] sm:$0xff]
        %v580 = vld [vmem:[%s323 + $0x508] sm:$0xff]
        %v581 = vld [vmem:[%s323 + $0x510] sm:$0xff]
        %v582 = vld [vmem:[%s323 + $0x518] sm:$0xff]
        %v583 = vld [vmem:[%s323 + $0x520] sm:$0xff]
        %v584 = vld [vmem:[%s323 + $0x528] sm:$0xff]
        %v585 = vld [vmem:[%s323 + $0x530] sm:$0xff]
        %v586 = vld [vmem:[%s323 + $0x538] sm:$0xff]
        %v587 = vld [vmem:[%s323 + $0x540] sm:$0xff]
        %v588 = vld [vmem:[%s323 + $0x548] sm:$0xff]
        %v589 = vld [vmem:[%s323 + $0x550] sm:$0xff]
        %v590 = vld [vmem:[%s323 + $0x558] sm:$0xff]
        %v591 = vld [vmem:[%s323 + $0x560] sm:$0xff]
        %v592 = vld [vmem:[%s323 + $0x568] sm:$0xff]
        %v593 = vld [vmem:[%s323 + $0x570] sm:$0xff]
        %v594 = vld [vmem:[%s323 + $0x578] sm:$0xff]
        %v595 = vld [vmem:[%s323 + $0x580] sm:$0xff]
        %v596 = vld [vmem:[%s323 + $0x588] sm:$0xff]
        %v597 = vld [vmem:[%s323 + $0x590] sm:$0xff]
        %v598 = vld [vmem:[%s323 + $0x598] sm:$0xff]
        %v599 = vld [vmem:[%s323 + $0x5a0] sm:$0xff]
        %v600 = vld [vmem:[%s323 + $0x5a8] sm:$0xff]
        %v601 = vld [vmem:[%s323 + $0x5b0] sm:$0xff]
        %v602 = vld [vmem:[%s323 + $0x5b8] sm:$0xff]
        %v603 = vld [vmem:[%s323 + $0x5c0] sm:$0xff]
        %v604 = vld [vmem:[%s323 + $0x5c8] sm:$0xff]
        %v605 = vld [vmem:[%s323 + $0x5d0] sm:$0xff]
        %v606 = vld [vmem:[%s323 + $0x5d8] sm:$0xff]
        %v607 = vld [vmem:[%s323 + $0x5e0] sm:$0xff]
        %v608 = vld [vmem:[%s323 + $0x5e8] sm:$0xff]
        %v609 = vld [vmem:[%s323 + $0x5f0] sm:$0xff]
        %v610 = vld [vmem:[%s323 + $0x5f8] sm:$0xff]
        %v611 = vld [vmem:[%s323 + $0x600] sm:$0xff]
        %v612 = vld [vmem:[%s323 + $0x608] sm:$0xff]
        %v613 = vld [vmem:[%s323 + $0x610] sm:$0xff]
        %v614 = vld [vmem:[%s323 + $0x618] sm:$0xff]
        %v615 = vld [vmem:[%s323 + $0x620] sm:$0xff]
        %v616 = vld [vmem:[%s323 + $0x628] sm:$0xff]
        %v617 = vld [vmem:[%s323 + $0x630] sm:$0xff]
        %v618 = vld [vmem:[%s323 + $0x638] sm:$0xff]
        %v619 = vld [vmem:[%s323 + $0x640] sm:$0xff]
        %v620 = vld [vmem:[%s323 + $0x648] sm:$0xff]
        %v621 = vld [vmem:[%s323 + $0x650] sm:$0xff]
        %v622 = vld [vmem:[%s323 + $0x658] sm:$0xff]
        %v623 = vld [vmem:[%s323 + $0x660] sm:$0xff]
        %v624 = vld [vmem:[%s323 + $0x668] sm:$0xff]
        %v625 = vld [vmem:[%s323 + $0x670] sm:$0xff]
        %v626 = vld [vmem:[%s323 + $0x678] sm:$0xff]
        %v627 = vld [vmem:[%s323 + $0x680] sm:$0xff]
        %v628 = vld [vmem:[%s323 + $0x688] sm:$0xff]
        %v629 = vld [vmem:[%s323 + $0x690] sm:$0xff]
        %v630 = vld [vmem:[%s323 + $0x698] sm:$0xff]
        %v631 = vld [vmem:[%s323 + $0x6a0] sm:$0xff]
        %v632 = vld [vmem:[%s323 + $0x6a8] sm:$0xff]
        %v633 = vld [vmem:[%s323 + $0x6b0] sm:$0xff]
        %v634 = vld [vmem:[%s323 + $0x6b8] sm:$0xff]
        %v635 = vld [vmem:[%s323 + $0x6c0] sm:$0xff]
        %v636 = vld [vmem:[%s323 + $0x6c8] sm:$0xff]
        %v637 = vld [vmem:[%s323 + $0x6d0] sm:$0xff]
        %v638 = vld [vmem:[%s323 + $0x6d8] sm:$0xff]
        %v639 = vld [vmem:[%s323 + $0x6e0] sm:$0xff]
        %v640 = vld [vmem:[%s323 + $0x6e8] sm:$0xff]
        %v641 = vld [vmem:[%s323 + $0x6f0] sm:$0xff]
        %v642 = vld [vmem:[%s323 + $0x6f8] sm:$0xff]
        %v643 = vld [vmem:[%s323 + $0x700] sm:$0xff]
        %v644 = vld [vmem:[%s323 + $0x708] sm:$0xff]
        %v645 = vld [vmem:[%s323 + $0x710] sm:$0xff]
        %v646 = vld [vmem:[%s323 + $0x718] sm:$0xff]
        %v647 = vld [vmem:[%s323 + $0x720] sm:$0xff]
        %v648 = vld [vmem:[%s323 + $0x728] sm:$0xff]
        %v649 = vld [vmem:[%s323 + $0x730] sm:$0xff]
        %v650 = vld [vmem:[%s323 + $0x738] sm:$0xff]
        %v651 = vld [vmem:[%s323 + $0x740] sm:$0xff]
        %v652 = vld [vmem:[%s323 + $0x748] sm:$0xff]
        %v653 = vld [vmem:[%s323 + $0x750] sm:$0xff]
        %v654 = vld [vmem:[%s323 + $0x758] sm:$0xff]
        %v655 = vld [vmem:[%s323 + $0x760] sm:$0xff]
        %v656 = vld [vmem:[%s323 + $0x768] sm:$0xff]
        %v657 = vld [vmem:[%s323 + $0x770] sm:$0xff]
        %v658 = vld [vmem:[%s323 + $0x778] sm:$0xff]
        %v659 = vld [vmem:[%s323 + $0x780] sm:$0xff]
        %v660 = vld [vmem:[%s323 + $0x788] sm:$0xff]
        %v661 = vld [vmem:[%s323 + $0x790] sm:$0xff]
        %v662 = vld [vmem:[%s323 + $0x798] sm:$0xff]
        %v663 = vld [vmem:[%s323 + $0x7a0] sm:$0xff]
        %v664 = vld [vmem:[%s323 + $0x7a8] sm:$0xff]
        %v665 = vld [vmem:[%s323 + $0x7b0] sm:$0xff]
        %v666 = vld [vmem:[%s323 + $0x7b8] sm:$0xff]
        %v667 = vld [vmem:[%s323 + $0x7c0] sm:$0xff]
        %v668 = vld [vmem:[%s323 + $0x7c8] sm:$0xff]
        %v669 = vld [vmem:[%s323 + $0x7d0] sm:$0xff]
        %v670 = vld [vmem:[%s323 + $0x7d8] sm:$0xff]
        %v671 = vld [vmem:[%s323 + $0x7e0] sm:$0xff]
        %v672 = vld [vmem:[%s323 + $0x7e8] sm:$0xff]
        %v673 = vld [vmem:[%s323 + $0x7f0] sm:$0xff]
        %v674 = vld [vmem:[%s323 + $0x7f8] sm:$0xff]
        %v675 = vld [vmem:[%s323 + $0x800] sm:$0xff]
        %v676 = vld [vmem:[%s323 + $0x808] sm:$0xff]
        %v677 = vld [vmem:[%s323 + $0x810] sm:$0xff]
        %v678 = vld [vmem:[%s323 + $0x818] sm:$0xff]
        %v679 = vld [vmem:[%s323 + $0x820] sm:$0xff]
        %v680 = vld [vmem:[%s323 + $0x828] sm:$0xff]
        %v681 = vld [vmem:[%s323 + $0x830] sm:$0xff]
        %v682 = vld [vmem:[%s323 + $0x838] sm:$0xff]
        %v683 = vld [vmem:[%s323 + $0x840] sm:$0xff]
        %v684 = vld [vmem:[%s323 + $0x848] sm:$0xff]
        %v685 = vld [vmem:[%s323 + $0x850] sm:$0xff]
        %v686 = vld [vmem:[%s323 + $0x858] sm:$0xff]
        %v687 = vld [vmem:[%s323 + $0x860] sm:$0xff]
        %v688 = vld [vmem:[%s323 + $0x868] sm:$0xff]
        %v689 = vld [vmem:[%s323 + $0x870] sm:$0xff]
        %v690 = vld [vmem:[%s323 + $0x878] sm:$0xff]
        %v691 = vld [vmem:[%s323 + $0x880] sm:$0xff]
        %v692 = vld [vmem:[%s323 + $0x888] sm:$0xff]
        %v693 = vld [vmem:[%s323 + $0x890] sm:$0xff]
        %v694 = vld [vmem:[%s323 + $0x898] sm:$0xff]
        %v695 = vld [vmem:[%s323 + $0x8a0] sm:$0xff]
        %v696 = vld [vmem:[%s323 + $0x8a8] sm:$0xff]
        %v697 = vld [vmem:[%s323 + $0x8b0] sm:$0xff]
        %v698 = vld [vmem:[%s323 + $0x8b8] sm:$0xff]
        %v699 = vld [vmem:[%s323 + $0x8c0] sm:$0xff]
        %v700 = vld [vmem:[%s323 + $0x8c8] sm:$0xff]
        %v701 = vld [vmem:[%s323 + $0x8d0] sm:$0xff]
        %v702 = vld [vmem:[%s323 + $0x8d8] sm:$0xff]
        %v703 = vld [vmem:[%s323 + $0x8e0] sm:$0xff]
        %v704 = vld [vmem:[%s323 + $0x8e8] sm:$0xff]
        %v705 = vld [vmem:[%s323 + $0x8f0] sm:$0xff]
        %v706 = vld [vmem:[%s323 + $0x8f8] sm:$0xff]
        %v707 = vld [vmem:[%s323 + $0x900] sm:$0xff]
        %v708 = vld [vmem:[%s323 + $0x908] sm:$0xff]
        %v709 = vld [vmem:[%s323 + $0x910] sm:$0xff]
        %v710 = vld [vmem:[%s323 + $0x918] sm:$0xff]
        %v711 = vld [vmem:[%s323 + $0x920] sm:$0xff]
        %v712 = vld [vmem:[%s323 + $0x928] sm:$0xff]
        %v713 = vld [vmem:[%s323 + $0x930] sm:$0xff]
        %v714 = vld [vmem:[%s323 + $0x938] sm:$0xff]
        %v715 = vld [vmem:[%s323 + $0x940] sm:$0xff]
        %v716 = vld [vmem:[%s323 + $0x948] sm:$0xff]
        %v717 = vld [vmem:[%s323 + $0x950] sm:$0xff]
        %v718 = vld [vmem:[%s323 + $0x958] sm:$0xff]
        %v719 = vld [vmem:[%s323 + $0x960] sm:$0xff]
        %v720 = vld [vmem:[%s323 + $0x968] sm:$0xff]
        %v721 = vld [vmem:[%s323 + $0x970] sm:$0xff]
        %v722 = vld [vmem:[%s323 + $0x978] sm:$0xff]
        %v723 = vld [vmem:[%s323 + $0x980] sm:$0xff]
        %v724 = vld [vmem:[%s323 + $0x988] sm:$0xff]
        %v725 = vld [vmem:[%s323 + $0x990] sm:$0xff]
        %v726 = vld [vmem:[%s323 + $0x998] sm:$0xff]
        %v727 = vld [vmem:[%s323 + $0x9a0] sm:$0xff]
        %v728 = vld [vmem:[%s323 + $0x9a8] sm:$0xff]
        %v729 = vld [vmem:[%s323 + $0x9b0] sm:$0xff]
        %v730 = vld [vmem:[%s323 + $0x9b8] sm:$0xff]
        %v731 = vld [vmem:[%s323 + $0x9c0] sm:$0xff]
        %v732 = vld [vmem:[%s323 + $0x9c8] sm:$0xff]
        %v733 = vld [vmem:[%s323 + $0x9d0] sm:$0xff]
        %v734 = vld [vmem:[%s323 + $0x9d8] sm:$0xff]
        %v735 = vld [vmem:[%s323 + $0x9e0] sm:$0xff]
        %v736 = vld [vmem:[%s323 + $0x9e8] sm:$0xff]
        %v737 = vld [vmem:[%s323 + $0x9f0] sm:$0xff]
        %v738 = vld [vmem:[%s323 + $0x9f8] sm:$0xff]
        %v739 = vld [vmem:[%s323 + $0xa00] sm:$0xff]
        %v740 = vld [vmem:[%s323 + $0xa08] sm:$0xff]
        %v741 = vld [vmem:[%s323 + $0xa10] sm:$0xff]
        %v742 = vld [vmem:[%s323 + $0xa18] sm:$0xff]
        %v743 = vld [vmem:[%s323 + $0xa20] sm:$0xff]
        %v744 = vld [vmem:[%s323 + $0xa28] sm:$0xff]
        %v745 = vld [vmem:[%s323 + $0xa30] sm:$0xff]
        %v746 = vld [vmem:[%s323 + $0xa38] sm:$0xff]
        %v747 = vld [vmem:[%s323 + $0xa40] sm:$0xff]
        %v748 = vld [vmem:[%s323 + $0xa48] sm:$0xff]
        %v749 = vld [vmem:[%s323 + $0xa50] sm:$0xff]
        %v750 = vld [vmem:[%s323 + $0xa58] sm:$0xff]
        %v751 = vld [vmem:[%s323 + $0xa60] sm:$0xff]
        %v752 = vld [vmem:[%s323 + $0xa68] sm:$0xff]
        %v753 = vld [vmem:[%s323 + $0xa70] sm:$0xff]
        %v754 = vld [vmem:[%s323 + $0xa78] sm:$0xff]
        %v755 = vld [vmem:[%s323 + $0xa80] sm:$0xff]
        %v756 = vld [vmem:[%s323 + $0xa88] sm:$0xff]
        %v757 = vld [vmem:[%s323 + $0xa90] sm:$0xff]
        %v758 = vld [vmem:[%s323 + $0xa98] sm:$0xff]
        %v759 = vld [vmem:[%s323 + $0xaa0] sm:$0xff]
        %v760 = vld [vmem:[%s323 + $0xaa8] sm:$0xff]
        %v761 = vld [vmem:[%s323 + $0xab0] sm:$0xff]
        %v762 = vld [vmem:[%s323 + $0xab8] sm:$0xff]
        %v763 = vld [vmem:[%s323 + $0xac0] sm:$0xff]
        %v764 = vld [vmem:[%s323 + $0xac8] sm:$0xff]
        %v765 = vld [vmem:[%s323 + $0xad0] sm:$0xff]
        %v766 = vld [vmem:[%s323 + $0xad8] sm:$0xff]
        %v767 = vld [vmem:[%s323 + $0xae0] sm:$0xff]
        %v768 = vld [vmem:[%s323 + $0xae8] sm:$0xff]
        %v769 = vld [vmem:[%s323 + $0xaf0] sm:$0xff]
        %v770 = vld [vmem:[%s323 + $0xaf8] sm:$0xff]
        %v771 = vld [vmem:[%s323 + $0xb00] sm:$0xff]
        %v772 = vld [vmem:[%s323 + $0xb08] sm:$0xff]
        %v773 = vld [vmem:[%s323 + $0xb10] sm:$0xff]
        %v774 = vld [vmem:[%s323 + $0xb18] sm:$0xff]
        %v775 = vld [vmem:[%s323 + $0xb20] sm:$0xff]
        %v776 = vld [vmem:[%s323 + $0xb28] sm:$0xff]
        %v777 = vld [vmem:[%s323 + $0xb30] sm:$0xff]
        %v778 = vld [vmem:[%s323 + $0xb38] sm:$0xff]
        %v779 = vld [vmem:[%s323 + $0xb40] sm:$0xff]
        %v780 = vld [vmem:[%s323 + $0xb48] sm:$0xff]
        %v781 = vld [vmem:[%s323 + $0xb50] sm:$0xff]
        %v782 = vld [vmem:[%s323 + $0xb58] sm:$0xff]
        %v783 = vld [vmem:[%s323 + $0xb60] sm:$0xff]
        %v784 = vld [vmem:[%s323 + $0xb68] sm:$0xff]
        %v785 = vld [vmem:[%s323 + $0xb70] sm:$0xff]
        %v786 = vld [vmem:[%s323 + $0xb78] sm:$0xff]
        %v787 = vld [vmem:[%s323 + $0xb80] sm:$0xff]
        %v788 = vld [vmem:[%s323 + $0xb88] sm:$0xff]
        %v789 = vld [vmem:[%s323 + $0xb90] sm:$0xff]
        %v790 = vld [vmem:[%s323 + $0xb98] sm:$0xff]
        %v791 = vld [vmem:[%s323 + $0xba0] sm:$0xff]
        %v792 = vld [vmem:[%s323 + $0xba8] sm:$0xff]
        %v793 = vld [vmem:[%s323 + $0xbb0] sm:$0xff]
        %v794 = vld [vmem:[%s323 + $0xbb8] sm:$0xff]
        %v795 = vld [vmem:[%s323 + $0xbc0] sm:$0xff]
        %v796 = vld [vmem:[%s323 + $0xbc8] sm:$0xff]
        %v797 = vld [vmem:[%s323 + $0xbd0] sm:$0xff]
        %v798 = vld [vmem:[%s323 + $0xbd8] sm:$0xff]
        %v799 = vld [vmem:[%s323 + $0xbe0] sm:$0xff]
        %v800 = vld [vmem:[%s323 + $0xbe8] sm:$0xff]
        %v801 = vld [vmem:[%s323 + $0xbf0] sm:$0xff]
        %v802 = vld [vmem:[%s323 + $0xbf8] sm:$0xff]
        %v803 = vld [vmem:[%s323 + $0xc00] sm:$0xff]
        %v804 = vld [vmem:[%s323 + $0xc08] sm:$0xff]
        %v805 = vld [vmem:[%s323 + $0xc10] sm:$0xff]
        %v806 = vld [vmem:[%s323 + $0xc18] sm:$0xff]
        %v807 = vld [vmem:[%s323 + $0xc20] sm:$0xff]
        %v808 = vld [vmem:[%s323 + $0xc28] sm:$0xff]
        %v809 = vld [vmem:[%s323 + $0xc30] sm:$0xff]
        %v810 = vld [vmem:[%s323 + $0xc38] sm:$0xff]
        %v811 = vld [vmem:[%s323 + $0xc40] sm:$0xff]
        %v812 = vld [vmem:[%s323 + $0xc48] sm:$0xff]
        %v813 = vld [vmem:[%s323 + $0xc50] sm:$0xff]
        %v814 = vld [vmem:[%s323 + $0xc58] sm:$0xff]
        %v815 = vld [vmem:[%s323 + $0xc60] sm:$0xff]
        %v816 = vld [vmem:[%s323 + $0xc68] sm:$0xff]
        %v817 = vld [vmem:[%s323 + $0xc70] sm:$0xff]
        %v818 = vld [vmem:[%s323 + $0xc78] sm:$0xff]
        %v819 = vld [vmem:[%s323 + $0xc80] sm:$0xff]
        %v820 = vld [vmem:[%s323 + $0xc88] sm:$0xff]
        %v821 = vld [vmem:[%s323 + $0xc90] sm:$0xff]
        %v822 = vld [vmem:[%s323 + $0xc98] sm:$0xff]
        %v823 = vld [vmem:[%s323 + $0xca0] sm:$0xff]
        %v824 = vld [vmem:[%s323 + $0xca8] sm:$0xff]
        %v825 = vld [vmem:[%s323 + $0xcb0] sm:$0xff]
        %v826 = vld [vmem:[%s323 + $0xcb8] sm:$0xff]
        %v827 = vld [vmem:[%s323 + $0xcc0] sm:$0xff]
        %v828 = vld [vmem:[%s323 + $0xcc8] sm:$0xff]
        %v829 = vld [vmem:[%s323 + $0xcd0] sm:$0xff]
        %v830 = vld [vmem:[%s323 + $0xcd8] sm:$0xff]
        %v831 = vld [vmem:[%s323 + $0xce0] sm:$0xff]
        %v832 = vld [vmem:[%s323 + $0xce8] sm:$0xff]
        %v833 = vld [vmem:[%s323 + $0xcf0] sm:$0xff]
        %v834 = vld [vmem:[%s323 + $0xcf8] sm:$0xff]
        %v835 = vld [vmem:[%s323 + $0xd00] sm:$0xff]
        %v836 = vld [vmem:[%s323 + $0xd08] sm:$0xff]
        %v837 = vld [vmem:[%s323 + $0xd10] sm:$0xff]
        %v838 = vld [vmem:[%s323 + $0xd18] sm:$0xff]
        %v839 = vld [vmem:[%s323 + $0xd20] sm:$0xff]
        %v840 = vld [vmem:[%s323 + $0xd28] sm:$0xff]
        %v841 = vld [vmem:[%s323 + $0xd30] sm:$0xff]
        %v842 = vld [vmem:[%s323 + $0xd38] sm:$0xff]
        %v843 = vld [vmem:[%s323 + $0xd40] sm:$0xff]
        %v844 = vld [vmem:[%s323 + $0xd48] sm:$0xff]
        %v845 = vld [vmem:[%s323 + $0xd50] sm:$0xff]
        %v846 = vld [vmem:[%s323 + $0xd58] sm:$0xff]
        %v847 = vld [vmem:[%s323 + $0xd60] sm:$0xff]
        %v848 = vld [vmem:[%s323 + $0xd68] sm:$0xff]
        %v849 = vld [vmem:[%s323 + $0xd70] sm:$0xff]
        %v850 = vld [vmem:[%s323 + $0xd78] sm:$0xff]
        %v851 = vld [vmem:[%s323 + $0xd80] sm:$0xff]
        %v852 = vld [vmem:[%s323 + $0xd88] sm:$0xff]
        %v853 = vld [vmem:[%s323 + $0xd90] sm:$0xff]
        %v854 = vld [vmem:[%s323 + $0xd98] sm:$0xff]
        %v855 = vld [vmem:[%s323 + $0xda0] sm:$0xff]
        %v856 = vld [vmem:[%s323 + $0xda8] sm:$0xff]
        %v857 = vld [vmem:[%s323 + $0xdb0] sm:$0xff]
        %v858 = vld [vmem:[%s323 + $0xdb8] sm:$0xff]
        %v859 = vld [vmem:[%s323 + $0xdc0] sm:$0xff]
        %v860 = vld [vmem:[%s323 + $0xdc8] sm:$0xff]
        %v861 = vld [vmem:[%s323 + $0xdd0] sm:$0xff]
        %v862 = vld [vmem:[%s323 + $0xdd8] sm:$0xff]
        %v863 = vld [vmem:[%s323 + $0xde0] sm:$0xff]
        %v864 = vld [vmem:[%s323 + $0xde8] sm:$0xff]
        %v865 = vld [vmem:[%s323 + $0xdf0] sm:$0xff]
        %v866 = vld [vmem:[%s323 + $0xdf8] sm:$0xff]
        %v867 = vld [vmem:[%s323 + $0xe00] sm:$0xff]
        %v868 = vld [vmem:[%s323 + $0xe08] sm:$0xff]
        %v869 = vld [vmem:[%s323 + $0xe10] sm:$0xff]
        %v870 = vld [vmem:[%s323 + $0xe18] sm:$0xff]
        %v871 = vld [vmem:[%s323 + $0xe20] sm:$0xff]
        %v872 = vld [vmem:[%s323 + $0xe28] sm:$0xff]
        %v873 = vld [vmem:[%s323 + $0xe30] sm:$0xff]
        %v874 = vld [vmem:[%s323 + $0xe38] sm:$0xff]
        %v875 = vld [vmem:[%s323 + $0xe40] sm:$0xff]
        %v876 = vld [vmem:[%s323 + $0xe48] sm:$0xff]
        %v877 = vld [vmem:[%s323 + $0xe50] sm:$0xff]
        %v878 = vld [vmem:[%s323 + $0xe58] sm:$0xff]
        %v879 = vld [vmem:[%s323 + $0xe60] sm:$0xff]
        %v880 = vld [vmem:[%s323 + $0xe68] sm:$0xff]
        %v881 = vld [vmem:[%s323 + $0xe70] sm:$0xff]
        %v882 = vld [vmem:[%s323 + $0xe78] sm:$0xff]
        %v883 = vld [vmem:[%s323 + $0xe80] sm:$0xff]
        %v884 = vld [vmem:[%s323 + $0xe88] sm:$0xff]
        %v885 = vld [vmem:[%s323 + $0xe90] sm:$0xff]
        %v886 = vld [vmem:[%s323 + $0xe98] sm:$0xff]
        %v887 = vld [vmem:[%s323 + $0xea0] sm:$0xff]
        %v888 = vld [vmem:[%s323 + $0xea8] sm:$0xff]
        %v889 = vld [vmem:[%s323 + $0xeb0] sm:$0xff]
        %v890 = vld [vmem:[%s323 + $0xeb8] sm:$0xff]
        %v891 = vld [vmem:[%s323 + $0xec0] sm:$0xff]
        %v892 = vld [vmem:[%s323 + $0xec8] sm:$0xff]
        %v893 = vld [vmem:[%s323 + $0xed0] sm:$0xff]
        %v894 = vld [vmem:[%s323 + $0xed8] sm:$0xff]
        %v895 = vld [vmem:[%s323 + $0xee0] sm:$0xff]
        %v896 = vld [vmem:[%s323 + $0xee8] sm:$0xff]
        %v897 = vld [vmem:[%s323 + $0xef0] sm:$0xff]
        %v898 = vld [vmem:[%s323 + $0xef8] sm:$0xff]
        %v899 = vld [vmem:[%s323 + $0xf00] sm:$0xff]
        %v900 = vld [vmem:[%s323 + $0xf08] sm:$0xff]
        %v901 = vld [vmem:[%s323 + $0xf10] sm:$0xff]
        %v902 = vld [vmem:[%s323 + $0xf18] sm:$0xff]
        %v903 = vld [vmem:[%s323 + $0xf20] sm:$0xff]
        %v904 = vld [vmem:[%s323 + $0xf28] sm:$0xff]
        %v905 = vld [vmem:[%s323 + $0xf30] sm:$0xff]
        %v906 = vld [vmem:[%s323 + $0xf38] sm:$0xff]
        %v907 = vld [vmem:[%s323 + $0xf40] sm:$0xff]
        %v908 = vld [vmem:[%s323 + $0xf48] sm:$0xff]
        %v909 = vld [vmem:[%s323 + $0xf50] sm:$0xff]
        %v910 = vld [vmem:[%s323 + $0xf58] sm:$0xff]
        %v911 = vld [vmem:[%s323 + $0xf60] sm:$0xff]
        %v912 = vld [vmem:[%s323 + $0xf68] sm:$0xff]
        %v913 = vld [vmem:[%s323 + $0xf70] sm:$0xff]
        %v914 = vld [vmem:[%s323 + $0xf78] sm:$0xff]
        %v915 = vld [vmem:[%s323 + $0xf80] sm:$0xff]
        %v916 = vld [vmem:[%s323 + $0xf88] sm:$0xff]
        %v917 = vld [vmem:[%s323 + $0xf90] sm:$0xff]
        %v918 = vld [vmem:[%s323 + $0xf98] sm:$0xff]
        %v919 = vld [vmem:[%s323 + $0xfa0] sm:$0xff]
        %v920 = vld [vmem:[%s323 + $0xfa8] sm:$0xff]
        %v921 = vld [vmem:[%s323 + $0xfb0] sm:$0xff]
        %v922 = vld [vmem:[%s323 + $0xfb8] sm:$0xff]
        %v923 = vld [vmem:[%s323 + $0xfc0] sm:$0xff]
        %v924 = vld [vmem:[%s323 + $0xfc8] sm:$0xff]
        %v925 = vld [vmem:[%s323 + $0xfd0] sm:$0xff]
        %v926 = vld [vmem:[%s323 + $0xfd8] sm:$0xff]
        %v927 = vld [vmem:[%s323 + $0xfe0] sm:$0xff]
        %v928 = vld [vmem:[%s323 + $0xfe8] sm:$0xff]
        %v929 = vld [vmem:[%s323 + $0xff0] sm:$0xff]
        %v930 = vld [vmem:[%s323 + $0xff8] sm:$0xff]
        %v931 = vld [vmem:[%s323 + $0x1000] sm:$0xff]
        %v932 = vld [vmem:[%s323 + $0x1008] sm:$0xff]
        %v933 = vld [vmem:[%s323 + $0x1010] sm:$0xff]
        %v934 = vld [vmem:[%s323 + $0x1018] sm:$0xff]
        %v935 = vld [vmem:[%s323 + $0x1020] sm:$0xff]
        %v936 = vld [vmem:[%s323 + $0x1028] sm:$0xff]
        %v937 = vld [vmem:[%s323 + $0x1030] sm:$0xff]
        %v938 = vld [vmem:[%s323 + $0x1038] sm:$0xff]
        %v939 = vld [vmem:[%s323 + $0x1040] sm:$0xff]
        %v940 = vld [vmem:[%s323 + $0x1048] sm:$0xff]
        %v941 = vld [vmem:[%s323 + $0x1050] sm:$0xff]
        %v942 = vld [vmem:[%s323 + $0x1058] sm:$0xff]
        %v943 = vld [vmem:[%s323 + $0x1060] sm:$0xff]
        %v944 = vld [vmem:[%s323 + $0x1068] sm:$0xff]
        %v945 = vld [vmem:[%s323 + $0x1070] sm:$0xff]
        %v946 = vld [vmem:[%s323 + $0x1078] sm:$0xff]
        %v947 = vld [vmem:[%s323 + $0x1080] sm:$0xff]
        %v948 = vld [vmem:[%s323 + $0x1088] sm:$0xff]
        %v949 = vld [vmem:[%s323 + $0x1090] sm:$0xff]
        %v950 = vld [vmem:[%s323 + $0x1098] sm:$0xff]
        %v951 = vld [vmem:[%s323 + $0x10a0] sm:$0xff]
        %v952 = vld [vmem:[%s323 + $0x10a8] sm:$0xff]
        %v953 = vld [vmem:[%s323 + $0x10b0] sm:$0xff]
        %v954 = vld [vmem:[%s323 + $0x10b8] sm:$0xff]
        %v955 = vld [vmem:[%s323 + $0x10c0] sm:$0xff]
        %v956 = vld [vmem:[%s323 + $0x10c8] sm:$0xff]
        %v957 = vld [vmem:[%s323 + $0x10d0] sm:$0xff]
        %v958 = vld [vmem:[%s323 + $0x10d8] sm:$0xff]
        %v959 = vld [vmem:[%s323 + $0x10e0] sm:$0xff]
        %v960 = vld [vmem:[%s323 + $0x10e8] sm:$0xff]
        %v961 = vld [vmem:[%s323 + $0x10f0] sm:$0xff]
        %v962 = vld [vmem:[%s323 + $0x10f8] sm:$0xff]
        %v963 = vld [vmem:[%s323 + $0x1100] sm:$0xff]
        %v964 = vld [vmem:[%s323 + $0x1108] sm:$0xff]
        %v965 = vld [vmem:[%s323 + $0x1110] sm:$0xff]
        %v966 = vld [vmem:[%s323 + $0x1118] sm:$0xff]
        %v967 = vld [vmem:[%s323 + $0x1120] sm:$0xff]
        %v968 = vld [vmem:[%s323 + $0x1128] sm:$0xff]
        %v969 = vld [vmem:[%s323 + $0x1130] sm:$0xff]
        %v970 = vld [vmem:[%s323 + $0x1138] sm:$0xff]
        %v971 = vld [vmem:[%s323 + $0x1140] sm:$0xff]
        %v972 = vld [vmem:[%s323 + $0x1148] sm:$0xff]
        %v973 = vld [vmem:[%s323 + $0x1150] sm:$0xff]
        %v974 = vld [vmem:[%s323 + $0x1158] sm:$0xff]
        %v975 = vld [vmem:[%s323 + $0x1160] sm:$0xff]
        %v976 = vld [vmem:[%s323 + $0x1168] sm:$0xff]
        %v977 = vld [vmem:[%s323 + $0x1170] sm:$0xff]
        %v978 = vld [vmem:[%s323 + $0x1178] sm:$0xff]
        %v979 = vld [vmem:[%s323 + $0x1180] sm:$0xff]
        %v980 = vld [vmem:[%s323 + $0x1188] sm:$0xff]
        %v981 = vld [vmem:[%s323 + $0x1190] sm:$0xff]
        %v982 = vld [vmem:[%s323 + $0x1198] sm:$0xff]
        %v983 = vld [vmem:[%s323 + $0x11a0] sm:$0xff]
        %v984 = vld [vmem:[%s323 + $0x11a8] sm:$0xff]
        %v985 = vld [vmem:[%s323 + $0x11b0] sm:$0xff]
        %v986 = vld [vmem:[%s323 + $0x11b8] sm:$0xff]
        %v987 = vld [vmem:[%s323 + $0x11c0] sm:$0xff]
        %v988 = vld [vmem:[%s323 + $0x11c8] sm:$0xff]
        %v989 = vld [vmem:[%s323 + $0x11d0] sm:$0xff]
        %v990 = vld [vmem:[%s323 + $0x11d8] sm:$0xff]
        %v991 = vld [vmem:[%s323 + $0x11e0] sm:$0xff]
        %v992 = vld [vmem:[%s323 + $0x11e8] sm:$0xff]
        %v993 = vld [vmem:[%s323 + $0x11f0] sm:$0xff]
        %v994 = vld [vmem:[%s323 + $0x11f8] sm:$0xff]
        %v995 = vld [vmem:[%s323 + $0x1200] sm:$0xff]
        %v996 = vld [vmem:[%s323 + $0x1208] sm:$0xff]
        %v997 = vld [vmem:[%s323 + $0x1210] sm:$0xff]
        %v998 = vld [vmem:[%s323 + $0x1218] sm:$0xff]
        %v999 = vld [vmem:[%s323 + $0x1220] sm:$0xff]
        %v1000 = vld [vmem:[%s323 + $0x1228] sm:$0xff]
        %v1001 = vld [vmem:[%s323 + $0x1230] sm:$0xff]
        %v1002 = vld [vmem:[%s323 + $0x1238] sm:$0xff]
        %v1003 = vld [vmem:[%s323 + $0x1240] sm:$0xff]
        %v1004 = vld [vmem:[%s323 + $0x1248] sm:$0xff]
        %v1005 = vld [vmem:[%s323 + $0x1250] sm:$0xff]
        %v1006 = vld [vmem:[%s323 + $0x1258] sm:$0xff]
        %v1007 = vld [vmem:[%s323 + $0x1260] sm:$0xff]
        %v1008 = vld [vmem:[%s323 + $0x1268] sm:$0xff]
        %v1009 = vld [vmem:[%s323 + $0x1270] sm:$0xff]
        %v1010 = vld [vmem:[%s323 + $0x1278] sm:$0xff]
        %v1011 = vld [vmem:[%s323 + $0x1280] sm:$0xff]
        %v1012 = vld [vmem:[%s323 + $0x1288] sm:$0xff]
        %v1013 = vld [vmem:[%s323 + $0x1290] sm:$0xff]
        %v1014 = vld [vmem:[%s323 + $0x1298] sm:$0xff]
        %v1015 = vld [vmem:[%s323 + $0x12a0] sm:$0xff]
        %v1016 = vld [vmem:[%s323 + $0x12a8] sm:$0xff]
        %v1017 = vld [vmem:[%s323 + $0x12b0] sm:$0xff]
        %v1018 = vld [vmem:[%s323 + $0x12b8] sm:$0xff]
        %v1019 = vld [vmem:[%s323 + $0x12c0] sm:$0xff]
        %v1020 = vld [vmem:[%s323 + $0x12c8] sm:$0xff]
        %v1021 = vld [vmem:[%s323 + $0x12d0] sm:$0xff]
        %v1022 = vld [vmem:[%s323 + $0x12d8] sm:$0xff]
        %v1023 = vld [vmem:[%s323 + $0x12e0] sm:$0xff]
        %v1024 = vld [vmem:[%s323 + $0x12e8] sm:$0xff]
        %v1025 = vld [vmem:[%s323 + $0x12f0] sm:$0xff]
        %v1026 = vld [vmem:[%s323 + $0x12f8] sm:$0xff]
        %v1027 = vld [vmem:[%s323 + $0x1300] sm:$0xff]
        %v1028 = vld [vmem:[%s323 + $0x1308] sm:$0xff]
        %v1029 = vld [vmem:[%s323 + $0x1310] sm:$0xff]
        %v1030 = vld [vmem:[%s323 + $0x1318] sm:$0xff]
        %v1031 = vld [vmem:[%s323 + $0x1320] sm:$0xff]
        %v1032 = vld [vmem:[%s323 + $0x1328] sm:$0xff]
        %v1033 = vld [vmem:[%s323 + $0x1330] sm:$0xff]
        %v1034 = vld [vmem:[%s323 + $0x1338] sm:$0xff]
        %v1035 = vld [vmem:[%s323 + $0x1340] sm:$0xff]
        %v1036 = vld [vmem:[%s323 + $0x1348] sm:$0xff]
        %v1037 = vld [vmem:[%s323 + $0x1350] sm:$0xff]
        %v1038 = vld [vmem:[%s323 + $0x1358] sm:$0xff]
        %v1039 = vld [vmem:[%s323 + $0x1360] sm:$0xff]
        %v1040 = vld [vmem:[%s323 + $0x1368] sm:$0xff]
        %v1041 = vld [vmem:[%s323 + $0x1370] sm:$0xff]
        %v1042 = vld [vmem:[%s323 + $0x1378] sm:$0xff]
        %v1043 = vld [vmem:[%s323 + $0x1380] sm:$0xff]
        %v1044 = vld [vmem:[%s323 + $0x1388] sm:$0xff]
        %v1045 = vld [vmem:[%s323 + $0x1390] sm:$0xff]
        %v1046 = vld [vmem:[%s323 + $0x1398] sm:$0xff]
        %v1047 = vld [vmem:[%s323 + $0x13a0] sm:$0xff]
        %v1048 = vld [vmem:[%s323 + $0x13a8] sm:$0xff]
        %v1049 = vld [vmem:[%s323 + $0x13b0] sm:$0xff]
        %v1050 = vld [vmem:[%s323 + $0x13b8] sm:$0xff]
        %v1051 = vld [vmem:[%s323 + $0x13c0] sm:$0xff]
        %v1052 = vld [vmem:[%s323 + $0x13c8] sm:$0xff]
        %v1053 = vld [vmem:[%s323 + $0x13d0] sm:$0xff]
        %v1054 = vld [vmem:[%s323 + $0x13d8] sm:$0xff]
        %v1055 = vld [vmem:[%s323 + $0x13e0] sm:$0xff]
        %v1056 = vld [vmem:[%s323 + $0x13e8] sm:$0xff]
        %v1057 = vld [vmem:[%s323 + $0x13f0] sm:$0xff]
        %v1058 = vld [vmem:[%s323 + $0x13f8] sm:$0xff]
        %v1059 = vld [vmem:[%s323 + $0x1400] sm:$0xff]
        %v1060 = vld [vmem:[%s323 + $0x1408] sm:$0xff]
        %v1061 = vld [vmem:[%s323 + $0x1410] sm:$0xff]
        %v1062 = vld [vmem:[%s323 + $0x1418] sm:$0xff]
        %v1063 = vld [vmem:[%s323 + $0x1420] sm:$0xff]
        %v1064 = vld [vmem:[%s323 + $0x1428] sm:$0xff]
        %v1065 = vld [vmem:[%s323 + $0x1430] sm:$0xff]
        %v1066 = vld [vmem:[%s323 + $0x1438] sm:$0xff]
        %v1067 = vld [vmem:[%s323 + $0x1440] sm:$0xff]
        %v1068 = vld [vmem:[%s323 + $0x1448] sm:$0xff]
        %v1069 = vld [vmem:[%s323 + $0x1450] sm:$0xff]
        %v1070 = vld [vmem:[%s323 + $0x1458] sm:$0xff]
        %v1071 = vld [vmem:[%s323 + $0x1460] sm:$0xff]
        %v1072 = vld [vmem:[%s323 + $0x1468] sm:$0xff]
        %v1073 = vld [vmem:[%s323 + $0x1470] sm:$0xff]
        %v1074 = vld [vmem:[%s323 + $0x1478] sm:$0xff]
        %v1075 = vld [vmem:[%s323 + $0x1480] sm:$0xff]
        %v1076 = vld [vmem:[%s323 + $0x1488] sm:$0xff]
        %v1077 = vld [vmem:[%s323 + $0x1490] sm:$0xff]
        %v1078 = vld [vmem:[%s323 + $0x1498] sm:$0xff]
        %v1079 = vld [vmem:[%s323 + $0x14a0] sm:$0xff]
        %v1080 = vld [vmem:[%s323 + $0x14a8] sm:$0xff]
        %v1081 = vld [vmem:[%s323 + $0x14b0] sm:$0xff]
        %v1082 = vld [vmem:[%s323 + $0x14b8] sm:$0xff]
        %v1083 = vld [vmem:[%s323 + $0x14c0] sm:$0xff]
        %v1084 = vld [vmem:[%s323 + $0x14c8] sm:$0xff]
        %v1085 = vld [vmem:[%s323 + $0x14d0] sm:$0xff]
        %v1086 = vld [vmem:[%s323 + $0x14d8] sm:$0xff]
        %v1087 = vld [vmem:[%s323 + $0x14e0] sm:$0xff]
        %v1088 = vld [vmem:[%s323 + $0x14e8] sm:$0xff]
        %v1089 = vld [vmem:[%s323 + $0x14f0] sm:$0xff]
        %v1090 = vld [vmem:[%s323 + $0x14f8] sm:$0xff]
        %v1091 = vld [vmem:[%s323 + $0x1500] sm:$0xff]
        %v1092 = vld [vmem:[%s323 + $0x1508] sm:$0xff]
        %v1093 = vld [vmem:[%s323 + $0x1510] sm:$0xff]
        %v1094 = vld [vmem:[%s323 + $0x1518] sm:$0xff]
        %v1095 = vld [vmem:[%s323 + $0x1520] sm:$0xff]
        %v1096 = vld [vmem:[%s323 + $0x1528] sm:$0xff]
        %v1097 = vld [vmem:[%s323 + $0x1530] sm:$0xff]
        %v1098 = vld [vmem:[%s323 + $0x1538] sm:$0xff]
        %v1099 = vld [vmem:[%s323 + $0x1540] sm:$0xff]
        %v1100 = vld [vmem:[%s323 + $0x1548] sm:$0xff]
        %v1101 = vld [vmem:[%s323 + $0x1550] sm:$0xff]
        %v1102 = vld [vmem:[%s323 + $0x1558] sm:$0xff]
        %v1103 = vld [vmem:[%s323 + $0x1560] sm:$0xff]
        %v1104 = vld [vmem:[%s323 + $0x1568] sm:$0xff]
        %v1105 = vld [vmem:[%s323 + $0x1570] sm:$0xff]
        %v1106 = vld [vmem:[%s323 + $0x1578] sm:$0xff]
        %v1107 = vld [vmem:[%s323 + $0x1580] sm:$0xff]
        %v1108 = vld [vmem:[%s323 + $0x1588] sm:$0xff]
        %v1109 = vld [vmem:[%s323 + $0x1590] sm:$0xff]
        %v1110 = vld [vmem:[%s323 + $0x1598] sm:$0xff]
        %v1111 = vld [vmem:[%s323 + $0x15a0] sm:$0xff]
        %v1112 = vld [vmem:[%s323 + $0x15a8] sm:$0xff]
        %v1113 = vld [vmem:[%s323 + $0x15b0] sm:$0xff]
        %v1114 = vld [vmem:[%s323 + $0x15b8] sm:$0xff]
        %v1115 = vld [vmem:[%s323 + $0x15c0] sm:$0xff]
        %v1116 = vld [vmem:[%s323 + $0x15c8] sm:$0xff]
        %v1117 = vld [vmem:[%s323 + $0x15d0] sm:$0xff]
        %v1118 = vld [vmem:[%s323 + $0x15d8] sm:$0xff]
        %v1119 = vld [vmem:[%s323 + $0x15e0] sm:$0xff]
        %v1120 = vld [vmem:[%s323 + $0x15e8] sm:$0xff]
        %v1121 = vld [vmem:[%s323 + $0x15f0] sm:$0xff]
        %v1122 = vld [vmem:[%s323 + $0x15f8] sm:$0xff]
        %v1123 = vld [vmem:[%s323 + $0x1600] sm:$0xff]
        %v1124 = vld [vmem:[%s323 + $0x1608] sm:$0xff]
        %v1125 = vld [vmem:[%s323 + $0x1610] sm:$0xff]
        %v1126 = vld [vmem:[%s323 + $0x1618] sm:$0xff]
        %v1127 = vld [vmem:[%s323 + $0x1620] sm:$0xff]
        %v1128 = vld [vmem:[%s323 + $0x1628] sm:$0xff]
        %v1129 = vld [vmem:[%s323 + $0x1630] sm:$0xff]
        %v1130 = vld [vmem:[%s323 + $0x1638] sm:$0xff]
        %v1131 = vld [vmem:[%s323 + $0x1640] sm:$0xff]
        %v1132 = vld [vmem:[%s323 + $0x1648] sm:$0xff]
        %v1133 = vld [vmem:[%s323 + $0x1650] sm:$0xff]
        %v1134 = vld [vmem:[%s323 + $0x1658] sm:$0xff]
        %v1135 = vld [vmem:[%s323 + $0x1660] sm:$0xff]
        %v1136 = vld [vmem:[%s323 + $0x1668] sm:$0xff]
        %v1137 = vld [vmem:[%s323 + $0x1670] sm:$0xff]
        %v1138 = vld [vmem:[%s323 + $0x1678] sm:$0xff]
        %v1139 = vld [vmem:[%s323 + $0x1680] sm:$0xff]
        %v1140 = vld [vmem:[%s323 + $0x1688] sm:$0xff]
        %v1141 = vld [vmem:[%s323 + $0x1690] sm:$0xff]
        %v1142 = vld [vmem:[%s323 + $0x1698] sm:$0xff]
        %v1143 = vld [vmem:[%s323 + $0x16a0] sm:$0xff]
        %v1144 = vld [vmem:[%s323 + $0x16a8] sm:$0xff]
        %v1145 = vld [vmem:[%s323 + $0x16b0] sm:$0xff]
        %v1146 = vld [vmem:[%s323 + $0x16b8] sm:$0xff]
        %v1147 = vld [vmem:[%s323 + $0x16c0] sm:$0xff]
        %v1148 = vld [vmem:[%s323 + $0x16c8] sm:$0xff]
        %v1149 = vld [vmem:[%s323 + $0x16d0] sm:$0xff]
        %v1150 = vld [vmem:[%s323 + $0x16d8] sm:$0xff]
        %v1151 = vld [vmem:[%s323 + $0x16e0] sm:$0xff]
        %v1152 = vld [vmem:[%s323 + $0x16e8] sm:$0xff]
        %v1153 = vld [vmem:[%s323 + $0x16f0] sm:$0xff]
        %v1154 = vld [vmem:[%s323 + $0x16f8] sm:$0xff]
        %v1155 = vld [vmem:[%s323 + $0x1700] sm:$0xff]
        %v1156 = vld [vmem:[%s323 + $0x1708] sm:$0xff]
        %v1157 = vld [vmem:[%s323 + $0x1710] sm:$0xff]
        %v1158 = vld [vmem:[%s323 + $0x1718] sm:$0xff]
        %v1159 = vld [vmem:[%s323 + $0x1720] sm:$0xff]
        %v1160 = vld [vmem:[%s323 + $0x1728] sm:$0xff]
        %v1161 = vld [vmem:[%s323 + $0x1730] sm:$0xff]
        %v1162 = vld [vmem:[%s323 + $0x1738] sm:$0xff]
        %v1163 = vld [vmem:[%s323 + $0x1740] sm:$0xff]
        %v1164 = vld [vmem:[%s323 + $0x1748] sm:$0xff]
        %v1165 = vld [vmem:[%s323 + $0x1750] sm:$0xff]
        %v1166 = vld [vmem:[%s323 + $0x1758] sm:$0xff]
        %v1167 = vld [vmem:[%s323 + $0x1760] sm:$0xff]
        %v1168 = vld [vmem:[%s323 + $0x1768] sm:$0xff]
        %v1169 = vld [vmem:[%s323 + $0x1770] sm:$0xff]
        %v1170 = vld [vmem:[%s323 + $0x1778] sm:$0xff]
        %v1171 = vld [vmem:[%s323 + $0x1780] sm:$0xff]
        %v1172 = vld [vmem:[%s323 + $0x1788] sm:$0xff]
        %v1173 = vld [vmem:[%s323 + $0x1790] sm:$0xff]
        %v1174 = vld [vmem:[%s323 + $0x1798] sm:$0xff]
        %v1175 = vld [vmem:[%s323 + $0x17a0] sm:$0xff]
        %v1176 = vld [vmem:[%s323 + $0x17a8] sm:$0xff]
        %v1177 = vld [vmem:[%s323 + $0x17b0] sm:$0xff]
        %v1178 = vld [vmem:[%s323 + $0x17b8] sm:$0xff]
        %v1179 = vld [vmem:[%s323 + $0x17c0] sm:$0xff]
        %v1180 = vld [vmem:[%s323 + $0x17c8] sm:$0xff]
        %v1181 = vld [vmem:[%s323 + $0x17d0] sm:$0xff]
        %v1182 = vld [vmem:[%s323 + $0x17d8] sm:$0xff]
        %v1183 = vld [vmem:[%s323 + $0x17e0] sm:$0xff]
        %v1184 = vld [vmem:[%s323 + $0x17e8] sm:$0xff]
        %v1185 = vld [vmem:[%s323 + $0x17f0] sm:$0xff]
        %v1186 = vld [vmem:[%s323 + $0x17f8] sm:$0xff]
        %v1187 = vld [vmem:[%s323 + $0x1800] sm:$0xff]
        %v1188 = vld [vmem:[%s323 + $0x1808] sm:$0xff]
        %v1189 = vld [vmem:[%s323 + $0x1810] sm:$0xff]
        %v1190 = vld [vmem:[%s323 + $0x1818] sm:$0xff]
        %v1191 = vld [vmem:[%s323 + $0x1820] sm:$0xff]
        %v1192 = vld [vmem:[%s323 + $0x1828] sm:$0xff]
        %v1193 = vld [vmem:[%s323 + $0x1830] sm:$0xff]
        %v1194 = vld [vmem:[%s323 + $0x1838] sm:$0xff]
        %v1195 = vld [vmem:[%s323 + $0x1840] sm:$0xff]
        %v1196 = vld [vmem:[%s323 + $0x1848] sm:$0xff]
        %v1197 = vld [vmem:[%s323 + $0x1850] sm:$0xff]
        %v1198 = vld [vmem:[%s323 + $0x1858] sm:$0xff]
        %v1199 = vld [vmem:[%s323 + $0x1860] sm:$0xff]
        %v1200 = vld [vmem:[%s323 + $0x1868] sm:$0xff]
        %v1201 = vld [vmem:[%s323 + $0x1870] sm:$0xff]
        %v1202 = vld [vmem:[%s323 + $0x1878] sm:$0xff]
        %v1203 = vld [vmem:[%s323 + $0x1880] sm:$0xff]
        %v1204 = vld [vmem:[%s323 + $0x1888] sm:$0xff]
        %v1205 = vld [vmem:[%s323 + $0x1890] sm:$0xff]
        %v1206 = vld [vmem:[%s323 + $0x1898] sm:$0xff]
        %v1207 = vld [vmem:[%s323 + $0x18a0] sm:$0xff]
        %v1208 = vld [vmem:[%s323 + $0x18a8] sm:$0xff]
        %v1209 = vld [vmem:[%s323 + $0x18b0] sm:$0xff]
        %v1210 = vld [vmem:[%s323 + $0x18b8] sm:$0xff]
        %v1211 = vld [vmem:[%s323 + $0x18c0] sm:$0xff]
        %v1212 = vld [vmem:[%s323 + $0x18c8] sm:$0xff]
        %v1213 = vld [vmem:[%s323 + $0x18d0] sm:$0xff]
        %v1214 = vld [vmem:[%s323 + $0x18d8] sm:$0xff]
        %v1215 = vld [vmem:[%s323 + $0x18e0] sm:$0xff]
        %v1216 = vld [vmem:[%s323 + $0x18e8] sm:$0xff]
        %v1217 = vld [vmem:[%s323 + $0x18f0] sm:$0xff]
        %v1218 = vld [vmem:[%s323 + $0x18f8] sm:$0xff]
        %v1219 = vld [vmem:[%s323 + $0x1900] sm:$0xff]
        %v1220 = vld [vmem:[%s323 + $0x1908] sm:$0xff]
        %v1221 = vld [vmem:[%s323 + $0x1910] sm:$0xff]
        %v1222 = vld [vmem:[%s323 + $0x1918] sm:$0xff]
        %v1223 = vld [vmem:[%s323 + $0x1920] sm:$0xff]
        %v1224 = vld [vmem:[%s323 + $0x1928] sm:$0xff]
        %v1225 = vld [vmem:[%s323 + $0x1930] sm:$0xff]
        %v1226 = vld [vmem:[%s323 + $0x1938] sm:$0xff]
        %v1227 = vld [vmem:[%s323 + $0x1940] sm:$0xff]
        %v1228 = vld [vmem:[%s323 + $0x1948] sm:$0xff]
        %v1229 = vld [vmem:[%s323 + $0x1950] sm:$0xff]
        %v1230 = vld [vmem:[%s323 + $0x1958] sm:$0xff]
        %v1231 = vld [vmem:[%s323 + $0x1960] sm:$0xff]
        %v1232 = vld [vmem:[%s323 + $0x1968] sm:$0xff]
        %v1233 = vld [vmem:[%s323 + $0x1970] sm:$0xff]
        %v1234 = vld [vmem:[%s323 + $0x1978] sm:$0xff]
        %v1235 = vld [vmem:[%s323 + $0x1980] sm:$0xff]
        %v1236 = vld [vmem:[%s323 + $0x1988] sm:$0xff]
        %v1237 = vld [vmem:[%s323 + $0x1990] sm:$0xff]
        %v1238 = vld [vmem:[%s323 + $0x1998] sm:$0xff]
        %v1239 = vld [vmem:[%s323 + $0x19a0] sm:$0xff]
        %v1240 = vld [vmem:[%s323 + $0x19a8] sm:$0xff]
        %v1241 = vld [vmem:[%s323 + $0x19b0] sm:$0xff]
        %v1242 = vld [vmem:[%s323 + $0x19b8] sm:$0xff]
        %v1243 = vld [vmem:[%s323 + $0x19c0] sm:$0xff]
        %v1244 = vld [vmem:[%s323 + $0x19c8] sm:$0xff]
        %v1245 = vld [vmem:[%s323 + $0x19d0] sm:$0xff]
        %v1246 = vld [vmem:[%s323 + $0x19d8] sm:$0xff]
        %v1247 = vld [vmem:[%s323 + $0x19e0] sm:$0xff]
        %v1248 = vld [vmem:[%s323 + $0x19e8] sm:$0xff]
        %v1249 = vld [vmem:[%s323 + $0x19f0] sm:$0xff]
        %v1250 = vld [vmem:[%s323 + $0x19f8] sm:$0xff]
        %v1251 = vld [vmem:[%s323 + $0x1a00] sm:$0xff]
        %v1252 = vld [vmem:[%s323 + $0x1a08] sm:$0xff]
        %v1253 = vld [vmem:[%s323 + $0x1a10] sm:$0xff]
        %v1254 = vld [vmem:[%s323 + $0x1a18] sm:$0xff]
        %v1255 = vld [vmem:[%s323 + $0x1a20] sm:$0xff]
        %v1256 = vld [vmem:[%s323 + $0x1a28] sm:$0xff]
        %v1257 = vld [vmem:[%s323 + $0x1a30] sm:$0xff]
        %v1258 = vld [vmem:[%s323 + $0x1a38] sm:$0xff]
        %v1259 = vld [vmem:[%s323 + $0x1a40] sm:$0xff]
        %v1260 = vld [vmem:[%s323 + $0x1a48] sm:$0xff]
        %v1261 = vld [vmem:[%s323 + $0x1a50] sm:$0xff]
        %v1262 = vld [vmem:[%s323 + $0x1a58] sm:$0xff]
        %v1263 = vld [vmem:[%s323 + $0x1a60] sm:$0xff]
        %v1264 = vld [vmem:[%s323 + $0x1a68] sm:$0xff]
        %v1265 = vld [vmem:[%s323 + $0x1a70] sm:$0xff]
        %v1266 = vld [vmem:[%s323 + $0x1a78] sm:$0xff]
        %v1267 = vld [vmem:[%s323 + $0x1a80] sm:$0xff]
        %v1268 = vld [vmem:[%s323 + $0x1a88] sm:$0xff]
        %v1269 = vld [vmem:[%s323 + $0x1a90] sm:$0xff]
        %v1270 = vld [vmem:[%s323 + $0x1a98] sm:$0xff]
        %v1271 = vld [vmem:[%s323 + $0x1aa0] sm:$0xff]
        %v1272 = vld [vmem:[%s323 + $0x1aa8] sm:$0xff]
        %v1273 = vld [vmem:[%s323 + $0x1ab0] sm:$0xff]
        %v1274 = vld [vmem:[%s323 + $0x1ab8] sm:$0xff]
        %v1275 = vld [vmem:[%s323 + $0x1ac0] sm:$0xff]
        %v1276 = vld [vmem:[%s323 + $0x1ac8] sm:$0xff]
        %v1277 = vld [vmem:[%s323 + $0x1ad0] sm:$0xff]
        %v1278 = vld [vmem:[%s323 + $0x1ad8] sm:$0xff]
        %v1279 = vld [vmem:[%s323 + $0x1ae0] sm:$0xff]
        %v1280 = vld [vmem:[%s323 + $0x1ae8] sm:$0xff]
        %v1281 = vld [vmem:[%s323 + $0x1af0] sm:$0xff]
        %v1282 = vld [vmem:[%s323 + $0x1af8] sm:$0xff]
        %v1283 = vld [vmem:[%s323 + $0x1b00] sm:$0xff]
        %v1284 = vld [vmem:[%s323 + $0x1b08] sm:$0xff]
        %v1285 = vld [vmem:[%s323 + $0x1b10] sm:$0xff]
        %v1286 = vld [vmem:[%s323 + $0x1b18] sm:$0xff]
        %v1287 = vld [vmem:[%s323 + $0x1b20] sm:$0xff]
        %v1288 = vld [vmem:[%s323 + $0x1b28] sm:$0xff]
        %v1289 = vld [vmem:[%s323 + $0x1b30] sm:$0xff]
        %v1290 = vld [vmem:[%s323 + $0x1b38] sm:$0xff]
        %v1291 = vld [vmem:[%s323 + $0x1b40] sm:$0xff]
        %v1292 = vld [vmem:[%s323 + $0x1b48] sm:$0xff]
        %v1293 = vld [vmem:[%s323 + $0x1b50] sm:$0xff]
        %v1294 = vld [vmem:[%s323 + $0x1b58] sm:$0xff]
        %v1295 = vld [vmem:[%s323 + $0x1b60] sm:$0xff]
        %v1296 = vld [vmem:[%s323 + $0x1b68] sm:$0xff]
        %v1297 = vld [vmem:[%s323 + $0x1b70] sm:$0xff]
        %v1298 = vld [vmem:[%s323 + $0x1b78] sm:$0xff]
        %v1299 = vld [vmem:[%s323 + $0x1b80] sm:$0xff]
        %v1300 = vld [vmem:[%s323 + $0x1b88] sm:$0xff]
        %v1301 = vld [vmem:[%s323 + $0x1b90] sm:$0xff]
        %v1302 = vld [vmem:[%s323 + $0x1b98] sm:$0xff]
        %v1303 = vld [vmem:[%s323 + $0x1ba0] sm:$0xff]
        %v1304 = vld [vmem:[%s323 + $0x1ba8] sm:$0xff]
        %v1305 = vld [vmem:[%s323 + $0x1bb0] sm:$0xff]
        %v1306 = vld [vmem:[%s323 + $0x1bb8] sm:$0xff]
        %v1307 = vld [vmem:[%s323 + $0x1bc0] sm:$0xff]
        %v1308 = vld [vmem:[%s323 + $0x1bc8] sm:$0xff]
        %v1309 = vld [vmem:[%s323 + $0x1bd0] sm:$0xff]
        %v1310 = vld [vmem:[%s323 + $0x1bd8] sm:$0xff]
        %v1311 = vld [vmem:[%s323 + $0x1be0] sm:$0xff]
        %v1312 = vld [vmem:[%s323 + $0x1be8] sm:$0xff]
        %v1313 = vld [vmem:[%s323 + $0x1bf0] sm:$0xff]
        %v1314 = vld [vmem:[%s323 + $0x1bf8] sm:$0xff]
        %v1315 = vld [vmem:[%s323 + $0x1c00] sm:$0xff]
        %v1316 = vld [vmem:[%s323 + $0x1c08] sm:$0xff]
        %v1317 = vld [vmem:[%s323 + $0x1c10] sm:$0xff]
        %v1318 = vld [vmem:[%s323 + $0x1c18] sm:$0xff]
        %v1319 = vld [vmem:[%s323 + $0x1c20] sm:$0xff]
        %v1320 = vld [vmem:[%s323 + $0x1c28] sm:$0xff]
        %v1321 = vld [vmem:[%s323 + $0x1c30] sm:$0xff]
        %v1322 = vld [vmem:[%s323 + $0x1c38] sm:$0xff]
        %v1323 = vld [vmem:[%s323 + $0x1c40] sm:$0xff]
        %v1324 = vld [vmem:[%s323 + $0x1c48] sm:$0xff]
        %v1325 = vld [vmem:[%s323 + $0x1c50] sm:$0xff]
        %v1326 = vld [vmem:[%s323 + $0x1c58] sm:$0xff]
        %v1327 = vld [vmem:[%s323 + $0x1c60] sm:$0xff]
        %v1328 = vld [vmem:[%s323 + $0x1c68] sm:$0xff]
        %v1329 = vld [vmem:[%s323 + $0x1c70] sm:$0xff]
        %v1330 = vld [vmem:[%s323 + $0x1c78] sm:$0xff]
        %v1331 = vld [vmem:[%s323 + $0x1c80] sm:$0xff]
        %v1332 = vld [vmem:[%s323 + $0x1c88] sm:$0xff]
        %v1333 = vld [vmem:[%s323 + $0x1c90] sm:$0xff]
        %v1334 = vld [vmem:[%s323 + $0x1c98] sm:$0xff]
        %v1335 = vld [vmem:[%s323 + $0x1ca0] sm:$0xff]
        %v1336 = vld [vmem:[%s323 + $0x1ca8] sm:$0xff]
        %v1337 = vld [vmem:[%s323 + $0x1cb0] sm:$0xff]
        %v1338 = vld [vmem:[%s323 + $0x1cb8] sm:$0xff]
        %v1339 = vld [vmem:[%s323 + $0x1cc0] sm:$0xff]
        %v1340 = vld [vmem:[%s323 + $0x1cc8] sm:$0xff]
        %v1341 = vld [vmem:[%s323 + $0x1cd0] sm:$0xff]
        %v1342 = vld [vmem:[%s323 + $0x1cd8] sm:$0xff]
        %v1343 = vld [vmem:[%s323 + $0x1ce0] sm:$0xff]
        %v1344 = vld [vmem:[%s323 + $0x1ce8] sm:$0xff]
        %v1345 = vld [vmem:[%s323 + $0x1cf0] sm:$0xff]
        %v1346 = vld [vmem:[%s323 + $0x1cf8] sm:$0xff]
        %v1347 = vld [vmem:[%s323 + $0x1d00] sm:$0xff]
        %v1348 = vld [vmem:[%s323 + $0x1d08] sm:$0xff]
        %v1349 = vld [vmem:[%s323 + $0x1d10] sm:$0xff]
        %v1350 = vld [vmem:[%s323 + $0x1d18] sm:$0xff]
        %v1351 = vld [vmem:[%s323 + $0x1d20] sm:$0xff]
        %v1352 = vld [vmem:[%s323 + $0x1d28] sm:$0xff]
        %v1353 = vld [vmem:[%s323 + $0x1d30] sm:$0xff]
        %v1354 = vld [vmem:[%s323 + $0x1d38] sm:$0xff]
        %v1355 = vld [vmem:[%s323 + $0x1d40] sm:$0xff]
        %v1356 = vld [vmem:[%s323 + $0x1d48] sm:$0xff]
        %v1357 = vld [vmem:[%s323 + $0x1d50] sm:$0xff]
        %v1358 = vld [vmem:[%s323 + $0x1d58] sm:$0xff]
        %v1359 = vld [vmem:[%s323 + $0x1d60] sm:$0xff]
        %v1360 = vld [vmem:[%s323 + $0x1d68] sm:$0xff]
        %v1361 = vld [vmem:[%s323 + $0x1d70] sm:$0xff]
        %v1362 = vld [vmem:[%s323 + $0x1d78] sm:$0xff]
        %v1363 = vld [vmem:[%s323 + $0x1d80] sm:$0xff]
        %v1364 = vld [vmem:[%s323 + $0x1d88] sm:$0xff]
        %v1365 = vld [vmem:[%s323 + $0x1d90] sm:$0xff]
        %v1366 = vld [vmem:[%s323 + $0x1d98] sm:$0xff]
        %v1367 = vld [vmem:[%s323 + $0x1da0] sm:$0xff]
        %v1368 = vld [vmem:[%s323 + $0x1da8] sm:$0xff]
        %v1369 = vld [vmem:[%s323 + $0x1db0] sm:$0xff]
        %v1370 = vld [vmem:[%s323 + $0x1db8] sm:$0xff]
        %v1371 = vld [vmem:[%s323 + $0x1dc0] sm:$0xff]
        %v1372 = vld [vmem:[%s323 + $0x1dc8] sm:$0xff]
        %v1373 = vld [vmem:[%s323 + $0x1dd0] sm:$0xff]
        %v1374 = vld [vmem:[%s323 + $0x1dd8] sm:$0xff]
        %v1375 = vld [vmem:[%s323 + $0x1de0] sm:$0xff]
        %v1376 = vld [vmem:[%s323 + $0x1de8] sm:$0xff]
        %v1377 = vld [vmem:[%s323 + $0x1df0] sm:$0xff]
        %v1378 = vld [vmem:[%s323 + $0x1df8] sm:$0xff]
        %v1379 = vld [vmem:[%s323 + $0x1e00] sm:$0xff]
        %v1380 = vld [vmem:[%s323 + $0x1e08] sm:$0xff]
        %v1381 = vld [vmem:[%s323 + $0x1e10] sm:$0xff]
        %v1382 = vld [vmem:[%s323 + $0x1e18] sm:$0xff]
        %v1383 = vld [vmem:[%s323 + $0x1e20] sm:$0xff]
        %v1384 = vld [vmem:[%s323 + $0x1e28] sm:$0xff]
        %v1385 = vld [vmem:[%s323 + $0x1e30] sm:$0xff]
        %v1386 = vld [vmem:[%s323 + $0x1e38] sm:$0xff]
        %v1387 = vld [vmem:[%s323 + $0x1e40] sm:$0xff]
        %v1388 = vld [vmem:[%s323 + $0x1e48] sm:$0xff]
        %v1389 = vld [vmem:[%s323 + $0x1e50] sm:$0xff]
        %v1390 = vld [vmem:[%s323 + $0x1e58] sm:$0xff]
        %v1391 = vld [vmem:[%s323 + $0x1e60] sm:$0xff]
        %v1392 = vld [vmem:[%s323 + $0x1e68] sm:$0xff]
        %v1393 = vld [vmem:[%s323 + $0x1e70] sm:$0xff]
        %v1394 = vld [vmem:[%s323 + $0x1e78] sm:$0xff]
        %v1395 = vld [vmem:[%s323 + $0x1e80] sm:$0xff]
        %v1396 = vld [vmem:[%s323 + $0x1e88] sm:$0xff]
        %v1397 = vld [vmem:[%s323 + $0x1e90] sm:$0xff]
        %v1398 = vld [vmem:[%s323 + $0x1e98] sm:$0xff]
        %v1399 = vld [vmem:[%s323 + $0x1ea0] sm:$0xff]
        %v1400 = vld [vmem:[%s323 + $0x1ea8] sm:$0xff]
        %v1401 = vld [vmem:[%s323 + $0x1eb0] sm:$0xff]
        %v1402 = vld [vmem:[%s323 + $0x1eb8] sm:$0xff]
        %v1403 = vld [vmem:[%s323 + $0x1ec0] sm:$0xff]
        %v1404 = vld [vmem:[%s323 + $0x1ec8] sm:$0xff]
        %v1405 = vld [vmem:[%s323 + $0x1ed0] sm:$0xff]
        %v1406 = vld [vmem:[%s323 + $0x1ed8] sm:$0xff]
        %v1407 = vld [vmem:[%s323 + $0x1ee0] sm:$0xff]
        %v1408 = vld [vmem:[%s323 + $0x1ee8] sm:$0xff]
        %v1409 = vld [vmem:[%s323 + $0x1ef0] sm:$0xff]
        %v1410 = vld [vmem:[%s323 + $0x1ef8] sm:$0xff]
        %v1411 = vld [vmem:[%s323 + $0x1f00] sm:$0xff]
        %v1412 = vld [vmem:[%s323 + $0x1f08] sm:$0xff]
        %v1413 = vld [vmem:[%s323 + $0x1f10] sm:$0xff]
        %v1414 = vld [vmem:[%s323 + $0x1f18] sm:$0xff]
        %v1415 = vld [vmem:[%s323 + $0x1f20] sm:$0xff]
        %v1416 = vld [vmem:[%s323 + $0x1f28] sm:$0xff]
        %v1417 = vld [vmem:[%s323 + $0x1f30] sm:$0xff]
        %v1418 = vld [vmem:[%s323 + $0x1f38] sm:$0xff]
        %v1419 = vld [vmem:[%s323 + $0x1f40] sm:$0xff]
        %v1420 = vld [vmem:[%s323 + $0x1f48] sm:$0xff]
        %v1421 = vld [vmem:[%s323 + $0x1f50] sm:$0xff]
        %v1422 = vld [vmem:[%s323 + $0x1f58] sm:$0xff]
        %v1423 = vld [vmem:[%s323 + $0x1f60] sm:$0xff]
        %v1424 = vld [vmem:[%s323 + $0x1f68] sm:$0xff]
        %v1425 = vld [vmem:[%s323 + $0x1f70] sm:$0xff]
        %v1426 = vld [vmem:[%s323 + $0x1f78] sm:$0xff]
        %v1427 = vld [vmem:[%s323 + $0x1f80] sm:$0xff]
        %v1428 = vld [vmem:[%s323 + $0x1f88] sm:$0xff]
        %v1429 = vld [vmem:[%s323 + $0x1f90] sm:$0xff]
        %v1430 = vld [vmem:[%s323 + $0x1f98] sm:$0xff]
        %v1431 = vld [vmem:[%s323 + $0x1fa0] sm:$0xff]
        %v1432 = vld [vmem:[%s323 + $0x1fa8] sm:$0xff]
        %v1433 = vld [vmem:[%s323 + $0x1fb0] sm:$0xff]
        %v1434 = vld [vmem:[%s323 + $0x1fb8] sm:$0xff]
        %v1435 = vld [vmem:[%s323 + $0x1fc0] sm:$0xff]
        %v1436 = vld [vmem:[%s323 + $0x1fc8] sm:$0xff]
        %v1437 = vld [vmem:[%s323 + $0x1fd0] sm:$0xff]
        %v1438 = vld [vmem:[%s323 + $0x1fd8] sm:$0xff]
        %v1439 = vld [vmem:[%s323 + $0x1fe0] sm:$0xff]
        %v1440 = vld [vmem:[%s323 + $0x1fe8] sm:$0xff]
        %v1441 = vld [vmem:[%s323 + $0x1ff0] sm:$0xff]
        %v1442 = vld [vmem:[%s323 + $0x1ff8] sm:$0xff]
        %v1443 = vld [vmem:[%s323 + $0x2000] sm:$0xff]
        %v1444 = vld [vmem:[%s323 + $0x2008] sm:$0xff]
        %v1445 = vld [vmem:[%s323 + $0x2010] sm:$0xff]
        %v1446 = vld [vmem:[%s323 + $0x2018] sm:$0xff]
        %v1447 = vld [vmem:[%s323 + $0x2020] sm:$0xff]
        %v1448 = vld [vmem:[%s323 + $0x2028] sm:$0xff]
        %v1449 = vld [vmem:[%s323 + $0x2030] sm:$0xff]
        %v1450 = vld [vmem:[%s323 + $0x2038] sm:$0xff]
        %v1451 = vld [vmem:[%s323 + $0x2040] sm:$0xff]
        %v1452 = vld [vmem:[%s323 + $0x2048] sm:$0xff]
        %v1453 = vld [vmem:[%s323 + $0x2050] sm:$0xff]
        %v1454 = vld [vmem:[%s323 + $0x2058] sm:$0xff]
        %v1455 = vld [vmem:[%s323 + $0x2060] sm:$0xff]
        %v1456 = vld [vmem:[%s323 + $0x2068] sm:$0xff]
        %v1457 = vld [vmem:[%s323 + $0x2070] sm:$0xff]
        %v1458 = vld [vmem:[%s323 + $0x2078] sm:$0xff]
        %v1459 = vld [vmem:[%s323 + $0x2080] sm:$0xff]
        %v1460 = vld [vmem:[%s323 + $0x2088] sm:$0xff]
        %v1461 = vld [vmem:[%s323 + $0x2090] sm:$0xff]
        %v1462 = vld [vmem:[%s323 + $0x2098] sm:$0xff]
        %v1463 = vld [vmem:[%s323 + $0x20a0] sm:$0xff]
        %v1464 = vld [vmem:[%s323 + $0x20a8] sm:$0xff]
        %v1465 = vld [vmem:[%s323 + $0x20b0] sm:$0xff]
        %v1466 = vld [vmem:[%s323 + $0x20b8] sm:$0xff]
        %v1467 = vld [vmem:[%s323 + $0x20c0] sm:$0xff]
        %v1468 = vld [vmem:[%s323 + $0x20c8] sm:$0xff]
        %v1469 = vld [vmem:[%s323 + $0x20d0] sm:$0xff]
        %v1470 = vld [vmem:[%s323 + $0x20d8] sm:$0xff]
        %v1471 = vld [vmem:[%s323 + $0x20e0] sm:$0xff]
        %v1472 = vld [vmem:[%s323 + $0x20e8] sm:$0xff]
        %v1473 = vld [vmem:[%s323 + $0x20f0] sm:$0xff]
        %v1474 = vld [vmem:[%s323 + $0x20f8] sm:$0xff]
        %v1475 = vld [vmem:[%s323 + $0x2100] sm:$0xff]
        %v1476 = vld [vmem:[%s323 + $0x2108] sm:$0xff]
        %v1477 = vld [vmem:[%s323 + $0x2110] sm:$0xff]
        %v1478 = vld [vmem:[%s323 + $0x2118] sm:$0xff]
        %v1479 = vld [vmem:[%s323 + $0x2120] sm:$0xff]
        %v1480 = vld [vmem:[%s323 + $0x2128] sm:$0xff]
        %v1481 = vld [vmem:[%s323 + $0x2130] sm:$0xff]
        %v1482 = vld [vmem:[%s323 + $0x2138] sm:$0xff]
        %v1483 = vld [vmem:[%s323 + $0x2140] sm:$0xff]
        %v1484 = vld [vmem:[%s323 + $0x2148] sm:$0xff]
        %v1485 = vld [vmem:[%s323 + $0x2150] sm:$0xff]
        %v1486 = vld [vmem:[%s323 + $0x2158] sm:$0xff]
        %v1487 = vld [vmem:[%s323 + $0x2160] sm:$0xff]
        %v1488 = vld [vmem:[%s323 + $0x2168] sm:$0xff]
        %v1489 = vld [vmem:[%s323 + $0x2170] sm:$0xff]
        %v1490 = vld [vmem:[%s323 + $0x2178] sm:$0xff]
        %v1491 = vld [vmem:[%s323 + $0x2180] sm:$0xff]
        %v1492 = vld [vmem:[%s323 + $0x2188] sm:$0xff]
        %v1493 = vld [vmem:[%s323 + $0x2190] sm:$0xff]
        %v1494 = vld [vmem:[%s323 + $0x2198] sm:$0xff]
        %v1495 = vld [vmem:[%s323 + $0x21a0] sm:$0xff]
        %v1496 = vld [vmem:[%s323 + $0x21a8] sm:$0xff]
        %v1497 = vld [vmem:[%s323 + $0x21b0] sm:$0xff]
        %v1498 = vld [vmem:[%s323 + $0x21b8] sm:$0xff]
        %v1499 = vld [vmem:[%s323 + $0x21c0] sm:$0xff]
        %v1500 = vld [vmem:[%s323 + $0x21c8] sm:$0xff]
        %v1501 = vld [vmem:[%s323 + $0x21d0] sm:$0xff]
        %v1502 = vld [vmem:[%s323 + $0x21d8] sm:$0xff]
        %v1503 = vld [vmem:[%s323 + $0x21e0] sm:$0xff]
        %v1504 = vld [vmem:[%s323 + $0x21e8] sm:$0xff]
        %v1505 = vld [vmem:[%s323 + $0x21f0] sm:$0xff]
        %v1506 = vld [vmem:[%s323 + $0x21f8] sm:$0xff]
        %v1507 = vld [vmem:[%s323 + $0x2200] sm:$0xff]
        %v1508 = vld [vmem:[%s323 + $0x2208] sm:$0xff]
        %v1509 = vld [vmem:[%s323 + $0x2210] sm:$0xff]
        %v1510 = vld [vmem:[%s323 + $0x2218] sm:$0xff]
        %v1511 = vld [vmem:[%s323 + $0x2220] sm:$0xff]
        %v1512 = vld [vmem:[%s323 + $0x2228] sm:$0xff]
        %v1513 = vld [vmem:[%s323 + $0x2230] sm:$0xff]
        %v1514 = vld [vmem:[%s323 + $0x2238] sm:$0xff]
        %v1515 = vld [vmem:[%s323 + $0x2240] sm:$0xff]
        %v1516 = vld [vmem:[%s323 + $0x2248] sm:$0xff]
        %v1517 = vld [vmem:[%s323 + $0x2250] sm:$0xff]
        %v1518 = vld [vmem:[%s323 + $0x2258] sm:$0xff]
        %v1519 = vld [vmem:[%s323 + $0x2260] sm:$0xff]
        %v1520 = vld [vmem:[%s323 + $0x2268] sm:$0xff]
        %v1521 = vld [vmem:[%s323 + $0x2270] sm:$0xff]
        %v1522 = vld [vmem:[%s323 + $0x2278] sm:$0xff]
        %v1523 = vld [vmem:[%s323 + $0x2280] sm:$0xff]
        %v1524 = vld [vmem:[%s323 + $0x2288] sm:$0xff]
        %v1525 = vld [vmem:[%s323 + $0x2290] sm:$0xff]
        %v1526 = vld [vmem:[%s323 + $0x2298] sm:$0xff]
        %v1527 = vld [vmem:[%s323 + $0x22a0] sm:$0xff]
        %v1528 = vld [vmem:[%s323 + $0x22a8] sm:$0xff]
        %v1529 = vld [vmem:[%s323 + $0x22b0] sm:$0xff]
        %v1530 = vld [vmem:[%s323 + $0x22b8] sm:$0xff]
        %v1531 = vld [vmem:[%s323 + $0x22c0] sm:$0xff]
        %v1532 = vld [vmem:[%s323 + $0x22c8] sm:$0xff]
        %v1533 = vld [vmem:[%s323 + $0x22d0] sm:$0xff]
        %v1534 = vld [vmem:[%s323 + $0x22d8] sm:$0xff]
        %v1535 = vld [vmem:[%s323 + $0x22e0] sm:$0xff]
        %v1536 = vld [vmem:[%s323 + $0x22e8] sm:$0xff]
        %v1537 = vld [vmem:[%s323 + $0x22f0] sm:$0xff]
        %v1538 = vld [vmem:[%s323 + $0x22f8] sm:$0xff]
        %v1539 = vld [vmem:[%s323 + $0x2300] sm:$0xff]
        %v1540 = vld [vmem:[%s323 + $0x2308] sm:$0xff]
        %v1541 = vld [vmem:[%s323 + $0x2310] sm:$0xff]
        %v1542 = vld [vmem:[%s323 + $0x2318] sm:$0xff]
        %v1543 = vld [vmem:[%s323 + $0x2320] sm:$0xff]
        %v1544 = vld [vmem:[%s323 + $0x2328] sm:$0xff]
        %v1545 = vld [vmem:[%s323 + $0x2330] sm:$0xff]
        %v1546 = vld [vmem:[%s323 + $0x2338] sm:$0xff]
        %v1547 = vld [vmem:[%s323 + $0x2340] sm:$0xff]
        %v1548 = vld [vmem:[%s323 + $0x2348] sm:$0xff]
        %v1549 = vld [vmem:[%s323 + $0x2350] sm:$0xff]
        %v1550 = vld [vmem:[%s323 + $0x2358] sm:$0xff]
        %v1551 = vld [vmem:[%s323 + $0x2360] sm:$0xff]
        %v1552 = vld [vmem:[%s323 + $0x2368] sm:$0xff]
        %v1553 = vld [vmem:[%s323 + $0x2370] sm:$0xff]
        %v1554 = vld [vmem:[%s323 + $0x2378] sm:$0xff]
        %v1555 = vld [vmem:[%s323 + $0x2380] sm:$0xff]
        %v1556 = vld [vmem:[%s323 + $0x2388] sm:$0xff]
        %v1557 = vld [vmem:[%s323 + $0x2390] sm:$0xff]
        %v1558 = vld [vmem:[%s323 + $0x2398] sm:$0xff]
        %v1559 = vld [vmem:[%s323 + $0x23a0] sm:$0xff]
        %v1560 = vld [vmem:[%s323 + $0x23a8] sm:$0xff]
        %v1561 = vld [vmem:[%s323 + $0x23b0] sm:$0xff]
        %v1562 = vld [vmem:[%s323 + $0x23b8] sm:$0xff]
        %v1563 = vld [vmem:[%s323 + $0x23c0] sm:$0xff]
        %v1564 = vld [vmem:[%s323 + $0x23c8] sm:$0xff]
        %v1565 = vld [vmem:[%s323 + $0x23d0] sm:$0xff]
        %v1566 = vld [vmem:[%s323 + $0x23d8] sm:$0xff]
        %v1567 = vld [vmem:[%s323 + $0x23e0] sm:$0xff]
        %v1568 = vld [vmem:[%s323 + $0x23e8] sm:$0xff]
        %v1569 = vld [vmem:[%s323 + $0x23f0] sm:$0xff]
        %v1570 = vld [vmem:[%s323 + $0x23f8] sm:$0xff]
        %v1571 = vld [vmem:[%s323 + $0x2400] sm:$0xff]
        %v1572 = vld [vmem:[%s323 + $0x2408] sm:$0xff]
        %v1573 = vld [vmem:[%s323 + $0x2410] sm:$0xff]
        %v1574 = vld [vmem:[%s323 + $0x2418] sm:$0xff]
        %v1575 = vld [vmem:[%s323 + $0x2420] sm:$0xff]
        %v1576 = vld [vmem:[%s323 + $0x2428] sm:$0xff]
        %v1577 = vld [vmem:[%s323 + $0x2430] sm:$0xff]
        %v1578 = vld [vmem:[%s323 + $0x2438] sm:$0xff]
        %v1579 = vld [vmem:[%s323 + $0x2440] sm:$0xff]
        %v1580 = vld [vmem:[%s323 + $0x2448] sm:$0xff]
        %v1581 = vld [vmem:[%s323 + $0x2450] sm:$0xff]
        %v1582 = vld [vmem:[%s323 + $0x2458] sm:$0xff]
        %v1583 = vld [vmem:[%s323 + $0x2460] sm:$0xff]
        %v1584 = vld [vmem:[%s323 + $0x2468] sm:$0xff]
        %v1585 = vld [vmem:[%s323 + $0x2470] sm:$0xff]
        %v1586 = vld [vmem:[%s323 + $0x2478] sm:$0xff]
        %v1587 = vld [vmem:[%s323 + $0x2480] sm:$0xff]
        %v1588 = vld [vmem:[%s323 + $0x2488] sm:$0xff]
        %v1589 = vld [vmem:[%s323 + $0x2490] sm:$0xff]
        %v1590 = vld [vmem:[%s323 + $0x2498] sm:$0xff]
        %v1591 = vld [vmem:[%s323 + $0x24a0] sm:$0xff]
        %v1592 = vld [vmem:[%s323 + $0x24a8] sm:$0xff]
        %v1593 = vld [vmem:[%s323 + $0x24b0] sm:$0xff]
        %v1594 = vld [vmem:[%s323 + $0x24b8] sm:$0xff]
        %v1595 = vld [vmem:[%s323 + $0x24c0] sm:$0xff]
        %v1596 = vld [vmem:[%s323 + $0x24c8] sm:$0xff]
        %v1597 = vld [vmem:[%s323 + $0x24d0] sm:$0xff]
        %v1598 = vld [vmem:[%s323 + $0x24d8] sm:$0xff]
        %v1599 = vld [vmem:[%s323 + $0x24e0] sm:$0xff]
        %v1600 = vld [vmem:[%s323 + $0x24e8] sm:$0xff]
        %v1601 = vld [vmem:[%s323 + $0x24f0] sm:$0xff]
        %v1602 = vld [vmem:[%s323 + $0x24f8] sm:$0xff]
        %v1603 = vld [vmem:[%s323 + $0x2500] sm:$0xff]
        %v1604 = vld [vmem:[%s323 + $0x2508] sm:$0xff]
        %v1605 = vld [vmem:[%s323 + $0x2510] sm:$0xff]
        %v1606 = vld [vmem:[%s323 + $0x2518] sm:$0xff]
        %v1607 = vld [vmem:[%s323 + $0x2520] sm:$0xff]
        %v1608 = vld [vmem:[%s323 + $0x2528] sm:$0xff]
        %v1609 = vld [vmem:[%s323 + $0x2530] sm:$0xff]
        %v1610 = vld [vmem:[%s323 + $0x2538] sm:$0xff]
        %v1611 = vld [vmem:[%s323 + $0x2540] sm:$0xff]
        %v1612 = vld [vmem:[%s323 + $0x2548] sm:$0xff]
        %v1613 = vld [vmem:[%s323 + $0x2550] sm:$0xff]
        %v1614 = vld [vmem:[%s323 + $0x2558] sm:$0xff]
        %v1615 = vld [vmem:[%s323 + $0x2560] sm:$0xff]
        %v1616 = vld [vmem:[%s323 + $0x2568] sm:$0xff]
        %v1617 = vld [vmem:[%s323 + $0x2570] sm:$0xff]
        %v1618 = vld [vmem:[%s323 + $0x2578] sm:$0xff]
        %v1619 = vld [vmem:[%s323 + $0x2580] sm:$0xff]
        %v1620 = vld [vmem:[%s323 + $0x2588] sm:$0xff]
        %v1621 = vld [vmem:[%s323 + $0x2590] sm:$0xff]
        %v1622 = vld [vmem:[%s323 + $0x2598] sm:$0xff]
        %v1623 = vld [vmem:[%s323 + $0x25a0] sm:$0xff]
        %v1624 = vld [vmem:[%s323 + $0x25a8] sm:$0xff]
        %v1625 = vld [vmem:[%s323 + $0x25b0] sm:$0xff]
        %v1626 = vld [vmem:[%s323 + $0x25b8] sm:$0xff]
        %v1627 = vld [vmem:[%s323 + $0x25c0] sm:$0xff]
        %v1628 = vld [vmem:[%s323 + $0x25c8] sm:$0xff]
        %v1629 = vld [vmem:[%s323 + $0x25d0] sm:$0xff]
        %v1630 = vld [vmem:[%s323 + $0x25d8] sm:$0xff]
        %v1631 = vld [vmem:[%s323 + $0x25e0] sm:$0xff]
        %v1632 = vld [vmem:[%s323 + $0x25e8] sm:$0xff]
        %v1633 = vld [vmem:[%s323 + $0x25f0] sm:$0xff]
        %v1634 = vld [vmem:[%s323 + $0x25f8] sm:$0xff]
        %v1635 = vld [vmem:[%s323 + $0x2600] sm:$0xff]
        %v1636 = vld [vmem:[%s323 + $0x2608] sm:$0xff]
        %v1637 = vld [vmem:[%s323 + $0x2610] sm:$0xff]
        %v1638 = vld [vmem:[%s323 + $0x2618] sm:$0xff]
        %v1639 = vld [vmem:[%s323 + $0x2620] sm:$0xff]
        %v1640 = vld [vmem:[%s323 + $0x2628] sm:$0xff]
        %v1641 = vld [vmem:[%s323 + $0x2630] sm:$0xff]
        %v1642 = vld [vmem:[%s323 + $0x2638] sm:$0xff]
        %v1643 = vld [vmem:[%s323 + $0x2640] sm:$0xff]
        %v1644 = vld [vmem:[%s323 + $0x2648] sm:$0xff]
        %v1645 = vld [vmem:[%s323 + $0x2650] sm:$0xff]
        %v1646 = vld [vmem:[%s323 + $0x2658] sm:$0xff]
        %v1647 = vld [vmem:[%s323 + $0x2660] sm:$0xff]
        %v1648 = vld [vmem:[%s323 + $0x2668] sm:$0xff]
        %v1649 = vld [vmem:[%s323 + $0x2670] sm:$0xff]
        %v1650 = vld [vmem:[%s323 + $0x2678] sm:$0xff]
        %v1651 = vld [vmem:[%s323 + $0x2680] sm:$0xff]
        %v1652 = vld [vmem:[%s323 + $0x2688] sm:$0xff]
        %v1653 = vld [vmem:[%s323 + $0x2690] sm:$0xff]
        %v1654 = vld [vmem:[%s323 + $0x2698] sm:$0xff]
        %v1655 = vld [vmem:[%s323 + $0x26a0] sm:$0xff]
        %v1656 = vld [vmem:[%s323 + $0x26a8] sm:$0xff]
        %v1657 = vld [vmem:[%s323 + $0x26b0] sm:$0xff]
        %v1658 = vld [vmem:[%s323 + $0x26b8] sm:$0xff]
        %v1659 = vld [vmem:[%s323 + $0x26c0] sm:$0xff]
        %v1660 = vld [vmem:[%s323 + $0x26c8] sm:$0xff]
        %v1661 = vld [vmem:[%s323 + $0x26d0] sm:$0xff]
        %v1662 = vld [vmem:[%s323 + $0x26d8] sm:$0xff]
        %v1663 = vld [vmem:[%s323 + $0x26e0] sm:$0xff]
        %v1664 = vld [vmem:[%s323 + $0x26e8] sm:$0xff]
        %v1665 = vld [vmem:[%s323 + $0x26f0] sm:$0xff]
        %v1666 = vld [vmem:[%s323 + $0x26f8] sm:$0xff]
        %v1667 = vld [vmem:[%s323 + $0x2700] sm:$0xff]
        %v1668 = vld [vmem:[%s323 + $0x2708] sm:$0xff]
        %v1669 = vld [vmem:[%s323 + $0x2710] sm:$0xff]
        %v1670 = vld [vmem:[%s323 + $0x2718] sm:$0xff]
        %v1671 = vld [vmem:[%s323 + $0x2720] sm:$0xff]
        %v1672 = vld [vmem:[%s323 + $0x2728] sm:$0xff]
        %v1673 = vld [vmem:[%s323 + $0x2730] sm:$0xff]
        %v1674 = vld [vmem:[%s323 + $0x2738] sm:$0xff]
        %v1675 = vld [vmem:[%s323 + $0x2740] sm:$0xff]
        %v1676 = vld [vmem:[%s323 + $0x2748] sm:$0xff]
        %v1677 = vld [vmem:[%s323 + $0x2750] sm:$0xff]
        %v1678 = vld [vmem:[%s323 + $0x2758] sm:$0xff]
        %v1679 = vld [vmem:[%s323 + $0x2760] sm:$0xff]
        %v1680 = vld [vmem:[%s323 + $0x2768] sm:$0xff]
        %v1681 = vld [vmem:[%s323 + $0x2770] sm:$0xff]
        %v1682 = vld [vmem:[%s323 + $0x2778] sm:$0xff]
        %v1683 = vld [vmem:[%s323 + $0x2780] sm:$0xff]
        %v1684 = vld [vmem:[%s323 + $0x2788] sm:$0xff]
        %v1685 = vld [vmem:[%s323 + $0x2790] sm:$0xff]
        %v1686 = vld [vmem:[%s323 + $0x2798] sm:$0xff]
        %v1687 = vld [vmem:[%s323 + $0x27a0] sm:$0xff]
        %v1688 = vld [vmem:[%s323 + $0x27a8] sm:$0xff]
        %v1689 = vld [vmem:[%s323 + $0x27b0] sm:$0xff]
        %v1690 = vld [vmem:[%s323 + $0x27b8] sm:$0xff]
        %v1691 = vld [vmem:[%s323 + $0x27c0] sm:$0xff]
        %v1692 = vld [vmem:[%s323 + $0x27c8] sm:$0xff]
        %v1693 = vld [vmem:[%s323 + $0x27d0] sm:$0xff]
        %v1694 = vld [vmem:[%s323 + $0x27d8] sm:$0xff]
        %v1695 = vld [vmem:[%s323 + $0x27e0] sm:$0xff]
        %v1696 = vld [vmem:[%s323 + $0x27e8] sm:$0xff]
        %v1697 = vld [vmem:[%s323 + $0x27f0] sm:$0xff]
        %v1698 = vld [vmem:[%s323 + $0x27f8] sm:$0xff]
        %1699 = vmatpush.msra.mxu0 %v479
        %1700 = vmatpush.msra.mxu0 %v475
        %1701 = vmatpush.msra.mxu0 %v471
        %1702 = vmatpush.msra.mxu0 %v467
        %1703 = vmatpush.msra.mxu0 %v463
        %1704 = vmatpush.msra.mxu0 %v459
        %1705 = vmatpush.msra.mxu0 %v455
        %1706 = vmatpush.msra.mxu0 %v451
        %1707 = vmatpush.msra.mxu0 %v447
        %1708 = vmatpush.msra.mxu0 %v443
        %1709 = vmatpush.msra.mxu0 %v439
        %1710 = vmatpush.msra.mxu0 %v435
        %1711 = vmatpush.msra.mxu0 %v431
        %1712 = vmatpush.msra.mxu0 %v427
        %1713 = vmatpush.msra.mxu0 %v423
        %1714 = vmatpush.msra.mxu0 %v419
        %1715 = vmatmul.f32.gmra.mxu0 %v399
        %v1716 = vpop.f32.mrf.mxu0
        %v1717 = vadd.f32 0.0, %v1716
        %1718 = vdwg.mxu0
        %1719 = vmatpush.msra.mxu0 %v543
        %1720 = vmatpush.msra.mxu0 %v539
        %1721 = vmatpush.msra.mxu0 %v535
        %1722 = vmatpush.msra.mxu0 %v531
        %1723 = vmatpush.msra.mxu0 %v527
        %1724 = vmatpush.msra.mxu0 %v523
        %1725 = vmatpush.msra.mxu0 %v519
        %1726 = vmatpush.msra.mxu0 %v515
        %1727 = vmatpush.msra.mxu0 %v511
        %1728 = vmatpush.msra.mxu0 %v507
        %1729 = vmatpush.msra.mxu0 %v503
        %1730 = vmatpush.msra.mxu0 %v499
        %1731 = vmatpush.msra.mxu0 %v495
        %1732 = vmatpush.msra.mxu0 %v491
        %1733 = vmatpush.msra.mxu0 %v487
        %1734 = vmatpush.msra.mxu0 %v483
        %1735 = vmatmul.f32.gmra.mxu0 %v400
        %v1736 = vpop.f32.mrf.mxu0
        %v1737 = vadd.f32 %v1717, %v1736
        %1738 = vdwg.mxu0
        %1739 = vmatpush.msra.mxu0 %v607
        %1740 = vmatpush.msra.mxu0 %v603
        %1741 = vmatpush.msra.mxu0 %v599
        %1742 = vmatpush.msra.mxu0 %v595
        %1743 = vmatpush.msra.mxu0 %v591
        %1744 = vmatpush.msra.mxu0 %v587
        %1745 = vmatpush.msra.mxu0 %v583
        %1746 = vmatpush.msra.mxu0 %v579
        %1747 = vmatpush.msra.mxu0 %v575
        %1748 = vmatpush.msra.mxu0 %v571
        %1749 = vmatpush.msra.mxu0 %v567
        %1750 = vmatpush.msra.mxu0 %v563
        %1751 = vmatpush.msra.mxu0 %v559
        %1752 = vmatpush.msra.mxu0 %v555
        %1753 = vmatpush.msra.mxu0 %v551
        %1754 = vmatpush.msra.mxu0 %v547
        %1755 = vmatmul.f32.gmra.mxu0 %v401
        %v1756 = vpop.f32.mrf.mxu0
        %v1757 = vadd.f32 %v1737, %v1756
        %1758 = vdwg.mxu0
        %1759 = vmatpush.msra.mxu0 %v671
        %1760 = vmatpush.msra.mxu0 %v667
        %1761 = vmatpush.msra.mxu0 %v663
        %1762 = vmatpush.msra.mxu0 %v659
        %1763 = vmatpush.msra.mxu0 %v655
        %1764 = vmatpush.msra.mxu0 %v651
        %1765 = vmatpush.msra.mxu0 %v647
        %1766 = vmatpush.msra.mxu0 %v643
        %1767 = vmatpush.msra.mxu0 %v639
        %1768 = vmatpush.msra.mxu0 %v635
        %1769 = vmatpush.msra.mxu0 %v631
        %1770 = vmatpush.msra.mxu0 %v627
        %1771 = vmatpush.msra.mxu0 %v623
        %1772 = vmatpush.msra.mxu0 %v619
        %1773 = vmatpush.msra.mxu0 %v615
        %1774 = vmatpush.msra.mxu0 %v611
        %1775 = vmatmul.f32.gmra.mxu0 %v402
        %v1776 = vpop.f32.mrf.mxu0
        %v1777 = vadd.f32 %v1757, %v1776
        %1778 = vdwg.mxu0
        %1779 = vmatpush.msra.mxu0 %v735
        %1780 = vmatpush.msra.mxu0 %v731
        %1781 = vmatpush.msra.mxu0 %v727
        %1782 = vmatpush.msra.mxu0 %v723
        %1783 = vmatpush.msra.mxu0 %v719
        %1784 = vmatpush.msra.mxu0 %v715
        %1785 = vmatpush.msra.mxu0 %v711
        %1786 = vmatpush.msra.mxu0 %v707
        %1787 = vmatpush.msra.mxu0 %v703
        %1788 = vmatpush.msra.mxu0 %v699
        %1789 = vmatpush.msra.mxu0 %v695
        %1790 = vmatpush.msra.mxu0 %v691
        %1791 = vmatpush.msra.mxu0 %v687
        %1792 = vmatpush.msra.mxu0 %v683
        %1793 = vmatpush.msra.mxu0 %v679
        %1794 = vmatpush.msra.mxu0 %v675
        %1795 = vmatmul.f32.gmra.mxu0 %v403
        %v1796 = vpop.f32.mrf.mxu0
        %v1797 = vadd.f32 %v1777, %v1796
        %1798 = vdwg.mxu0
        %1799 = vmatpush.msra.mxu0 %v799
        %1800 = vmatpush.msra.mxu0 %v795
        %1801 = vmatpush.msra.mxu0 %v791
        %1802 = vmatpush.msra.mxu0 %v787
        %1803 = vmatpush.msra.mxu0 %v783
        %1804 = vmatpush.msra.mxu0 %v779
        %1805 = vmatpush.msra.mxu0 %v775
        %1806 = vmatpush.msra.mxu0 %v771
        %1807 = vmatpush.msra.mxu0 %v767
        %1808 = vmatpush.msra.mxu0 %v763
        %1809 = vmatpush.msra.mxu0 %v759
        %1810 = vmatpush.msra.mxu0 %v755
        %1811 = vmatpush.msra.mxu0 %v751
        %1812 = vmatpush.msra.mxu0 %v747
        %1813 = vmatpush.msra.mxu0 %v743
        %1814 = vmatpush.msra.mxu0 %v739
        %1815 = vmatmul.f32.gmra.mxu0 %v404
        %v1816 = vpop.f32.mrf.mxu0
        %v1817 = vadd.f32 %v1797, %v1816
        %1818 = vdwg.mxu0
        %1819 = vmatpush.msra.mxu0 %v863
        %1820 = vmatpush.msra.mxu0 %v859
        %1821 = vmatpush.msra.mxu0 %v855
        %1822 = vmatpush.msra.mxu0 %v851
        %1823 = vmatpush.msra.mxu0 %v847
        %1824 = vmatpush.msra.mxu0 %v843
        %1825 = vmatpush.msra.mxu0 %v839
        %1826 = vmatpush.msra.mxu0 %v835
        %1827 = vmatpush.msra.mxu0 %v831
        %1828 = vmatpush.msra.mxu0 %v827
        %1829 = vmatpush.msra.mxu0 %v823
        %1830 = vmatpush.msra.mxu0 %v819
        %1831 = vmatpush.msra.mxu0 %v815
        %1832 = vmatpush.msra.mxu0 %v811
        %1833 = vmatpush.msra.mxu0 %v807
        %1834 = vmatpush.msra.mxu0 %v803
        %1835 = vmatmul.f32.gmra.mxu0 %v405
        %v1836 = vpop.f32.mrf.mxu0
        %v1837 = vadd.f32 %v1817, %v1836
        %1838 = vdwg.mxu0
        %1839 = vmatpush.msra.mxu0 %v927
        %1840 = vmatpush.msra.mxu0 %v923
        %1841 = vmatpush.msra.mxu0 %v919
        %1842 = vmatpush.msra.mxu0 %v915
        %1843 = vmatpush.msra.mxu0 %v911
        %1844 = vmatpush.msra.mxu0 %v907
        %1845 = vmatpush.msra.mxu0 %v903
        %1846 = vmatpush.msra.mxu0 %v899
        %1847 = vmatpush.msra.mxu0 %v895
        %1848 = vmatpush.msra.mxu0 %v891
        %1849 = vmatpush.msra.mxu0 %v887
        %1850 = vmatpush.msra.mxu0 %v883
        %1851 = vmatpush.msra.mxu0 %v879
        %1852 = vmatpush.msra.mxu0 %v875
        %1853 = vmatpush.msra.mxu0 %v871
        %1854 = vmatpush.msra.mxu0 %v867
        %1855 = vmatmul.f32.gmra.mxu0 %v406
        %v1856 = vpop.f32.mrf.mxu0
        %v1857 = vadd.f32 %v1837, %v1856
        %1858 = vdwg.mxu0
        %1859 = vmatpush.msra.mxu0 %v991
        %1860 = vmatpush.msra.mxu0 %v987
        %1861 = vmatpush.msra.mxu0 %v983
        %1862 = vmatpush.msra.mxu0 %v979
        %1863 = vmatpush.msra.mxu0 %v975
        %1864 = vmatpush.msra.mxu0 %v971
        %1865 = vmatpush.msra.mxu0 %v967
        %1866 = vmatpush.msra.mxu0 %v963
        %1867 = vmatpush.msra.mxu0 %v959
        %1868 = vmatpush.msra.mxu0 %v955
        %1869 = vmatpush.msra.mxu0 %v951
        %1870 = vmatpush.msra.mxu0 %v947
        %1871 = vmatpush.msra.mxu0 %v943
        %1872 = vmatpush.msra.mxu0 %v939
        %1873 = vmatpush.msra.mxu0 %v935
        %1874 = vmatpush.msra.mxu0 %v931
        %1875 = vmatmul.f32.gmra.mxu0 %v407
        %v1876 = vpop.f32.mrf.mxu0
        %v1877 = vadd.f32 %v1857, %v1876
        %1878 = vdwg.mxu0
        %1879 = vmatpush.msra.mxu0 %v1055
        %1880 = vmatpush.msra.mxu0 %v1051
        %1881 = vmatpush.msra.mxu0 %v1047
        %1882 = vmatpush.msra.mxu0 %v1043
        %1883 = vmatpush.msra.mxu0 %v1039
        %1884 = vmatpush.msra.mxu0 %v1035
        %1885 = vmatpush.msra.mxu0 %v1031
        %1886 = vmatpush.msra.mxu0 %v1027
        %1887 = vmatpush.msra.mxu0 %v1023
        %1888 = vmatpush.msra.mxu0 %v1019
        %1889 = vmatpush.msra.mxu0 %v1015
        %1890 = vmatpush.msra.mxu0 %v1011
        %1891 = vmatpush.msra.mxu0 %v1007
        %1892 = vmatpush.msra.mxu0 %v1003
        %1893 = vmatpush.msra.mxu0 %v999
        %1894 = vmatpush.msra.mxu0 %v995
        %1895 = vmatmul.f32.gmra.mxu0 %v408
        %v1896 = vpop.f32.mrf.mxu0
        %v1897 = vadd.f32 %v1877, %v1896
        %1898 = vdwg.mxu0
        %1899 = vmatpush.msra.mxu0 %v1119
        %1900 = vmatpush.msra.mxu0 %v1115
        %1901 = vmatpush.msra.mxu0 %v1111
        %1902 = vmatpush.msra.mxu0 %v1107
        %1903 = vmatpush.msra.mxu0 %v1103
        %1904 = vmatpush.msra.mxu0 %v1099
        %1905 = vmatpush.msra.mxu0 %v1095
        %1906 = vmatpush.msra.mxu0 %v1091
        %1907 = vmatpush.msra.mxu0 %v1087
        %1908 = vmatpush.msra.mxu0 %v1083
        %1909 = vmatpush.msra.mxu0 %v1079
        %1910 = vmatpush.msra.mxu0 %v1075
        %1911 = vmatpush.msra.mxu0 %v1071
        %1912 = vmatpush.msra.mxu0 %v1067
        %1913 = vmatpush.msra.mxu0 %v1063
        %1914 = vmatpush.msra.mxu0 %v1059
        %1915 = vmatmul.f32.gmra.mxu0 %v409
        %v1916 = vpop.f32.mrf.mxu0
        %v1917 = vadd.f32 %v1897, %v1916
        %1918 = vdwg.mxu0
        %1919 = vmatpush.msra.mxu0 %v1183
        %1920 = vmatpush.msra.mxu0 %v1179
        %1921 = vmatpush.msra.mxu0 %v1175
        %1922 = vmatpush.msra.mxu0 %v1171
        %1923 = vmatpush.msra.mxu0 %v1167
        %1924 = vmatpush.msra.mxu0 %v1163
        %1925 = vmatpush.msra.mxu0 %v1159
        %1926 = vmatpush.msra.mxu0 %v1155
        %1927 = vmatpush.msra.mxu0 %v1151
        %1928 = vmatpush.msra.mxu0 %v1147
        %1929 = vmatpush.msra.mxu0 %v1143
        %1930 = vmatpush.msra.mxu0 %v1139
        %1931 = vmatpush.msra.mxu0 %v1135
        %1932 = vmatpush.msra.mxu0 %v1131
        %1933 = vmatpush.msra.mxu0 %v1127
        %1934 = vmatpush.msra.mxu0 %v1123
        %1935 = vmatmul.f32.gmra.mxu0 %v410
        %v1936 = vpop.f32.mrf.mxu0
        %v1937 = vadd.f32 %v1917, %v1936
        %1938 = vdwg.mxu0
        %1939 = vmatpush.msra.mxu0 %v1247
        %1940 = vmatpush.msra.mxu0 %v1243
        %1941 = vmatpush.msra.mxu0 %v1239
        %1942 = vmatpush.msra.mxu0 %v1235
        %1943 = vmatpush.msra.mxu0 %v1231
        %1944 = vmatpush.msra.mxu0 %v1227
        %1945 = vmatpush.msra.mxu0 %v1223
        %1946 = vmatpush.msra.mxu0 %v1219
        %1947 = vmatpush.msra.mxu0 %v1215
        %1948 = vmatpush.msra.mxu0 %v1211
        %1949 = vmatpush.msra.mxu0 %v1207
        %1950 = vmatpush.msra.mxu0 %v1203
        %1951 = vmatpush.msra.mxu0 %v1199
        %1952 = vmatpush.msra.mxu0 %v1195
        %1953 = vmatpush.msra.mxu0 %v1191
        %1954 = vmatpush.msra.mxu0 %v1187
        %1955 = vmatmul.f32.gmra.mxu0 %v411
        %v1956 = vpop.f32.mrf.mxu0
        %v1957 = vadd.f32 %v1937, %v1956
        %1958 = vdwg.mxu0
        %1959 = vmatpush.msra.mxu0 %v1311
        %1960 = vmatpush.msra.mxu0 %v1307
        %1961 = vmatpush.msra.mxu0 %v1303
        %1962 = vmatpush.msra.mxu0 %v1299
        %1963 = vmatpush.msra.mxu0 %v1295
        %1964 = vmatpush.msra.mxu0 %v1291
        %1965 = vmatpush.msra.mxu0 %v1287
        %1966 = vmatpush.msra.mxu0 %v1283
        %1967 = vmatpush.msra.mxu0 %v1279
        %1968 = vmatpush.msra.mxu0 %v1275
        %1969 = vmatpush.msra.mxu0 %v1271
        %1970 = vmatpush.msra.mxu0 %v1267
        %1971 = vmatpush.msra.mxu0 %v1263
        %1972 = vmatpush.msra.mxu0 %v1259
        %1973 = vmatpush.msra.mxu0 %v1255
        %1974 = vmatpush.msra.mxu0 %v1251
        %1975 = vmatmul.f32.gmra.mxu0 %v412
        %v1976 = vpop.f32.mrf.mxu0
        %v1977 = vadd.f32 %v1957, %v1976
        %1978 = vdwg.mxu0
        %1979 = vmatpush.msra.mxu0 %v1375
        %1980 = vmatpush.msra.mxu0 %v1371
        %1981 = vmatpush.msra.mxu0 %v1367
        %1982 = vmatpush.msra.mxu0 %v1363
        %1983 = vmatpush.msra.mxu0 %v1359
        %1984 = vmatpush.msra.mxu0 %v1355
        %1985 = vmatpush.msra.mxu0 %v1351
        %1986 = vmatpush.msra.mxu0 %v1347
        %1987 = vmatpush.msra.mxu0 %v1343
        %1988 = vmatpush.msra.mxu0 %v1339
        %1989 = vmatpush.msra.mxu0 %v1335
        %1990 = vmatpush.msra.mxu0 %v1331
        %1991 = vmatpush.msra.mxu0 %v1327
        %1992 = vmatpush.msra.mxu0 %v1323
        %1993 = vmatpush.msra.mxu0 %v1319
        %1994 = vmatpush.msra.mxu0 %v1315
        %1995 = vmatmul.f32.gmra.mxu0 %v413
        %v1996 = vpop.f32.mrf.mxu0
        %v1997 = vadd.f32 %v1977, %v1996
        %1998 = vdwg.mxu0
        %1999 = vmatpush.msra.mxu0 %v1439
        %2000 = vmatpush.msra.mxu0 %v1435
        %2001 = vmatpush.msra.mxu0 %v1431
        %2002 = vmatpush.msra.mxu0 %v1427
        %2003 = vmatpush.msra.mxu0 %v1423
        %2004 = vmatpush.msra.mxu0 %v1419
        %2005 = vmatpush.msra.mxu0 %v1415
        %2006 = vmatpush.msra.mxu0 %v1411
        %2007 = vmatpush.msra.mxu0 %v1407
        %2008 = vmatpush.msra.mxu0 %v1403
        %2009 = vmatpush.msra.mxu0 %v1399
        %2010 = vmatpush.msra.mxu0 %v1395
        %2011 = vmatpush.msra.mxu0 %v1391
        %2012 = vmatpush.msra.mxu0 %v1387
        %2013 = vmatpush.msra.mxu0 %v1383
        %2014 = vmatpush.msra.mxu0 %v1379
        %2015 = vmatmul.f32.gmra.mxu0 %v414
        %v2016 = vpop.f32.mrf.mxu0
        %v2017 = vadd.f32 %v1997, %v2016
        %2018 = vdwg.mxu0
        %2019 = vmatpush.msra.mxu0 %v1503
        %2020 = vmatpush.msra.mxu0 %v1499
        %2021 = vmatpush.msra.mxu0 %v1495
        %2022 = vmatpush.msra.mxu0 %v1491
        %2023 = vmatpush.msra.mxu0 %v1487
        %2024 = vmatpush.msra.mxu0 %v1483
        %2025 = vmatpush.msra.mxu0 %v1479
        %2026 = vmatpush.msra.mxu0 %v1475
        %2027 = vmatpush.msra.mxu0 %v1471
        %2028 = vmatpush.msra.mxu0 %v1467
        %2029 = vmatpush.msra.mxu0 %v1463
        %2030 = vmatpush.msra.mxu0 %v1459
        %2031 = vmatpush.msra.mxu0 %v1455
        %2032 = vmatpush.msra.mxu0 %v1451
        %2033 = vmatpush.msra.mxu0 %v1447
        %2034 = vmatpush.msra.mxu0 %v1443
        %2035 = vmatmul.f32.gmra.mxu0 %v415
        %v2036 = vpop.f32.mrf.mxu0
        %v2037 = vadd.f32 %v2017, %v2036
        %2038 = vdwg.mxu0
        %2039 = vmatpush.msra.mxu0 %v1567
        %2040 = vmatpush.msra.mxu0 %v1563
        %2041 = vmatpush.msra.mxu0 %v1559
        %2042 = vmatpush.msra.mxu0 %v1555
        %2043 = vmatpush.msra.mxu0 %v1551
        %2044 = vmatpush.msra.mxu0 %v1547
        %2045 = vmatpush.msra.mxu0 %v1543
        %2046 = vmatpush.msra.mxu0 %v1539
        %2047 = vmatpush.msra.mxu0 %v1535
        %2048 = vmatpush.msra.mxu0 %v1531
        %2049 = vmatpush.msra.mxu0 %v1527
        %2050 = vmatpush.msra.mxu0 %v1523
        %2051 = vmatpush.msra.mxu0 %v1519
        %2052 = vmatpush.msra.mxu0 %v1515
        %2053 = vmatpush.msra.mxu0 %v1511
        %2054 = vmatpush.msra.mxu0 %v1507
        %2055 = vmatmul.f32.gmra.mxu0 %v416
        %v2056 = vpop.f32.mrf.mxu0
        %v2057 = vadd.f32 %v2037, %v2056
        %2058 = vdwg.mxu0
        %2059 = vmatpush.msra.mxu0 %v1631
        %2060 = vmatpush.msra.mxu0 %v1627
        %2061 = vmatpush.msra.mxu0 %v1623
        %2062 = vmatpush.msra.mxu0 %v1619
        %2063 = vmatpush.msra.mxu0 %v1615
        %2064 = vmatpush.msra.mxu0 %v1611
        %2065 = vmatpush.msra.mxu0 %v1607
        %2066 = vmatpush.msra.mxu0 %v1603
        %2067 = vmatpush.msra.mxu0 %v1599
        %2068 = vmatpush.msra.mxu0 %v1595
        %2069 = vmatpush.msra.mxu0 %v1591
        %2070 = vmatpush.msra.mxu0 %v1587
        %2071 = vmatpush.msra.mxu0 %v1583
        %2072 = vmatpush.msra.mxu0 %v1579
        %2073 = vmatpush.msra.mxu0 %v1575
        %2074 = vmatpush.msra.mxu0 %v1571
        %2075 = vmatmul.f32.gmra.mxu0 %v417
        %v2076 = vpop.f32.mrf.mxu0
        %v2077 = vadd.f32 %v2057, %v2076
        %2078 = vdwg.mxu0
        %2079 = vmatpush.msra.mxu0 %v1695
        %2080 = vmatpush.msra.mxu0 %v1691
        %2081 = vmatpush.msra.mxu0 %v1687
        %2082 = vmatpush.msra.mxu0 %v1683
        %2083 = vmatpush.msra.mxu0 %v1679
        %2084 = vmatpush.msra.mxu0 %v1675
        %2085 = vmatpush.msra.mxu0 %v1671
        %2086 = vmatpush.msra.mxu0 %v1667
        %2087 = vmatpush.msra.mxu0 %v1663
        %2088 = vmatpush.msra.mxu0 %v1659
        %2089 = vmatpush.msra.mxu0 %v1655
        %2090 = vmatpush.msra.mxu0 %v1651
        %2091 = vmatpush.msra.mxu0 %v1647
        %2092 = vmatpush.msra.mxu0 %v1643
        %2093 = vmatpush.msra.mxu0 %v1639
        %2094 = vmatpush.msra.mxu0 %v1635
        %2095 = vmatmul.f32.gmra.mxu0 %v418
        %v2096 = vpop.f32.mrf.mxu0
        %v2097 = vadd.f32 %v2077, %v2096
        %2098 = vdwg.mxu0
        %2099 = vmatpush.msra.mxu0 %v480
        %2100 = vmatpush.msra.mxu0 %v476
        %2101 = vmatpush.msra.mxu0 %v472
        %2102 = vmatpush.msra.mxu0 %v468
        %2103 = vmatpush.msra.mxu0 %v464
        %2104 = vmatpush.msra.mxu0 %v460
        %2105 = vmatpush.msra.mxu0 %v456
        %2106 = vmatpush.msra.mxu0 %v452
        %2107 = vmatpush.msra.mxu0 %v448
        %2108 = vmatpush.msra.mxu0 %v444
        %2109 = vmatpush.msra.mxu0 %v440
        %2110 = vmatpush.msra.mxu0 %v436
        %2111 = vmatpush.msra.mxu0 %v432
        %2112 = vmatpush.msra.mxu0 %v428
        %2113 = vmatpush.msra.mxu0 %v424
        %2114 = vmatpush.msra.mxu0 %v420
        %2115 = vmatmul.f32.gmra.mxu0 %v399
        %v2116 = vpop.f32.mrf.mxu0
        %v2117 = vadd.f32 0.0, %v2116
        %2118 = vdwg.mxu0
        %2119 = vmatpush.msra.mxu0 %v544
        %2120 = vmatpush.msra.mxu0 %v540
        %2121 = vmatpush.msra.mxu0 %v536
        %2122 = vmatpush.msra.mxu0 %v532
        %2123 = vmatpush.msra.mxu0 %v528
        %2124 = vmatpush.msra.mxu0 %v524
        %2125 = vmatpush.msra.mxu0 %v520
        %2126 = vmatpush.msra.mxu0 %v516
        %2127 = vmatpush.msra.mxu0 %v512
        %2128 = vmatpush.msra.mxu0 %v508
        %2129 = vmatpush.msra.mxu0 %v504
        %2130 = vmatpush.msra.mxu0 %v500
        %2131 = vmatpush.msra.mxu0 %v496
        %2132 = vmatpush.msra.mxu0 %v492
        %2133 = vmatpush.msra.mxu0 %v488
        %2134 = vmatpush.msra.mxu0 %v484
        %2135 = vmatmul.f32.gmra.mxu0 %v400
        %v2136 = vpop.f32.mrf.mxu0
        %v2137 = vadd.f32 %v2117, %v2136
        %2138 = vdwg.mxu0
        %2139 = vmatpush.msra.mxu0 %v608
        %2140 = vmatpush.msra.mxu0 %v604
        %2141 = vmatpush.msra.mxu0 %v600
        %2142 = vmatpush.msra.mxu0 %v596
        %2143 = vmatpush.msra.mxu0 %v592
        %2144 = vmatpush.msra.mxu0 %v588
        %2145 = vmatpush.msra.mxu0 %v584
        %2146 = vmatpush.msra.mxu0 %v580
        %2147 = vmatpush.msra.mxu0 %v576
        %2148 = vmatpush.msra.mxu0 %v572
        %2149 = vmatpush.msra.mxu0 %v568
        %2150 = vmatpush.msra.mxu0 %v564
        %2151 = vmatpush.msra.mxu0 %v560
        %2152 = vmatpush.msra.mxu0 %v556
        %2153 = vmatpush.msra.mxu0 %v552
        %2154 = vmatpush.msra.mxu0 %v548
        %2155 = vmatmul.f32.gmra.mxu0 %v401
        %v2156 = vpop.f32.mrf.mxu0
        %v2157 = vadd.f32 %v2137, %v2156
        %2158 = vdwg.mxu0
        %2159 = vmatpush.msra.mxu0 %v672
        %2160 = vmatpush.msra.mxu0 %v668
        %2161 = vmatpush.msra.mxu0 %v664
        %2162 = vmatpush.msra.mxu0 %v660
        %2163 = vmatpush.msra.mxu0 %v656
        %2164 = vmatpush.msra.mxu0 %v652
        %2165 = vmatpush.msra.mxu0 %v648
        %2166 = vmatpush.msra.mxu0 %v644
        %2167 = vmatpush.msra.mxu0 %v640
        %2168 = vmatpush.msra.mxu0 %v636
        %2169 = vmatpush.msra.mxu0 %v632
        %2170 = vmatpush.msra.mxu0 %v628
        %2171 = vmatpush.msra.mxu0 %v624
        %2172 = vmatpush.msra.mxu0 %v620
        %2173 = vmatpush.msra.mxu0 %v616
        %2174 = vmatpush.msra.mxu0 %v612
        %2175 = vmatmul.f32.gmra.mxu0 %v402
        %v2176 = vpop.f32.mrf.mxu0
        %v2177 = vadd.f32 %v2157, %v2176
        %2178 = vdwg.mxu0
        %2179 = vmatpush.msra.mxu0 %v736
        %2180 = vmatpush.msra.mxu0 %v732
        %2181 = vmatpush.msra.mxu0 %v728
        %2182 = vmatpush.msra.mxu0 %v724
        %2183 = vmatpush.msra.mxu0 %v720
        %2184 = vmatpush.msra.mxu0 %v716
        %2185 = vmatpush.msra.mxu0 %v712
        %2186 = vmatpush.msra.mxu0 %v708
        %2187 = vmatpush.msra.mxu0 %v704
        %2188 = vmatpush.msra.mxu0 %v700
        %2189 = vmatpush.msra.mxu0 %v696
        %2190 = vmatpush.msra.mxu0 %v692
        %2191 = vmatpush.msra.mxu0 %v688
        %2192 = vmatpush.msra.mxu0 %v684
        %2193 = vmatpush.msra.mxu0 %v680
        %2194 = vmatpush.msra.mxu0 %v676
        %2195 = vmatmul.f32.gmra.mxu0 %v403
        %v2196 = vpop.f32.mrf.mxu0
        %v2197 = vadd.f32 %v2177, %v2196
        %2198 = vdwg.mxu0
        %2199 = vmatpush.msra.mxu0 %v800
        %2200 = vmatpush.msra.mxu0 %v796
        %2201 = vmatpush.msra.mxu0 %v792
        %2202 = vmatpush.msra.mxu0 %v788
        %2203 = vmatpush.msra.mxu0 %v784
        %2204 = vmatpush.msra.mxu0 %v780
        %2205 = vmatpush.msra.mxu0 %v776
        %2206 = vmatpush.msra.mxu0 %v772
        %2207 = vmatpush.msra.mxu0 %v768
        %2208 = vmatpush.msra.mxu0 %v764
        %2209 = vmatpush.msra.mxu0 %v760
        %2210 = vmatpush.msra.mxu0 %v756
        %2211 = vmatpush.msra.mxu0 %v752
        %2212 = vmatpush.msra.mxu0 %v748
        %2213 = vmatpush.msra.mxu0 %v744
        %2214 = vmatpush.msra.mxu0 %v740
        %2215 = vmatmul.f32.gmra.mxu0 %v404
        %v2216 = vpop.f32.mrf.mxu0
        %v2217 = vadd.f32 %v2197, %v2216
        %2218 = vdwg.mxu0
        %2219 = vmatpush.msra.mxu0 %v864
        %2220 = vmatpush.msra.mxu0 %v860
        %2221 = vmatpush.msra.mxu0 %v856
        %2222 = vmatpush.msra.mxu0 %v852
        %2223 = vmatpush.msra.mxu0 %v848
        %2224 = vmatpush.msra.mxu0 %v844
        %2225 = vmatpush.msra.mxu0 %v840
        %2226 = vmatpush.msra.mxu0 %v836
        %2227 = vmatpush.msra.mxu0 %v832
        %2228 = vmatpush.msra.mxu0 %v828
        %2229 = vmatpush.msra.mxu0 %v824
        %2230 = vmatpush.msra.mxu0 %v820
        %2231 = vmatpush.msra.mxu0 %v816
        %2232 = vmatpush.msra.mxu0 %v812
        %2233 = vmatpush.msra.mxu0 %v808
        %2234 = vmatpush.msra.mxu0 %v804
        %2235 = vmatmul.f32.gmra.mxu0 %v405
        %v2236 = vpop.f32.mrf.mxu0
        %v2237 = vadd.f32 %v2217, %v2236
        %2238 = vdwg.mxu0
        %2239 = vmatpush.msra.mxu0 %v928
        %2240 = vmatpush.msra.mxu0 %v924
        %2241 = vmatpush.msra.mxu0 %v920
        %2242 = vmatpush.msra.mxu0 %v916
        %2243 = vmatpush.msra.mxu0 %v912
        %2244 = vmatpush.msra.mxu0 %v908
        %2245 = vmatpush.msra.mxu0 %v904
        %2246 = vmatpush.msra.mxu0 %v900
        %2247 = vmatpush.msra.mxu0 %v896
        %2248 = vmatpush.msra.mxu0 %v892
        %2249 = vmatpush.msra.mxu0 %v888
        %2250 = vmatpush.msra.mxu0 %v884
        %2251 = vmatpush.msra.mxu0 %v880
        %2252 = vmatpush.msra.mxu0 %v876
        %2253 = vmatpush.msra.mxu0 %v872
        %2254 = vmatpush.msra.mxu0 %v868
        %2255 = vmatmul.f32.gmra.mxu0 %v406
        %v2256 = vpop.f32.mrf.mxu0
        %v2257 = vadd.f32 %v2237, %v2256
        %2258 = vdwg.mxu0
        %2259 = vmatpush.msra.mxu0 %v992
        %2260 = vmatpush.msra.mxu0 %v988
        %2261 = vmatpush.msra.mxu0 %v984
        %2262 = vmatpush.msra.mxu0 %v980
        %2263 = vmatpush.msra.mxu0 %v976
        %2264 = vmatpush.msra.mxu0 %v972
        %2265 = vmatpush.msra.mxu0 %v968
        %2266 = vmatpush.msra.mxu0 %v964
        %2267 = vmatpush.msra.mxu0 %v960
        %2268 = vmatpush.msra.mxu0 %v956
        %2269 = vmatpush.msra.mxu0 %v952
        %2270 = vmatpush.msra.mxu0 %v948
        %2271 = vmatpush.msra.mxu0 %v944
        %2272 = vmatpush.msra.mxu0 %v940
        %2273 = vmatpush.msra.mxu0 %v936
        %2274 = vmatpush.msra.mxu0 %v932
        %2275 = vmatmul.f32.gmra.mxu0 %v407
        %v2276 = vpop.f32.mrf.mxu0
        %v2277 = vadd.f32 %v2257, %v2276
        %2278 = vdwg.mxu0
        %2279 = vmatpush.msra.mxu0 %v1056
        %2280 = vmatpush.msra.mxu0 %v1052
        %2281 = vmatpush.msra.mxu0 %v1048
        %2282 = vmatpush.msra.mxu0 %v1044
        %2283 = vmatpush.msra.mxu0 %v1040
        %2284 = vmatpush.msra.mxu0 %v1036
        %2285 = vmatpush.msra.mxu0 %v1032
        %2286 = vmatpush.msra.mxu0 %v1028
        %2287 = vmatpush.msra.mxu0 %v1024
        %2288 = vmatpush.msra.mxu0 %v1020
        %2289 = vmatpush.msra.mxu0 %v1016
        %2290 = vmatpush.msra.mxu0 %v1012
        %2291 = vmatpush.msra.mxu0 %v1008
        %2292 = vmatpush.msra.mxu0 %v1004
        %2293 = vmatpush.msra.mxu0 %v1000
        %2294 = vmatpush.msra.mxu0 %v996
        %2295 = vmatmul.f32.gmra.mxu0 %v408
        %v2296 = vpop.f32.mrf.mxu0
        %v2297 = vadd.f32 %v2277, %v2296
        %2298 = vdwg.mxu0
        %2299 = vmatpush.msra.mxu0 %v1120
        %2300 = vmatpush.msra.mxu0 %v1116
        %2301 = vmatpush.msra.mxu0 %v1112
        %2302 = vmatpush.msra.mxu0 %v1108
        %2303 = vmatpush.msra.mxu0 %v1104
        %2304 = vmatpush.msra.mxu0 %v1100
        %2305 = vmatpush.msra.mxu0 %v1096
        %2306 = vmatpush.msra.mxu0 %v1092
        %2307 = vmatpush.msra.mxu0 %v1088
        %2308 = vmatpush.msra.mxu0 %v1084
        %2309 = vmatpush.msra.mxu0 %v1080
        %2310 = vmatpush.msra.mxu0 %v1076
        %2311 = vmatpush.msra.mxu0 %v1072
        %2312 = vmatpush.msra.mxu0 %v1068
        %2313 = vmatpush.msra.mxu0 %v1064
        %2314 = vmatpush.msra.mxu0 %v1060
        %2315 = vmatmul.f32.gmra.mxu0 %v409
        %v2316 = vpop.f32.mrf.mxu0
        %v2317 = vadd.f32 %v2297, %v2316
        %2318 = vdwg.mxu0
        %2319 = vmatpush.msra.mxu0 %v1184
        %2320 = vmatpush.msra.mxu0 %v1180
        %2321 = vmatpush.msra.mxu0 %v1176
        %2322 = vmatpush.msra.mxu0 %v1172
        %2323 = vmatpush.msra.mxu0 %v1168
        %2324 = vmatpush.msra.mxu0 %v1164
        %2325 = vmatpush.msra.mxu0 %v1160
        %2326 = vmatpush.msra.mxu0 %v1156
        %2327 = vmatpush.msra.mxu0 %v1152
        %2328 = vmatpush.msra.mxu0 %v1148
        %2329 = vmatpush.msra.mxu0 %v1144
        %2330 = vmatpush.msra.mxu0 %v1140
        %2331 = vmatpush.msra.mxu0 %v1136
        %2332 = vmatpush.msra.mxu0 %v1132
        %2333 = vmatpush.msra.mxu0 %v1128
        %2334 = vmatpush.msra.mxu0 %v1124
        %2335 = vmatmul.f32.gmra.mxu0 %v410
        %v2336 = vpop.f32.mrf.mxu0
        %v2337 = vadd.f32 %v2317, %v2336
        %2338 = vdwg.mxu0
        %2339 = vmatpush.msra.mxu0 %v1248
        %2340 = vmatpush.msra.mxu0 %v1244
        %2341 = vmatpush.msra.mxu0 %v1240
        %2342 = vmatpush.msra.mxu0 %v1236
        %2343 = vmatpush.msra.mxu0 %v1232
        %2344 = vmatpush.msra.mxu0 %v1228
        %2345 = vmatpush.msra.mxu0 %v1224
        %2346 = vmatpush.msra.mxu0 %v1220
        %2347 = vmatpush.msra.mxu0 %v1216
        %2348 = vmatpush.msra.mxu0 %v1212
        %2349 = vmatpush.msra.mxu0 %v1208
        %2350 = vmatpush.msra.mxu0 %v1204
        %2351 = vmatpush.msra.mxu0 %v1200
        %2352 = vmatpush.msra.mxu0 %v1196
        %2353 = vmatpush.msra.mxu0 %v1192
        %2354 = vmatpush.msra.mxu0 %v1188
        %2355 = vmatmul.f32.gmra.mxu0 %v411
        %v2356 = vpop.f32.mrf.mxu0
        %v2357 = vadd.f32 %v2337, %v2356
        %2358 = vdwg.mxu0
        %2359 = vmatpush.msra.mxu0 %v1312
        %2360 = vmatpush.msra.mxu0 %v1308
        %2361 = vmatpush.msra.mxu0 %v1304
        %2362 = vmatpush.msra.mxu0 %v1300
        %2363 = vmatpush.msra.mxu0 %v1296
        %2364 = vmatpush.msra.mxu0 %v1292
        %2365 = vmatpush.msra.mxu0 %v1288
        %2366 = vmatpush.msra.mxu0 %v1284
        %2367 = vmatpush.msra.mxu0 %v1280
        %2368 = vmatpush.msra.mxu0 %v1276
        %2369 = vmatpush.msra.mxu0 %v1272
        %2370 = vmatpush.msra.mxu0 %v1268
        %2371 = vmatpush.msra.mxu0 %v1264
        %2372 = vmatpush.msra.mxu0 %v1260
        %2373 = vmatpush.msra.mxu0 %v1256
        %2374 = vmatpush.msra.mxu0 %v1252
        %2375 = vmatmul.f32.gmra.mxu0 %v412
        %v2376 = vpop.f32.mrf.mxu0
        %v2377 = vadd.f32 %v2357, %v2376
        %2378 = vdwg.mxu0
        %2379 = vmatpush.msra.mxu0 %v1376
        %2380 = vmatpush.msra.mxu0 %v1372
        %2381 = vmatpush.msra.mxu0 %v1368
        %2382 = vmatpush.msra.mxu0 %v1364
        %2383 = vmatpush.msra.mxu0 %v1360
        %2384 = vmatpush.msra.mxu0 %v1356
        %2385 = vmatpush.msra.mxu0 %v1352
        %2386 = vmatpush.msra.mxu0 %v1348
        %2387 = vmatpush.msra.mxu0 %v1344
        %2388 = vmatpush.msra.mxu0 %v1340
        %2389 = vmatpush.msra.mxu0 %v1336
        %2390 = vmatpush.msra.mxu0 %v1332
        %2391 = vmatpush.msra.mxu0 %v1328
        %2392 = vmatpush.msra.mxu0 %v1324
        %2393 = vmatpush.msra.mxu0 %v1320
        %2394 = vmatpush.msra.mxu0 %v1316
        %2395 = vmatmul.f32.gmra.mxu0 %v413
        %v2396 = vpop.f32.mrf.mxu0
        %v2397 = vadd.f32 %v2377, %v2396
        %2398 = vdwg.mxu0
        %2399 = vmatpush.msra.mxu0 %v1440
        %2400 = vmatpush.msra.mxu0 %v1436
        %2401 = vmatpush.msra.mxu0 %v1432
        %2402 = vmatpush.msra.mxu0 %v1428
        %2403 = vmatpush.msra.mxu0 %v1424
        %2404 = vmatpush.msra.mxu0 %v1420
        %2405 = vmatpush.msra.mxu0 %v1416
        %2406 = vmatpush.msra.mxu0 %v1412
        %2407 = vmatpush.msra.mxu0 %v1408
        %2408 = vmatpush.msra.mxu0 %v1404
        %2409 = vmatpush.msra.mxu0 %v1400
        %2410 = vmatpush.msra.mxu0 %v1396
        %2411 = vmatpush.msra.mxu0 %v1392
        %2412 = vmatpush.msra.mxu0 %v1388
        %2413 = vmatpush.msra.mxu0 %v1384
        %2414 = vmatpush.msra.mxu0 %v1380
        %2415 = vmatmul.f32.gmra.mxu0 %v414
        %v2416 = vpop.f32.mrf.mxu0
        %v2417 = vadd.f32 %v2397, %v2416
        %2418 = vdwg.mxu0
        %2419 = vmatpush.msra.mxu0 %v1504
        %2420 = vmatpush.msra.mxu0 %v1500
        %2421 = vmatpush.msra.mxu0 %v1496
        %2422 = vmatpush.msra.mxu0 %v1492
        %2423 = vmatpush.msra.mxu0 %v1488
        %2424 = vmatpush.msra.mxu0 %v1484
        %2425 = vmatpush.msra.mxu0 %v1480
        %2426 = vmatpush.msra.mxu0 %v1476
        %2427 = vmatpush.msra.mxu0 %v1472
        %2428 = vmatpush.msra.mxu0 %v1468
        %2429 = vmatpush.msra.mxu0 %v1464
        %2430 = vmatpush.msra.mxu0 %v1460
        %2431 = vmatpush.msra.mxu0 %v1456
        %2432 = vmatpush.msra.mxu0 %v1452
        %2433 = vmatpush.msra.mxu0 %v1448
        %2434 = vmatpush.msra.mxu0 %v1444
        %2435 = vmatmul.f32.gmra.mxu0 %v415
        %v2436 = vpop.f32.mrf.mxu0
        %v2437 = vadd.f32 %v2417, %v2436
        %2438 = vdwg.mxu0
        %2439 = vmatpush.msra.mxu0 %v1568
        %2440 = vmatpush.msra.mxu0 %v1564
        %2441 = vmatpush.msra.mxu0 %v1560
        %2442 = vmatpush.msra.mxu0 %v1556
        %2443 = vmatpush.msra.mxu0 %v1552
        %2444 = vmatpush.msra.mxu0 %v1548
        %2445 = vmatpush.msra.mxu0 %v1544
        %2446 = vmatpush.msra.mxu0 %v1540
        %2447 = vmatpush.msra.mxu0 %v1536
        %2448 = vmatpush.msra.mxu0 %v1532
        %2449 = vmatpush.msra.mxu0 %v1528
        %2450 = vmatpush.msra.mxu0 %v1524
        %2451 = vmatpush.msra.mxu0 %v1520
        %2452 = vmatpush.msra.mxu0 %v1516
        %2453 = vmatpush.msra.mxu0 %v1512
        %2454 = vmatpush.msra.mxu0 %v1508
        %2455 = vmatmul.f32.gmra.mxu0 %v416
        %v2456 = vpop.f32.mrf.mxu0
        %v2457 = vadd.f32 %v2437, %v2456
        %2458 = vdwg.mxu0
        %2459 = vmatpush.msra.mxu0 %v1632
        %2460 = vmatpush.msra.mxu0 %v1628
        %2461 = vmatpush.msra.mxu0 %v1624
        %2462 = vmatpush.msra.mxu0 %v1620
        %2463 = vmatpush.msra.mxu0 %v1616
        %2464 = vmatpush.msra.mxu0 %v1612
        %2465 = vmatpush.msra.mxu0 %v1608
        %2466 = vmatpush.msra.mxu0 %v1604
        %2467 = vmatpush.msra.mxu0 %v1600
        %2468 = vmatpush.msra.mxu0 %v1596
        %2469 = vmatpush.msra.mxu0 %v1592
        %2470 = vmatpush.msra.mxu0 %v1588
        %2471 = vmatpush.msra.mxu0 %v1584
        %2472 = vmatpush.msra.mxu0 %v1580
        %2473 = vmatpush.msra.mxu0 %v1576
        %2474 = vmatpush.msra.mxu0 %v1572
        %2475 = vmatmul.f32.gmra.mxu0 %v417
        %v2476 = vpop.f32.mrf.mxu0
        %v2477 = vadd.f32 %v2457, %v2476
        %2478 = vdwg.mxu0
        %2479 = vmatpush.msra.mxu0 %v1696
        %2480 = vmatpush.msra.mxu0 %v1692
        %2481 = vmatpush.msra.mxu0 %v1688
        %2482 = vmatpush.msra.mxu0 %v1684
        %2483 = vmatpush.msra.mxu0 %v1680
        %2484 = vmatpush.msra.mxu0 %v1676
        %2485 = vmatpush.msra.mxu0 %v1672
        %2486 = vmatpush.msra.mxu0 %v1668
        %2487 = vmatpush.msra.mxu0 %v1664
        %2488 = vmatpush.msra.mxu0 %v1660
        %2489 = vmatpush.msra.mxu0 %v1656
        %2490 = vmatpush.msra.mxu0 %v1652
        %2491 = vmatpush.msra.mxu0 %v1648
        %2492 = vmatpush.msra.mxu0 %v1644
        %2493 = vmatpush.msra.mxu0 %v1640
        %2494 = vmatpush.msra.mxu0 %v1636
        %2495 = vmatmul.f32.gmra.mxu0 %v418
        %v2496 = vpop.f32.mrf.mxu0
        %v2497 = vadd.f32 %v2477, %v2496
        %2498 = vdwg.mxu0
        %2499 = vmatpush.msra.mxu0 %v481
        %2500 = vmatpush.msra.mxu0 %v477
        %2501 = vmatpush.msra.mxu0 %v473
        %2502 = vmatpush.msra.mxu0 %v469
        %2503 = vmatpush.msra.mxu0 %v465
        %2504 = vmatpush.msra.mxu0 %v461
        %2505 = vmatpush.msra.mxu0 %v457
        %2506 = vmatpush.msra.mxu0 %v453
        %2507 = vmatpush.msra.mxu0 %v449
        %2508 = vmatpush.msra.mxu0 %v445
        %2509 = vmatpush.msra.mxu0 %v441
        %2510 = vmatpush.msra.mxu0 %v437
        %2511 = vmatpush.msra.mxu0 %v433
        %2512 = vmatpush.msra.mxu0 %v429
        %2513 = vmatpush.msra.mxu0 %v425
        %2514 = vmatpush.msra.mxu0 %v421
        %2515 = vmatmul.f32.gmra.mxu0 %v399
        %v2516 = vpop.f32.mrf.mxu0
        %v2517 = vadd.f32 0.0, %v2516
        %2518 = vdwg.mxu0
        %2519 = vmatpush.msra.mxu0 %v545
        %2520 = vmatpush.msra.mxu0 %v541
        %2521 = vmatpush.msra.mxu0 %v537
        %2522 = vmatpush.msra.mxu0 %v533
        %2523 = vmatpush.msra.mxu0 %v529
        %2524 = vmatpush.msra.mxu0 %v525
        %2525 = vmatpush.msra.mxu0 %v521
        %2526 = vmatpush.msra.mxu0 %v517
        %2527 = vmatpush.msra.mxu0 %v513
        %2528 = vmatpush.msra.mxu0 %v509
        %2529 = vmatpush.msra.mxu0 %v505
        %2530 = vmatpush.msra.mxu0 %v501
        %2531 = vmatpush.msra.mxu0 %v497
        %2532 = vmatpush.msra.mxu0 %v493
        %2533 = vmatpush.msra.mxu0 %v489
        %2534 = vmatpush.msra.mxu0 %v485
        %2535 = vmatmul.f32.gmra.mxu0 %v400
        %v2536 = vpop.f32.mrf.mxu0
        %v2537 = vadd.f32 %v2517, %v2536
        %2538 = vdwg.mxu0
        %2539 = vmatpush.msra.mxu0 %v609
        %2540 = vmatpush.msra.mxu0 %v605
        %2541 = vmatpush.msra.mxu0 %v601
        %2542 = vmatpush.msra.mxu0 %v597
        %2543 = vmatpush.msra.mxu0 %v593
        %2544 = vmatpush.msra.mxu0 %v589
        %2545 = vmatpush.msra.mxu0 %v585
        %2546 = vmatpush.msra.mxu0 %v581
        %2547 = vmatpush.msra.mxu0 %v577
        %2548 = vmatpush.msra.mxu0 %v573
        %2549 = vmatpush.msra.mxu0 %v569
        %2550 = vmatpush.msra.mxu0 %v565
        %2551 = vmatpush.msra.mxu0 %v561
        %2552 = vmatpush.msra.mxu0 %v557
        %2553 = vmatpush.msra.mxu0 %v553
        %2554 = vmatpush.msra.mxu0 %v549
        %2555 = vmatmul.f32.gmra.mxu0 %v401
        %v2556 = vpop.f32.mrf.mxu0
        %v2557 = vadd.f32 %v2537, %v2556
        %2558 = vdwg.mxu0
        %2559 = vmatpush.msra.mxu0 %v673
        %2560 = vmatpush.msra.mxu0 %v669
        %2561 = vmatpush.msra.mxu0 %v665
        %2562 = vmatpush.msra.mxu0 %v661
        %2563 = vmatpush.msra.mxu0 %v657
        %2564 = vmatpush.msra.mxu0 %v653
        %2565 = vmatpush.msra.mxu0 %v649
        %2566 = vmatpush.msra.mxu0 %v645
        %2567 = vmatpush.msra.mxu0 %v641
        %2568 = vmatpush.msra.mxu0 %v637
        %2569 = vmatpush.msra.mxu0 %v633
        %2570 = vmatpush.msra.mxu0 %v629
        %2571 = vmatpush.msra.mxu0 %v625
        %2572 = vmatpush.msra.mxu0 %v621
        %2573 = vmatpush.msra.mxu0 %v617
        %2574 = vmatpush.msra.mxu0 %v613
        %2575 = vmatmul.f32.gmra.mxu0 %v402
        %v2576 = vpop.f32.mrf.mxu0
        %v2577 = vadd.f32 %v2557, %v2576
        %2578 = vdwg.mxu0
        %2579 = vmatpush.msra.mxu0 %v737
        %2580 = vmatpush.msra.mxu0 %v733
        %2581 = vmatpush.msra.mxu0 %v729
        %2582 = vmatpush.msra.mxu0 %v725
        %2583 = vmatpush.msra.mxu0 %v721
        %2584 = vmatpush.msra.mxu0 %v717
        %2585 = vmatpush.msra.mxu0 %v713
        %2586 = vmatpush.msra.mxu0 %v709
        %2587 = vmatpush.msra.mxu0 %v705
        %2588 = vmatpush.msra.mxu0 %v701
        %2589 = vmatpush.msra.mxu0 %v697
        %2590 = vmatpush.msra.mxu0 %v693
        %2591 = vmatpush.msra.mxu0 %v689
        %2592 = vmatpush.msra.mxu0 %v685
        %2593 = vmatpush.msra.mxu0 %v681
        %2594 = vmatpush.msra.mxu0 %v677
        %2595 = vmatmul.f32.gmra.mxu0 %v403
        %v2596 = vpop.f32.mrf.mxu0
        %v2597 = vadd.f32 %v2577, %v2596
        %2598 = vdwg.mxu0
        %2599 = vmatpush.msra.mxu0 %v801
        %2600 = vmatpush.msra.mxu0 %v797
        %2601 = vmatpush.msra.mxu0 %v793
        %2602 = vmatpush.msra.mxu0 %v789
        %2603 = vmatpush.msra.mxu0 %v785
        %2604 = vmatpush.msra.mxu0 %v781
        %2605 = vmatpush.msra.mxu0 %v777
        %2606 = vmatpush.msra.mxu0 %v773
        %2607 = vmatpush.msra.mxu0 %v769
        %2608 = vmatpush.msra.mxu0 %v765
        %2609 = vmatpush.msra.mxu0 %v761
        %2610 = vmatpush.msra.mxu0 %v757
        %2611 = vmatpush.msra.mxu0 %v753
        %2612 = vmatpush.msra.mxu0 %v749
        %2613 = vmatpush.msra.mxu0 %v745
        %2614 = vmatpush.msra.mxu0 %v741
        %2615 = vmatmul.f32.gmra.mxu0 %v404
        %v2616 = vpop.f32.mrf.mxu0
        %v2617 = vadd.f32 %v2597, %v2616
        %2618 = vdwg.mxu0
        %2619 = vmatpush.msra.mxu0 %v865
        %2620 = vmatpush.msra.mxu0 %v861
        %2621 = vmatpush.msra.mxu0 %v857
        %2622 = vmatpush.msra.mxu0 %v853
        %2623 = vmatpush.msra.mxu0 %v849
        %2624 = vmatpush.msra.mxu0 %v845
        %2625 = vmatpush.msra.mxu0 %v841
        %2626 = vmatpush.msra.mxu0 %v837
        %2627 = vmatpush.msra.mxu0 %v833
        %2628 = vmatpush.msra.mxu0 %v829
        %2629 = vmatpush.msra.mxu0 %v825
        %2630 = vmatpush.msra.mxu0 %v821
        %2631 = vmatpush.msra.mxu0 %v817
        %2632 = vmatpush.msra.mxu0 %v813
        %2633 = vmatpush.msra.mxu0 %v809
        %2634 = vmatpush.msra.mxu0 %v805
        %2635 = vmatmul.f32.gmra.mxu0 %v405
        %v2636 = vpop.f32.mrf.mxu0
        %v2637 = vadd.f32 %v2617, %v2636
        %2638 = vdwg.mxu0
        %2639 = vmatpush.msra.mxu0 %v929
        %2640 = vmatpush.msra.mxu0 %v925
        %2641 = vmatpush.msra.mxu0 %v921
        %2642 = vmatpush.msra.mxu0 %v917
        %2643 = vmatpush.msra.mxu0 %v913
        %2644 = vmatpush.msra.mxu0 %v909
        %2645 = vmatpush.msra.mxu0 %v905
        %2646 = vmatpush.msra.mxu0 %v901
        %2647 = vmatpush.msra.mxu0 %v897
        %2648 = vmatpush.msra.mxu0 %v893
        %2649 = vmatpush.msra.mxu0 %v889
        %2650 = vmatpush.msra.mxu0 %v885
        %2651 = vmatpush.msra.mxu0 %v881
        %2652 = vmatpush.msra.mxu0 %v877
        %2653 = vmatpush.msra.mxu0 %v873
        %2654 = vmatpush.msra.mxu0 %v869
        %2655 = vmatmul.f32.gmra.mxu0 %v406
        %v2656 = vpop.f32.mrf.mxu0
        %v2657 = vadd.f32 %v2637, %v2656
        %2658 = vdwg.mxu0
        %2659 = vmatpush.msra.mxu0 %v993
        %2660 = vmatpush.msra.mxu0 %v989
        %2661 = vmatpush.msra.mxu0 %v985
        %2662 = vmatpush.msra.mxu0 %v981
        %2663 = vmatpush.msra.mxu0 %v977
        %2664 = vmatpush.msra.mxu0 %v973
        %2665 = vmatpush.msra.mxu0 %v969
        %2666 = vmatpush.msra.mxu0 %v965
        %2667 = vmatpush.msra.mxu0 %v961
        %2668 = vmatpush.msra.mxu0 %v957
        %2669 = vmatpush.msra.mxu0 %v953
        %2670 = vmatpush.msra.mxu0 %v949
        %2671 = vmatpush.msra.mxu0 %v945
        %2672 = vmatpush.msra.mxu0 %v941
        %2673 = vmatpush.msra.mxu0 %v937
        %2674 = vmatpush.msra.mxu0 %v933
        %2675 = vmatmul.f32.gmra.mxu0 %v407
        %v2676 = vpop.f32.mrf.mxu0
        %v2677 = vadd.f32 %v2657, %v2676
        %2678 = vdwg.mxu0
        %2679 = vmatpush.msra.mxu0 %v1057
        %2680 = vmatpush.msra.mxu0 %v1053
        %2681 = vmatpush.msra.mxu0 %v1049
        %2682 = vmatpush.msra.mxu0 %v1045
        %2683 = vmatpush.msra.mxu0 %v1041
        %2684 = vmatpush.msra.mxu0 %v1037
        %2685 = vmatpush.msra.mxu0 %v1033
        %2686 = vmatpush.msra.mxu0 %v1029
        %2687 = vmatpush.msra.mxu0 %v1025
        %2688 = vmatpush.msra.mxu0 %v1021
        %2689 = vmatpush.msra.mxu0 %v1017
        %2690 = vmatpush.msra.mxu0 %v1013
        %2691 = vmatpush.msra.mxu0 %v1009
        %2692 = vmatpush.msra.mxu0 %v1005
        %2693 = vmatpush.msra.mxu0 %v1001
        %2694 = vmatpush.msra.mxu0 %v997
        %2695 = vmatmul.f32.gmra.mxu0 %v408
        %v2696 = vpop.f32.mrf.mxu0
        %v2697 = vadd.f32 %v2677, %v2696
        %2698 = vdwg.mxu0
        %2699 = vmatpush.msra.mxu0 %v1121
        %2700 = vmatpush.msra.mxu0 %v1117
        %2701 = vmatpush.msra.mxu0 %v1113
        %2702 = vmatpush.msra.mxu0 %v1109
        %2703 = vmatpush.msra.mxu0 %v1105
        %2704 = vmatpush.msra.mxu0 %v1101
        %2705 = vmatpush.msra.mxu0 %v1097
        %2706 = vmatpush.msra.mxu0 %v1093
        %2707 = vmatpush.msra.mxu0 %v1089
        %2708 = vmatpush.msra.mxu0 %v1085
        %2709 = vmatpush.msra.mxu0 %v1081
        %2710 = vmatpush.msra.mxu0 %v1077
        %2711 = vmatpush.msra.mxu0 %v1073
        %2712 = vmatpush.msra.mxu0 %v1069
        %2713 = vmatpush.msra.mxu0 %v1065
        %2714 = vmatpush.msra.mxu0 %v1061
        %2715 = vmatmul.f32.gmra.mxu0 %v409
        %v2716 = vpop.f32.mrf.mxu0
        %v2717 = vadd.f32 %v2697, %v2716
        %2718 = vdwg.mxu0
        %2719 = vmatpush.msra.mxu0 %v1185
        %2720 = vmatpush.msra.mxu0 %v1181
        %2721 = vmatpush.msra.mxu0 %v1177
        %2722 = vmatpush.msra.mxu0 %v1173
        %2723 = vmatpush.msra.mxu0 %v1169
        %2724 = vmatpush.msra.mxu0 %v1165
        %2725 = vmatpush.msra.mxu0 %v1161
        %2726 = vmatpush.msra.mxu0 %v1157
        %2727 = vmatpush.msra.mxu0 %v1153
        %2728 = vmatpush.msra.mxu0 %v1149
        %2729 = vmatpush.msra.mxu0 %v1145
        %2730 = vmatpush.msra.mxu0 %v1141
        %2731 = vmatpush.msra.mxu0 %v1137
        %2732 = vmatpush.msra.mxu0 %v1133
        %2733 = vmatpush.msra.mxu0 %v1129
        %2734 = vmatpush.msra.mxu0 %v1125
        %2735 = vmatmul.f32.gmra.mxu0 %v410
        %v2736 = vpop.f32.mrf.mxu0
        %v2737 = vadd.f32 %v2717, %v2736
        %2738 = vdwg.mxu0
        %2739 = vmatpush.msra.mxu0 %v1249
        %2740 = vmatpush.msra.mxu0 %v1245
        %2741 = vmatpush.msra.mxu0 %v1241
        %2742 = vmatpush.msra.mxu0 %v1237
        %2743 = vmatpush.msra.mxu0 %v1233
        %2744 = vmatpush.msra.mxu0 %v1229
        %2745 = vmatpush.msra.mxu0 %v1225
        %2746 = vmatpush.msra.mxu0 %v1221
        %2747 = vmatpush.msra.mxu0 %v1217
        %2748 = vmatpush.msra.mxu0 %v1213
        %2749 = vmatpush.msra.mxu0 %v1209
        %2750 = vmatpush.msra.mxu0 %v1205
        %2751 = vmatpush.msra.mxu0 %v1201
        %2752 = vmatpush.msra.mxu0 %v1197
        %2753 = vmatpush.msra.mxu0 %v1193
        %2754 = vmatpush.msra.mxu0 %v1189
        %2755 = vmatmul.f32.gmra.mxu0 %v411
        %v2756 = vpop.f32.mrf.mxu0
        %v2757 = vadd.f32 %v2737, %v2756
        %2758 = vdwg.mxu0
        %2759 = vmatpush.msra.mxu0 %v1313
        %2760 = vmatpush.msra.mxu0 %v1309
        %2761 = vmatpush.msra.mxu0 %v1305
        %2762 = vmatpush.msra.mxu0 %v1301
        %2763 = vmatpush.msra.mxu0 %v1297
        %2764 = vmatpush.msra.mxu0 %v1293
        %2765 = vmatpush.msra.mxu0 %v1289
        %2766 = vmatpush.msra.mxu0 %v1285
        %2767 = vmatpush.msra.mxu0 %v1281
        %2768 = vmatpush.msra.mxu0 %v1277
        %2769 = vmatpush.msra.mxu0 %v1273
        %2770 = vmatpush.msra.mxu0 %v1269
        %2771 = vmatpush.msra.mxu0 %v1265
        %2772 = vmatpush.msra.mxu0 %v1261
        %2773 = vmatpush.msra.mxu0 %v1257
        %2774 = vmatpush.msra.mxu0 %v1253
        %2775 = vmatmul.f32.gmra.mxu0 %v412
        %v2776 = vpop.f32.mrf.mxu0
        %v2777 = vadd.f32 %v2757, %v2776
        %2778 = vdwg.mxu0
        %2779 = vmatpush.msra.mxu0 %v1377
        %2780 = vmatpush.msra.mxu0 %v1373
        %2781 = vmatpush.msra.mxu0 %v1369
        %2782 = vmatpush.msra.mxu0 %v1365
        %2783 = vmatpush.msra.mxu0 %v1361
        %2784 = vmatpush.msra.mxu0 %v1357
        %2785 = vmatpush.msra.mxu0 %v1353
        %2786 = vmatpush.msra.mxu0 %v1349
        %2787 = vmatpush.msra.mxu0 %v1345
        %2788 = vmatpush.msra.mxu0 %v1341
        %2789 = vmatpush.msra.mxu0 %v1337
        %2790 = vmatpush.msra.mxu0 %v1333
        %2791 = vmatpush.msra.mxu0 %v1329
        %2792 = vmatpush.msra.mxu0 %v1325
        %2793 = vmatpush.msra.mxu0 %v1321
        %2794 = vmatpush.msra.mxu0 %v1317
        %2795 = vmatmul.f32.gmra.mxu0 %v413
        %v2796 = vpop.f32.mrf.mxu0
        %v2797 = vadd.f32 %v2777, %v2796
        %2798 = vdwg.mxu0
        %2799 = vmatpush.msra.mxu0 %v1441
        %2800 = vmatpush.msra.mxu0 %v1437
        %2801 = vmatpush.msra.mxu0 %v1433
        %2802 = vmatpush.msra.mxu0 %v1429
        %2803 = vmatpush.msra.mxu0 %v1425
        %2804 = vmatpush.msra.mxu0 %v1421
        %2805 = vmatpush.msra.mxu0 %v1417
        %2806 = vmatpush.msra.mxu0 %v1413
        %2807 = vmatpush.msra.mxu0 %v1409
        %2808 = vmatpush.msra.mxu0 %v1405
        %2809 = vmatpush.msra.mxu0 %v1401
        %2810 = vmatpush.msra.mxu0 %v1397
        %2811 = vmatpush.msra.mxu0 %v1393
        %2812 = vmatpush.msra.mxu0 %v1389
        %2813 = vmatpush.msra.mxu0 %v1385
        %2814 = vmatpush.msra.mxu0 %v1381
        %2815 = vmatmul.f32.gmra.mxu0 %v414
        %v2816 = vpop.f32.mrf.mxu0
        %v2817 = vadd.f32 %v2797, %v2816
        %2818 = vdwg.mxu0
        %2819 = vmatpush.msra.mxu0 %v1505
        %2820 = vmatpush.msra.mxu0 %v1501
        %2821 = vmatpush.msra.mxu0 %v1497
        %2822 = vmatpush.msra.mxu0 %v1493
        %2823 = vmatpush.msra.mxu0 %v1489
        %2824 = vmatpush.msra.mxu0 %v1485
        %2825 = vmatpush.msra.mxu0 %v1481
        %2826 = vmatpush.msra.mxu0 %v1477
        %2827 = vmatpush.msra.mxu0 %v1473
        %2828 = vmatpush.msra.mxu0 %v1469
        %2829 = vmatpush.msra.mxu0 %v1465
        %2830 = vmatpush.msra.mxu0 %v1461
        %2831 = vmatpush.msra.mxu0 %v1457
        %2832 = vmatpush.msra.mxu0 %v1453
        %2833 = vmatpush.msra.mxu0 %v1449
        %2834 = vmatpush.msra.mxu0 %v1445
        %2835 = vmatmul.f32.gmra.mxu0 %v415
        %v2836 = vpop.f32.mrf.mxu0
        %v2837 = vadd.f32 %v2817, %v2836
        %2838 = vdwg.mxu0
        %2839 = vmatpush.msra.mxu0 %v1569
        %2840 = vmatpush.msra.mxu0 %v1565
        %2841 = vmatpush.msra.mxu0 %v1561
        %2842 = vmatpush.msra.mxu0 %v1557
        %2843 = vmatpush.msra.mxu0 %v1553
        %2844 = vmatpush.msra.mxu0 %v1549
        %2845 = vmatpush.msra.mxu0 %v1545
        %2846 = vmatpush.msra.mxu0 %v1541
        %2847 = vmatpush.msra.mxu0 %v1537
        %2848 = vmatpush.msra.mxu0 %v1533
        %2849 = vmatpush.msra.mxu0 %v1529
        %2850 = vmatpush.msra.mxu0 %v1525
        %2851 = vmatpush.msra.mxu0 %v1521
        %2852 = vmatpush.msra.mxu0 %v1517
        %2853 = vmatpush.msra.mxu0 %v1513
        %2854 = vmatpush.msra.mxu0 %v1509
        %2855 = vmatmul.f32.gmra.mxu0 %v416
        %v2856 = vpop.f32.mrf.mxu0
        %v2857 = vadd.f32 %v2837, %v2856
        %2858 = vdwg.mxu0
        %2859 = vmatpush.msra.mxu0 %v1633
        %2860 = vmatpush.msra.mxu0 %v1629
        %2861 = vmatpush.msra.mxu0 %v1625
        %2862 = vmatpush.msra.mxu0 %v1621
        %2863 = vmatpush.msra.mxu0 %v1617
        %2864 = vmatpush.msra.mxu0 %v1613
        %2865 = vmatpush.msra.mxu0 %v1609
        %2866 = vmatpush.msra.mxu0 %v1605
        %2867 = vmatpush.msra.mxu0 %v1601
        %2868 = vmatpush.msra.mxu0 %v1597
        %2869 = vmatpush.msra.mxu0 %v1593
        %2870 = vmatpush.msra.mxu0 %v1589
        %2871 = vmatpush.msra.mxu0 %v1585
        %2872 = vmatpush.msra.mxu0 %v1581
        %2873 = vmatpush.msra.mxu0 %v1577
        %2874 = vmatpush.msra.mxu0 %v1573
        %2875 = vmatmul.f32.gmra.mxu0 %v417
        %v2876 = vpop.f32.mrf.mxu0
        %v2877 = vadd.f32 %v2857, %v2876
        %2878 = vdwg.mxu0
        %2879 = vmatpush.msra.mxu0 %v1697
        %2880 = vmatpush.msra.mxu0 %v1693
        %2881 = vmatpush.msra.mxu0 %v1689
        %2882 = vmatpush.msra.mxu0 %v1685
        %2883 = vmatpush.msra.mxu0 %v1681
        %2884 = vmatpush.msra.mxu0 %v1677
        %2885 = vmatpush.msra.mxu0 %v1673
        %2886 = vmatpush.msra.mxu0 %v1669
        %2887 = vmatpush.msra.mxu0 %v1665
        %2888 = vmatpush.msra.mxu0 %v1661
        %2889 = vmatpush.msra.mxu0 %v1657
        %2890 = vmatpush.msra.mxu0 %v1653
        %2891 = vmatpush.msra.mxu0 %v1649
        %2892 = vmatpush.msra.mxu0 %v1645
        %2893 = vmatpush.msra.mxu0 %v1641
        %2894 = vmatpush.msra.mxu0 %v1637
        %2895 = vmatmul.f32.gmra.mxu0 %v418
        %v2896 = vpop.f32.mrf.mxu0
        %v2897 = vadd.f32 %v2877, %v2896
        %2898 = vdwg.mxu0
        %2899 = vmatpush.msra.mxu0 %v482
        %2900 = vmatpush.msra.mxu0 %v478
        %2901 = vmatpush.msra.mxu0 %v474
        %2902 = vmatpush.msra.mxu0 %v470
        %2903 = vmatpush.msra.mxu0 %v466
        %2904 = vmatpush.msra.mxu0 %v462
        %2905 = vmatpush.msra.mxu0 %v458
        %2906 = vmatpush.msra.mxu0 %v454
        %2907 = vmatpush.msra.mxu0 %v450
        %2908 = vmatpush.msra.mxu0 %v446
        %2909 = vmatpush.msra.mxu0 %v442
        %2910 = vmatpush.msra.mxu0 %v438
        %2911 = vmatpush.msra.mxu0 %v434
        %2912 = vmatpush.msra.mxu0 %v430
        %2913 = vmatpush.msra.mxu0 %v426
        %2914 = vmatpush.msra.mxu0 %v422
        %2915 = vmatmul.f32.gmra.mxu0 %v399
        %v2916 = vpop.f32.mrf.mxu0
        %v2917 = vadd.f32 0.0, %v2916
        %2918 = vdwg.mxu0
        %2919 = vmatpush.msra.mxu0 %v546
        %2920 = vmatpush.msra.mxu0 %v542
        %2921 = vmatpush.msra.mxu0 %v538
        %2922 = vmatpush.msra.mxu0 %v534
        %2923 = vmatpush.msra.mxu0 %v530
        %2924 = vmatpush.msra.mxu0 %v526
        %2925 = vmatpush.msra.mxu0 %v522
        %2926 = vmatpush.msra.mxu0 %v518
        %2927 = vmatpush.msra.mxu0 %v514
        %2928 = vmatpush.msra.mxu0 %v510
        %2929 = vmatpush.msra.mxu0 %v506
        %2930 = vmatpush.msra.mxu0 %v502
        %2931 = vmatpush.msra.mxu0 %v498
        %2932 = vmatpush.msra.mxu0 %v494
        %2933 = vmatpush.msra.mxu0 %v490
        %2934 = vmatpush.msra.mxu0 %v486
        %2935 = vmatmul.f32.gmra.mxu0 %v400
        %v2936 = vpop.f32.mrf.mxu0
        %v2937 = vadd.f32 %v2917, %v2936
        %2938 = vdwg.mxu0
        %2939 = vmatpush.msra.mxu0 %v610
        %2940 = vmatpush.msra.mxu0 %v606
        %2941 = vmatpush.msra.mxu0 %v602
        %2942 = vmatpush.msra.mxu0 %v598
        %2943 = vmatpush.msra.mxu0 %v594
        %2944 = vmatpush.msra.mxu0 %v590
        %2945 = vmatpush.msra.mxu0 %v586
        %2946 = vmatpush.msra.mxu0 %v582
        %2947 = vmatpush.msra.mxu0 %v578
        %2948 = vmatpush.msra.mxu0 %v574
        %2949 = vmatpush.msra.mxu0 %v570
        %2950 = vmatpush.msra.mxu0 %v566
        %2951 = vmatpush.msra.mxu0 %v562
        %2952 = vmatpush.msra.mxu0 %v558
        %2953 = vmatpush.msra.mxu0 %v554
        %2954 = vmatpush.msra.mxu0 %v550
        %2955 = vmatmul.f32.gmra.mxu0 %v401
        %v2956 = vpop.f32.mrf.mxu0
        %v2957 = vadd.f32 %v2937, %v2956
        %2958 = vdwg.mxu0
        %2959 = vmatpush.msra.mxu0 %v674
        %2960 = vmatpush.msra.mxu0 %v670
        %2961 = vmatpush.msra.mxu0 %v666
        %2962 = vmatpush.msra.mxu0 %v662
        %2963 = vmatpush.msra.mxu0 %v658
        %2964 = vmatpush.msra.mxu0 %v654
        %2965 = vmatpush.msra.mxu0 %v650
        %2966 = vmatpush.msra.mxu0 %v646
        %2967 = vmatpush.msra.mxu0 %v642
        %2968 = vmatpush.msra.mxu0 %v638
        %2969 = vmatpush.msra.mxu0 %v634
        %2970 = vmatpush.msra.mxu0 %v630
        %2971 = vmatpush.msra.mxu0 %v626
        %2972 = vmatpush.msra.mxu0 %v622
        %2973 = vmatpush.msra.mxu0 %v618
        %2974 = vmatpush.msra.mxu0 %v614
        %2975 = vmatmul.f32.gmra.mxu0 %v402
        %v2976 = vpop.f32.mrf.mxu0
        %v2977 = vadd.f32 %v2957, %v2976
        %2978 = vdwg.mxu0
        %2979 = vmatpush.msra.mxu0 %v738
        %2980 = vmatpush.msra.mxu0 %v734
        %2981 = vmatpush.msra.mxu0 %v730
        %2982 = vmatpush.msra.mxu0 %v726
        %2983 = vmatpush.msra.mxu0 %v722
        %2984 = vmatpush.msra.mxu0 %v718
        %2985 = vmatpush.msra.mxu0 %v714
        %2986 = vmatpush.msra.mxu0 %v710
        %2987 = vmatpush.msra.mxu0 %v706
        %2988 = vmatpush.msra.mxu0 %v702
        %2989 = vmatpush.msra.mxu0 %v698
        %2990 = vmatpush.msra.mxu0 %v694
        %2991 = vmatpush.msra.mxu0 %v690
        %2992 = vmatpush.msra.mxu0 %v686
        %2993 = vmatpush.msra.mxu0 %v682
        %2994 = vmatpush.msra.mxu0 %v678
        %2995 = vmatmul.f32.gmra.mxu0 %v403
        %v2996 = vpop.f32.mrf.mxu0
        %v2997 = vadd.f32 %v2977, %v2996
        %2998 = vdwg.mxu0
        %2999 = vmatpush.msra.mxu0 %v802
        %3000 = vmatpush.msra.mxu0 %v798
        %3001 = vmatpush.msra.mxu0 %v794
        %3002 = vmatpush.msra.mxu0 %v790
        %3003 = vmatpush.msra.mxu0 %v786
        %3004 = vmatpush.msra.mxu0 %v782
        %3005 = vmatpush.msra.mxu0 %v778
        %3006 = vmatpush.msra.mxu0 %v774
        %3007 = vmatpush.msra.mxu0 %v770
        %3008 = vmatpush.msra.mxu0 %v766
        %3009 = vmatpush.msra.mxu0 %v762
        %3010 = vmatpush.msra.mxu0 %v758
        %3011 = vmatpush.msra.mxu0 %v754
        %3012 = vmatpush.msra.mxu0 %v750
        %3013 = vmatpush.msra.mxu0 %v746
        %3014 = vmatpush.msra.mxu0 %v742
        %3015 = vmatmul.f32.gmra.mxu0 %v404
        %v3016 = vpop.f32.mrf.mxu0
        %v3017 = vadd.f32 %v2997, %v3016
        %3018 = vdwg.mxu0
        %3019 = vmatpush.msra.mxu0 %v866
        %3020 = vmatpush.msra.mxu0 %v862
        %3021 = vmatpush.msra.mxu0 %v858
        %3022 = vmatpush.msra.mxu0 %v854
        %3023 = vmatpush.msra.mxu0 %v850
        %3024 = vmatpush.msra.mxu0 %v846
        %3025 = vmatpush.msra.mxu0 %v842
        %3026 = vmatpush.msra.mxu0 %v838
        %3027 = vmatpush.msra.mxu0 %v834
        %3028 = vmatpush.msra.mxu0 %v830
        %3029 = vmatpush.msra.mxu0 %v826
        %3030 = vmatpush.msra.mxu0 %v822
        %3031 = vmatpush.msra.mxu0 %v818
        %3032 = vmatpush.msra.mxu0 %v814
        %3033 = vmatpush.msra.mxu0 %v810
        %3034 = vmatpush.msra.mxu0 %v806
        %3035 = vmatmul.f32.gmra.mxu0 %v405
        %v3036 = vpop.f32.mrf.mxu0
        %v3037 = vadd.f32 %v3017, %v3036
        %3038 = vdwg.mxu0
        %3039 = vmatpush.msra.mxu0 %v930
        %3040 = vmatpush.msra.mxu0 %v926
        %3041 = vmatpush.msra.mxu0 %v922
        %3042 = vmatpush.msra.mxu0 %v918
        %3043 = vmatpush.msra.mxu0 %v914
        %3044 = vmatpush.msra.mxu0 %v910
        %3045 = vmatpush.msra.mxu0 %v906
        %3046 = vmatpush.msra.mxu0 %v902
        %3047 = vmatpush.msra.mxu0 %v898
        %3048 = vmatpush.msra.mxu0 %v894
        %3049 = vmatpush.msra.mxu0 %v890
        %3050 = vmatpush.msra.mxu0 %v886
        %3051 = vmatpush.msra.mxu0 %v882
        %3052 = vmatpush.msra.mxu0 %v878
        %3053 = vmatpush.msra.mxu0 %v874
        %3054 = vmatpush.msra.mxu0 %v870
        %3055 = vmatmul.f32.gmra.mxu0 %v406
        %v3056 = vpop.f32.mrf.mxu0
        %v3057 = vadd.f32 %v3037, %v3056
        %3058 = vdwg.mxu0
        %3059 = vmatpush.msra.mxu0 %v994
        %3060 = vmatpush.msra.mxu0 %v990
        %3061 = vmatpush.msra.mxu0 %v986
        %3062 = vmatpush.msra.mxu0 %v982
        %3063 = vmatpush.msra.mxu0 %v978
        %3064 = vmatpush.msra.mxu0 %v974
        %3065 = vmatpush.msra.mxu0 %v970
        %3066 = vmatpush.msra.mxu0 %v966
        %3067 = vmatpush.msra.mxu0 %v962
        %3068 = vmatpush.msra.mxu0 %v958
        %3069 = vmatpush.msra.mxu0 %v954
        %3070 = vmatpush.msra.mxu0 %v950
        %3071 = vmatpush.msra.mxu0 %v946
        %3072 = vmatpush.msra.mxu0 %v942
        %3073 = vmatpush.msra.mxu0 %v938
        %3074 = vmatpush.msra.mxu0 %v934
        %3075 = vmatmul.f32.gmra.mxu0 %v407
        %v3076 = vpop.f32.mrf.mxu0
        %v3077 = vadd.f32 %v3057, %v3076
        %3078 = vdwg.mxu0
        %3079 = vmatpush.msra.mxu0 %v1058
        %3080 = vmatpush.msra.mxu0 %v1054
        %3081 = vmatpush.msra.mxu0 %v1050
        %3082 = vmatpush.msra.mxu0 %v1046
        %3083 = vmatpush.msra.mxu0 %v1042
        %3084 = vmatpush.msra.mxu0 %v1038
        %3085 = vmatpush.msra.mxu0 %v1034
        %3086 = vmatpush.msra.mxu0 %v1030
        %3087 = vmatpush.msra.mxu0 %v1026
        %3088 = vmatpush.msra.mxu0 %v1022
        %3089 = vmatpush.msra.mxu0 %v1018
        %3090 = vmatpush.msra.mxu0 %v1014
        %3091 = vmatpush.msra.mxu0 %v1010
        %3092 = vmatpush.msra.mxu0 %v1006
        %3093 = vmatpush.msra.mxu0 %v1002
        %3094 = vmatpush.msra.mxu0 %v998
        %3095 = vmatmul.f32.gmra.mxu0 %v408
        %v3096 = vpop.f32.mrf.mxu0
        %v3097 = vadd.f32 %v3077, %v3096
        %3098 = vdwg.mxu0
        %3099 = vmatpush.msra.mxu0 %v1122
        %3100 = vmatpush.msra.mxu0 %v1118
        %3101 = vmatpush.msra.mxu0 %v1114
        %3102 = vmatpush.msra.mxu0 %v1110
        %3103 = vmatpush.msra.mxu0 %v1106
        %3104 = vmatpush.msra.mxu0 %v1102
        %3105 = vmatpush.msra.mxu0 %v1098
        %3106 = vmatpush.msra.mxu0 %v1094
        %3107 = vmatpush.msra.mxu0 %v1090
        %3108 = vmatpush.msra.mxu0 %v1086
        %3109 = vmatpush.msra.mxu0 %v1082
        %3110 = vmatpush.msra.mxu0 %v1078
        %3111 = vmatpush.msra.mxu0 %v1074
        %3112 = vmatpush.msra.mxu0 %v1070
        %3113 = vmatpush.msra.mxu0 %v1066
        %3114 = vmatpush.msra.mxu0 %v1062
        %3115 = vmatmul.f32.gmra.mxu0 %v409
        %v3116 = vpop.f32.mrf.mxu0
        %v3117 = vadd.f32 %v3097, %v3116
        %3118 = vdwg.mxu0
        %3119 = vmatpush.msra.mxu0 %v1186
        %3120 = vmatpush.msra.mxu0 %v1182
        %3121 = vmatpush.msra.mxu0 %v1178
        %3122 = vmatpush.msra.mxu0 %v1174
        %3123 = vmatpush.msra.mxu0 %v1170
        %3124 = vmatpush.msra.mxu0 %v1166
        %3125 = vmatpush.msra.mxu0 %v1162
        %3126 = vmatpush.msra.mxu0 %v1158
        %3127 = vmatpush.msra.mxu0 %v1154
        %3128 = vmatpush.msra.mxu0 %v1150
        %3129 = vmatpush.msra.mxu0 %v1146
        %3130 = vmatpush.msra.mxu0 %v1142
        %3131 = vmatpush.msra.mxu0 %v1138
        %3132 = vmatpush.msra.mxu0 %v1134
        %3133 = vmatpush.msra.mxu0 %v1130
        %3134 = vmatpush.msra.mxu0 %v1126
        %3135 = vmatmul.f32.gmra.mxu0 %v410
        %v3136 = vpop.f32.mrf.mxu0
        %v3137 = vadd.f32 %v3117, %v3136
        %3138 = vdwg.mxu0
        %3139 = vmatpush.msra.mxu0 %v1250
        %3140 = vmatpush.msra.mxu0 %v1246
        %3141 = vmatpush.msra.mxu0 %v1242
        %3142 = vmatpush.msra.mxu0 %v1238
        %3143 = vmatpush.msra.mxu0 %v1234
        %3144 = vmatpush.msra.mxu0 %v1230
        %3145 = vmatpush.msra.mxu0 %v1226
        %3146 = vmatpush.msra.mxu0 %v1222
        %3147 = vmatpush.msra.mxu0 %v1218
        %3148 = vmatpush.msra.mxu0 %v1214
        %3149 = vmatpush.msra.mxu0 %v1210
        %3150 = vmatpush.msra.mxu0 %v1206
        %3151 = vmatpush.msra.mxu0 %v1202
        %3152 = vmatpush.msra.mxu0 %v1198
        %3153 = vmatpush.msra.mxu0 %v1194
        %3154 = vmatpush.msra.mxu0 %v1190
        %3155 = vmatmul.f32.gmra.mxu0 %v411
        %v3156 = vpop.f32.mrf.mxu0
        %v3157 = vadd.f32 %v3137, %v3156
        %3158 = vdwg.mxu0
        %3159 = vmatpush.msra.mxu0 %v1314
        %3160 = vmatpush.msra.mxu0 %v1310
        %3161 = vmatpush.msra.mxu0 %v1306
        %3162 = vmatpush.msra.mxu0 %v1302
        %3163 = vmatpush.msra.mxu0 %v1298
        %3164 = vmatpush.msra.mxu0 %v1294
        %3165 = vmatpush.msra.mxu0 %v1290
        %3166 = vmatpush.msra.mxu0 %v1286
        %3167 = vmatpush.msra.mxu0 %v1282
        %3168 = vmatpush.msra.mxu0 %v1278
        %3169 = vmatpush.msra.mxu0 %v1274
        %3170 = vmatpush.msra.mxu0 %v1270
        %3171 = vmatpush.msra.mxu0 %v1266
        %3172 = vmatpush.msra.mxu0 %v1262
        %3173 = vmatpush.msra.mxu0 %v1258
        %3174 = vmatpush.msra.mxu0 %v1254
        %3175 = vmatmul.f32.gmra.mxu0 %v412
        %v3176 = vpop.f32.mrf.mxu0
        %v3177 = vadd.f32 %v3157, %v3176
        %3178 = vdwg.mxu0
        %3179 = vmatpush.msra.mxu0 %v1378
        %3180 = vmatpush.msra.mxu0 %v1374
        %3181 = vmatpush.msra.mxu0 %v1370
        %3182 = vmatpush.msra.mxu0 %v1366
        %3183 = vmatpush.msra.mxu0 %v1362
        %3184 = vmatpush.msra.mxu0 %v1358
        %3185 = vmatpush.msra.mxu0 %v1354
        %3186 = vmatpush.msra.mxu0 %v1350
        %3187 = vmatpush.msra.mxu0 %v1346
        %3188 = vmatpush.msra.mxu0 %v1342
        %3189 = vmatpush.msra.mxu0 %v1338
        %3190 = vmatpush.msra.mxu0 %v1334
        %3191 = vmatpush.msra.mxu0 %v1330
        %3192 = vmatpush.msra.mxu0 %v1326
        %3193 = vmatpush.msra.mxu0 %v1322
        %3194 = vmatpush.msra.mxu0 %v1318
        %3195 = vmatmul.f32.gmra.mxu0 %v413
        %v3196 = vpop.f32.mrf.mxu0
        %v3197 = vadd.f32 %v3177, %v3196
        %3198 = vdwg.mxu0
        %3199 = vmatpush.msra.mxu0 %v1442
        %3200 = vmatpush.msra.mxu0 %v1438
        %3201 = vmatpush.msra.mxu0 %v1434
        %3202 = vmatpush.msra.mxu0 %v1430
        %3203 = vmatpush.msra.mxu0 %v1426
        %3204 = vmatpush.msra.mxu0 %v1422
        %3205 = vmatpush.msra.mxu0 %v1418
        %3206 = vmatpush.msra.mxu0 %v1414
        %3207 = vmatpush.msra.mxu0 %v1410
        %3208 = vmatpush.msra.mxu0 %v1406
        %3209 = vmatpush.msra.mxu0 %v1402
        %3210 = vmatpush.msra.mxu0 %v1398
        %3211 = vmatpush.msra.mxu0 %v1394
        %3212 = vmatpush.msra.mxu0 %v1390
        %3213 = vmatpush.msra.mxu0 %v1386
        %3214 = vmatpush.msra.mxu0 %v1382
        %3215 = vmatmul.f32.gmra.mxu0 %v414
        %v3216 = vpop.f32.mrf.mxu0
        %v3217 = vadd.f32 %v3197, %v3216
        %3218 = vdwg.mxu0
        %3219 = vmatpush.msra.mxu0 %v1506
        %3220 = vmatpush.msra.mxu0 %v1502
        %3221 = vmatpush.msra.mxu0 %v1498
        %3222 = vmatpush.msra.mxu0 %v1494
        %3223 = vmatpush.msra.mxu0 %v1490
        %3224 = vmatpush.msra.mxu0 %v1486
        %3225 = vmatpush.msra.mxu0 %v1482
        %3226 = vmatpush.msra.mxu0 %v1478
        %3227 = vmatpush.msra.mxu0 %v1474
        %3228 = vmatpush.msra.mxu0 %v1470
        %3229 = vmatpush.msra.mxu0 %v1466
        %3230 = vmatpush.msra.mxu0 %v1462
        %3231 = vmatpush.msra.mxu0 %v1458
        %3232 = vmatpush.msra.mxu0 %v1454
        %3233 = vmatpush.msra.mxu0 %v1450
        %3234 = vmatpush.msra.mxu0 %v1446
        %3235 = vmatmul.f32.gmra.mxu0 %v415
        %v3236 = vpop.f32.mrf.mxu0
        %v3237 = vadd.f32 %v3217, %v3236
        %3238 = vdwg.mxu0
        %3239 = vmatpush.msra.mxu0 %v1570
        %3240 = vmatpush.msra.mxu0 %v1566
        %3241 = vmatpush.msra.mxu0 %v1562
        %3242 = vmatpush.msra.mxu0 %v1558
        %3243 = vmatpush.msra.mxu0 %v1554
        %3244 = vmatpush.msra.mxu0 %v1550
        %3245 = vmatpush.msra.mxu0 %v1546
        %3246 = vmatpush.msra.mxu0 %v1542
        %3247 = vmatpush.msra.mxu0 %v1538
        %3248 = vmatpush.msra.mxu0 %v1534
        %3249 = vmatpush.msra.mxu0 %v1530
        %3250 = vmatpush.msra.mxu0 %v1526
        %3251 = vmatpush.msra.mxu0 %v1522
        %3252 = vmatpush.msra.mxu0 %v1518
        %3253 = vmatpush.msra.mxu0 %v1514
        %3254 = vmatpush.msra.mxu0 %v1510
        %3255 = vmatmul.f32.gmra.mxu0 %v416
        %v3256 = vpop.f32.mrf.mxu0
        %v3257 = vadd.f32 %v3237, %v3256
        %3258 = vdwg.mxu0
        %3259 = vmatpush.msra.mxu0 %v1634
        %3260 = vmatpush.msra.mxu0 %v1630
        %3261 = vmatpush.msra.mxu0 %v1626
        %3262 = vmatpush.msra.mxu0 %v1622
        %3263 = vmatpush.msra.mxu0 %v1618
        %3264 = vmatpush.msra.mxu0 %v1614
        %3265 = vmatpush.msra.mxu0 %v1610
        %3266 = vmatpush.msra.mxu0 %v1606
        %3267 = vmatpush.msra.mxu0 %v1602
        %3268 = vmatpush.msra.mxu0 %v1598
        %3269 = vmatpush.msra.mxu0 %v1594
        %3270 = vmatpush.msra.mxu0 %v1590
        %3271 = vmatpush.msra.mxu0 %v1586
        %3272 = vmatpush.msra.mxu0 %v1582
        %3273 = vmatpush.msra.mxu0 %v1578
        %3274 = vmatpush.msra.mxu0 %v1574
        %3275 = vmatmul.f32.gmra.mxu0 %v417
        %v3276 = vpop.f32.mrf.mxu0
        %v3277 = vadd.f32 %v3257, %v3276
        %3278 = vdwg.mxu0
        %3279 = vmatpush.msra.mxu0 %v1698
        %3280 = vmatpush.msra.mxu0 %v1694
        %3281 = vmatpush.msra.mxu0 %v1690
        %3282 = vmatpush.msra.mxu0 %v1686
        %3283 = vmatpush.msra.mxu0 %v1682
        %3284 = vmatpush.msra.mxu0 %v1678
        %3285 = vmatpush.msra.mxu0 %v1674
        %3286 = vmatpush.msra.mxu0 %v1670
        %3287 = vmatpush.msra.mxu0 %v1666
        %3288 = vmatpush.msra.mxu0 %v1662
        %3289 = vmatpush.msra.mxu0 %v1658
        %3290 = vmatpush.msra.mxu0 %v1654
        %3291 = vmatpush.msra.mxu0 %v1650
        %3292 = vmatpush.msra.mxu0 %v1646
        %3293 = vmatpush.msra.mxu0 %v1642
        %3294 = vmatpush.msra.mxu0 %v1638
        %3295 = vmatmul.f32.gmra.mxu0 %v418
        %v3296 = vpop.f32.mrf.mxu0
        %v3297 = vadd.f32 %v3277, %v3296
        %3298 = vdwg.mxu0
        %v3299 = vadd.f32 %v395, %v2097
        %v3300 = vadd.f32 %v396, %v2497
        %v3301 = vadd.f32 %v397, %v2897
        %v3302 = vadd.f32 %v398, %v3297
        %3303 = vst [vmem:[#allocation2] sm:$0xff] %v3299
        %3304 = vst [vmem:[#allocation2 + $0x8] sm:$0xff] %v3300
        %3305 = vst [vmem:[#allocation2 + $0x10] sm:$0xff] %v3301
        %3306 = vst [vmem:[#allocation2 + $0x18] sm:$0xff] %v3302
        %p3307 = scmp.eq.s32.totalorder %s24, 1
        // Predicated region
        $region77: #{net_forward_padded.1} parent=47 // pred_check
          %p3308 = pneg %p3307
        $region78: #{net_forward_padded.1} parent=47 // pred_check_branch
          %3310 = sbr.rel (%p3308) target = $region80
        $region79: #{net_forward_padded.1} parent=47 // pred_region
          %v3311 = vld [vmem:[#allocation2] sm:$0xff]
          %v3312 = vld [vmem:[#allocation2 + $0x8] sm:$0xff]
          %v3313 = vld [vmem:[#allocation2 + $0x10] sm:$0xff]
          %v3314 = vld [vmem:[#allocation2 + $0x18] sm:$0xff]
          %v3315 = vld [vmem:[#allocation5] sm:$0xf]
          %v3317 = vperm.slane %v3315, 0
          %v3318 = vperm.slane %v3315, 1
          %v3319 = vperm.slane %v3315, 2
          %v3320 = vperm.slane %v3315, 3
          %v3325 = vadd.f32 %v3311, %v3317
          %v3326 = vadd.f32 %v3312, %v3318
          %v3327 = vadd.f32 %v3313, %v3319
          %v3328 = vadd.f32 %v3314, %v3320
          %v3329 = vmax.f32 %v3325, 0.0
          %v3330 = vmax.f32 %v3326, 0.0
          %v3331 = vmax.f32 %v3327, 0.0
          %v3332 = vmax.f32 %v3328, 0.0
          %v3333 = vld [vmem:[#allocation7] sm:$0xff]
          %v3334 = vld [vmem:[#allocation7 + $0x8] sm:$0xff]
          %v3335 = vld [vmem:[#allocation7 + $0x10] sm:$0xff]
          %v3336 = vld [vmem:[#allocation7 + $0x18] sm:$0xff]
          %v3337 = vld [vmem:[#allocation7 + $0x20] sm:$0xff]
          %v3338 = vld [vmem:[#allocation7 + $0x28] sm:$0xff]
          %v3339 = vld [vmem:[#allocation7 + $0x30] sm:$0xff]
          %v3340 = vld [vmem:[#allocation7 + $0x38] sm:$0xff]
          %v3341 = vld [vmem:[#allocation7 + $0x40] sm:$0xff]
          %v3342 = vld [vmem:[#allocation7 + $0x48] sm:$0xff]
          %v3343 = vld [vmem:[#allocation7 + $0x50] sm:$0xff]
          %v3344 = vld [vmem:[#allocation7 + $0x58] sm:$0xff]
          %v3345 = vld [vmem:[#allocation7 + $0x60] sm:$0xff]
          %v3346 = vld [vmem:[#allocation7 + $0x68] sm:$0xff]
          %v3347 = vld [vmem:[#allocation7 + $0x70] sm:$0xff]
          %v3348 = vld [vmem:[#allocation7 + $0x78] sm:$0xff]
          %v3349 = vld [vmem:[#allocation7 + $0x80] sm:$0xff]
          %v3350 = vld [vmem:[#allocation7 + $0x88] sm:$0xff]
          %v3351 = vld [vmem:[#allocation7 + $0x90] sm:$0xff]
          %v3352 = vld [vmem:[#allocation7 + $0x98] sm:$0xff]
          %v3353 = vld [vmem:[#allocation7 + $0xa0] sm:$0xff]
          %v3354 = vld [vmem:[#allocation7 + $0xa8] sm:$0xff]
          %v3355 = vld [vmem:[#allocation7 + $0xb0] sm:$0xff]
          %v3356 = vld [vmem:[#allocation7 + $0xb8] sm:$0xff]
          %v3357 = vld [vmem:[#allocation7 + $0xc0] sm:$0xff]
          %v3358 = vld [vmem:[#allocation7 + $0xc8] sm:$0xff]
          %v3359 = vld [vmem:[#allocation7 + $0xd0] sm:$0xff]
          %v3360 = vld [vmem:[#allocation7 + $0xd8] sm:$0xff]
          %v3361 = vld [vmem:[#allocation7 + $0xe0] sm:$0xff]
          %v3362 = vld [vmem:[#allocation7 + $0xe8] sm:$0xff]
          %v3363 = vld [vmem:[#allocation7 + $0xf0] sm:$0xff]
          %v3364 = vld [vmem:[#allocation7 + $0xf8] sm:$0xff]
          %v3365 = vld [vmem:[#allocation7 + $0x100] sm:$0xff]
          %v3366 = vld [vmem:[#allocation7 + $0x108] sm:$0xff]
          %v3367 = vld [vmem:[#allocation7 + $0x110] sm:$0xff]
          %v3368 = vld [vmem:[#allocation7 + $0x118] sm:$0xff]
          %v3369 = vld [vmem:[#allocation7 + $0x120] sm:$0xff]
          %v3370 = vld [vmem:[#allocation7 + $0x128] sm:$0xff]
          %v3371 = vld [vmem:[#allocation7 + $0x130] sm:$0xff]
          %v3372 = vld [vmem:[#allocation7 + $0x138] sm:$0xff]
          %v3373 = vld [vmem:[#allocation7 + $0x140] sm:$0xff]
          %v3374 = vld [vmem:[#allocation7 + $0x148] sm:$0xff]
          %v3375 = vld [vmem:[#allocation7 + $0x150] sm:$0xff]
          %v3376 = vld [vmem:[#allocation7 + $0x158] sm:$0xff]
          %v3377 = vld [vmem:[#allocation7 + $0x160] sm:$0xff]
          %v3378 = vld [vmem:[#allocation7 + $0x168] sm:$0xff]
          %v3379 = vld [vmem:[#allocation7 + $0x170] sm:$0xff]
          %v3380 = vld [vmem:[#allocation7 + $0x178] sm:$0xff]
          %v3381 = vld [vmem:[#allocation7 + $0x180] sm:$0xff]
          %v3382 = vld [vmem:[#allocation7 + $0x188] sm:$0xff]
          %v3383 = vld [vmem:[#allocation7 + $0x190] sm:$0xff]
          %v3384 = vld [vmem:[#allocation7 + $0x198] sm:$0xff]
          %v3385 = vld [vmem:[#allocation7 + $0x1a0] sm:$0xff]
          %v3386 = vld [vmem:[#allocation7 + $0x1a8] sm:$0xff]
          %v3387 = vld [vmem:[#allocation7 + $0x1b0] sm:$0xff]
          %v3388 = vld [vmem:[#allocation7 + $0x1b8] sm:$0xff]
          %v3389 = vld [vmem:[#allocation7 + $0x1c0] sm:$0xff]
          %v3390 = vld [vmem:[#allocation7 + $0x1c8] sm:$0xff]
          %v3391 = vld [vmem:[#allocation7 + $0x1d0] sm:$0xff]
          %v3392 = vld [vmem:[#allocation7 + $0x1d8] sm:$0xff]
          %v3393 = vld [vmem:[#allocation7 + $0x1e0] sm:$0xff]
          %v3394 = vld [vmem:[#allocation7 + $0x1e8] sm:$0xff]
          %v3395 = vld [vmem:[#allocation7 + $0x1f0] sm:$0xff]
          %v3396 = vld [vmem:[#allocation7 + $0x1f8] sm:$0xff]
          %v3397 = vld [vmem:[#allocation8] sm:$0x1]
          %v3399 = vperm.slane %v3397, 0
          %3401 = vmatpush.msra.mxu0 %v3348
          %3402 = vmatpush.msra.mxu0 %v3347
          %3403 = vmatpush.msra.mxu0 %v3346
          %3404 = vmatpush.msra.mxu0 %v3345
          %3405 = vmatpush.msra.mxu0 %v3344
          %3406 = vmatpush.msra.mxu0 %v3343
          %3407 = vmatpush.msra.mxu0 %v3342
          %3408 = vmatpush.msra.mxu0 %v3341
          %3409 = vmatpush.msra.mxu0 %v3340
          %3410 = vmatpush.msra.mxu0 %v3339
          %3411 = vmatpush.msra.mxu0 %v3338
          %3412 = vmatpush.msra.mxu0 %v3337
          %3413 = vmatpush.msra.mxu0 %v3336
          %3414 = vmatpush.msra.mxu0 %v3335
          %3415 = vmatpush.msra.mxu0 %v3334
          %3416 = vmatpush.msra.mxu0 %v3333
          %3417 = vmatmul.f32.gmra.mxu0 %v3329
          %v3418 = vpop.f32.mrf.mxu0
          %v3419 = vadd.f32 %v3399, %v3418
          %3420 = vdwg.mxu0
          %3421 = vmatpush.msra.mxu0 %v3364
          %3422 = vmatpush.msra.mxu0 %v3363
          %3423 = vmatpush.msra.mxu0 %v3362
          %3424 = vmatpush.msra.mxu0 %v3361
          %3425 = vmatpush.msra.mxu0 %v3360
          %3426 = vmatpush.msra.mxu0 %v3359
          %3427 = vmatpush.msra.mxu0 %v3358
          %3428 = vmatpush.msra.mxu0 %v3357
          %3429 = vmatpush.msra.mxu0 %v3356
          %3430 = vmatpush.msra.mxu0 %v3355
          %3431 = vmatpush.msra.mxu0 %v3354
          %3432 = vmatpush.msra.mxu0 %v3353
          %3433 = vmatpush.msra.mxu0 %v3352
          %3434 = vmatpush.msra.mxu0 %v3351
          %3435 = vmatpush.msra.mxu0 %v3350
          %3436 = vmatpush.msra.mxu0 %v3349
          %3437 = vmatmul.f32.gmra.mxu0 %v3330
          %v3438 = vpop.f32.mrf.mxu0
          %v3439 = vadd.f32 %v3419, %v3438
          %3440 = vdwg.mxu0
          %3441 = vmatpush.msra.mxu0 %v3380
          %3442 = vmatpush.msra.mxu0 %v3379
          %3443 = vmatpush.msra.mxu0 %v3378
          %3444 = vmatpush.msra.mxu0 %v3377
          %3445 = vmatpush.msra.mxu0 %v3376
          %3446 = vmatpush.msra.mxu0 %v3375
          %3447 = vmatpush.msra.mxu0 %v3374
          %3448 = vmatpush.msra.mxu0 %v3373
          %3449 = vmatpush.msra.mxu0 %v3372
          %3450 = vmatpush.msra.mxu0 %v3371
          %3451 = vmatpush.msra.mxu0 %v3370
          %3452 = vmatpush.msra.mxu0 %v3369
          %3453 = vmatpush.msra.mxu0 %v3368
          %3454 = vmatpush.msra.mxu0 %v3367
          %3455 = vmatpush.msra.mxu0 %v3366
          %3456 = vmatpush.msra.mxu0 %v3365
          %3457 = vmatmul.f32.gmra.mxu0 %v3331
          %v3458 = vpop.f32.mrf.mxu0
          %v3459 = vadd.f32 %v3439, %v3458
          %3460 = vdwg.mxu0
          %3461 = vmatpush.msra.mxu0 %v3396
          %3462 = vmatpush.msra.mxu0 %v3395
          %3463 = vmatpush.msra.mxu0 %v3394
          %3464 = vmatpush.msra.mxu0 %v3393
          %3465 = vmatpush.msra.mxu0 %v3392
          %3466 = vmatpush.msra.mxu0 %v3391
          %3467 = vmatpush.msra.mxu0 %v3390
          %3468 = vmatpush.msra.mxu0 %v3389
          %3469 = vmatpush.msra.mxu0 %v3388
          %3470 = vmatpush.msra.mxu0 %v3387
          %3471 = vmatpush.msra.mxu0 %v3386
          %3472 = vmatpush.msra.mxu0 %v3385
          %3473 = vmatpush.msra.mxu0 %v3384
          %3474 = vmatpush.msra.mxu0 %v3383
          %3475 = vmatpush.msra.mxu0 %v3382
          %3476 = vmatpush.msra.mxu0 %v3381
          %3477 = vmatmul.f32.gmra.mxu0 %v3332
          %v3478 = vpop.f32.mrf.mxu0
          %v3479 = vadd.f32 %v3459, %v3478
          %3480 = vdwg.mxu0
          %v3481 = vmax.f32 %v3479, 0.0
          %v3482 = vld [vmem:[#allocation10] sm:$0xff]
          %v3483 = vld [vmem:[#allocation10 + $0x8] sm:$0xff]
          %v3484 = vld [vmem:[#allocation10 + $0x10] sm:$0xff]
          %v3485 = vld [vmem:[#allocation10 + $0x18] sm:$0xff]
          %v3486 = vld [vmem:[#allocation10 + $0x20] sm:$0xff]
          %v3487 = vld [vmem:[#allocation10 + $0x28] sm:$0xff]
          %v3488 = vld [vmem:[#allocation10 + $0x30] sm:$0xff]
          %v3489 = vld [vmem:[#allocation10 + $0x38] sm:$0xff]
          %v3490 = vld [vmem:[#allocation10 + $0x40] sm:$0xff]
          %v3491 = vld [vmem:[#allocation10 + $0x48] sm:$0xff]
          %v3492 = vld [vmem:[#allocation10 + $0x50] sm:$0xff]
          %v3493 = vld [vmem:[#allocation10 + $0x58] sm:$0xff]
          %v3494 = vld [vmem:[#allocation10 + $0x60] sm:$0xff]
          %v3495 = vld [vmem:[#allocation10 + $0x68] sm:$0xff]
          %v3496 = vld [vmem:[#allocation10 + $0x70] sm:$0xff]
          %v3497 = vld [vmem:[#allocation10 + $0x78] sm:$0xff]
          %v3498 = vld [vmem:[#allocation11] sm:$0x1]
          %v3500 = vperm.slane %v3498, 0
          %3502 = vmatpush.msra.mxu0 %v3497
          %3503 = vmatpush.msra.mxu0 %v3496
          %3504 = vmatpush.msra.mxu0 %v3495
          %3505 = vmatpush.msra.mxu0 %v3494
          %3506 = vmatpush.msra.mxu0 %v3493
          %3507 = vmatpush.msra.mxu0 %v3492
          %3508 = vmatpush.msra.mxu0 %v3491
          %3509 = vmatpush.msra.mxu0 %v3490
          %3510 = vmatpush.msra.mxu0 %v3489
          %3511 = vmatpush.msra.mxu0 %v3488
          %3512 = vmatpush.msra.mxu0 %v3487
          %3513 = vmatpush.msra.mxu0 %v3486
          %3514 = vmatpush.msra.mxu0 %v3485
          %3515 = vmatpush.msra.mxu0 %v3484
          %3516 = vmatpush.msra.mxu0 %v3483
          %3517 = vmatpush.msra.mxu0 %v3482
          %3518 = vmatmul.f32.gmra.mxu0 %v3481
          %v3519 = vpop.f32.mrf.mxu0
          %v3520 = vadd.f32 %v3500, %v3519
          %3521 = vdwg.mxu0
          %3522 = vst [vmem:[%s7] sm:$0xff] %v3520
        $region80: #{net_forward_padded.1} parent=47 // pred_fallthru
          _
        // Predicated region
        $region81: #{net_forward_padded.1} parent=47 // pred_check
          %p3523 = pneg %p194
        $region82: #{net_forward_padded.1} parent=47 // pred_check_branch
          %3525 = sbr.rel (%p3523) target = $region84
        $region83: #{net_forward_padded.1} parent=47 // pred_region
          _
        $region84: #{net_forward_padded.1} parent=47 // pred_fallthru
          _
        // Predicated region
        $region85: #{net_forward_padded.1} parent=47 // pred_check
          %p3526 = pneg %p194
        $region86: #{net_forward_padded.1} parent=47 // pred_check_branch
          %3528 = sbr.rel (%p3526) target = $region88
        $region87: #{net_forward_padded.1} parent=47 // pred_region
          _
        $region88: #{net_forward_padded.1} parent=47 // pred_fallthru
          _
      $region48: #{net_forward_padded.1} parent=5 // pred_fallthru
        _
      %p3529 = scmp.le.s32.totalorder 2, %s19
      // Predicated region
      $region89: #{net_forward_padded.1} parent=5 // pred_check
        %p3530 = pneg %p3529
      $region90: #{net_forward_padded.1} parent=5 // pred_check_branch
        %3532 = sbr.rel (%p3530) target = $region92
      $region91: #{net_forward_padded.1} parent=5 // pred_region
        %s3533 = ssub.s32 %s19, 2
      $region92: #{net_forward_padded.1} parent=5 // pred_fallthru
        _
    $region6: #{net_forward_padded.1} parent=1 // loop_footer
      %s23 = sadd.s32 1, %s19
    $region7: #{net_forward_padded.1} parent=1 // loop_footer_branch
      %18 = sbr.rel target = $region3
    $region8: #{net_forward_padded.1} parent=1 // loop_exit
      _
    %3534 = vsyncpa [#allocation4], 1
    %s3535 = scalar_lea.sflag [#allocation4], 1
    %3536 = vsyncpa %s3535, 1
    %3537 = vsyncpa [#allocation6], 1
    %3538 = vsyncpa [#allocation9], 1
    %3539 = vsyncpa [#allocation12], 1

</llo_original>
